<compile_context>
chip_gen: v7x
topology: tpu7x:2x2x1
jax: 0.10.0
libtpu: 0.0.40
codegen_flags: <defaults>
</compile_context>

<pallas_src>
import functools

import numpy as np
import jax
import jax.numpy as jnp
from jax import lax
from jax.experimental import pallas as pl
from jax.experimental.pallas import tpu as pltpu

# ---------------- config (SimpleNamespace stand-in) ----------------
LATENT_DIM = 32
NHEADS = 4
NLAYERS_CLS = 2
N_CLUSTERS = 8
FF_DIM = 4 * LATENT_DIM          # assumed feed-forward width of the encoder block
MLP_HIDDEN = LATENT_DIM          # assumed hidden width of the MLP head
INPUT_CLS = "all"
PARAM_Q_CLS_INIT = 2.0
ROPE_THETA = 10000.0
LN_EPS = 1e-5
HEAD_DIM = LATENT_DIM // NHEADS
NEG_INF = -1e30
LANES = 128

# ---------------- packed parameter slab layout ----------------
# Weight slab (W_ROWS, 128), all matrices lane-dense:
#   per layer l (base = l * 3D):
#     rows [base      , base +  D): lanes [0:3D) = Wqkv (Wq/bq pre-scaled by 1/sqrt(hd)),
#                                   lanes [3D:4D) = Wo
#     rows [base +   D, base + 2D): lanes [0:F)  = FFN W1          (F == 128)
#     rows [base +  2D, base + 3D): lanes [0:F)  = FFN W2^T
#   MLP head (base = nlayers*3D): lanes [0:D) = mlp_w1, lanes [D:D+C) = mlp_w2
W_ROWS_PER_LAYER = 3 * LATENT_DIM
W_MLP_ROW = NLAYERS_CLS * W_ROWS_PER_LAYER
W_ROWS = W_MLP_ROW + max(LATENT_DIM, MLP_HIDDEN)

# Bias/LN/scalar slab (B_ROWS, 128): one tensor per row.
# per layer rows l*8 + {0: bqkv, 1: bo, 2: ln1_g, 3: ln1_b, 4: ff_b1, 5: ff_b2, 6: ln2_g, 7: ln2_b}
B_PER_LAYER = 8
B_MB1 = NLAYERS_CLS * B_PER_LAYER     # mlp bias 1
B_MB2 = B_MB1 + 1                     # mlp bias 2
B_CLS = B_MB1 + 2                     # cls token row
B_LQ = B_MB1 + 3                      # log_param_q_cls scalar at lane 0
B_ROWS = B_MB1 + 4


def _layer_norm(x, gamma, beta):
    mu = jnp.mean(x, axis=-1, keepdims=True)
    var = jnp.mean((x - mu) ** 2, axis=-1, keepdims=True)
    return (x - mu) * lax.rsqrt(var + LN_EPS) * gamma + beta


def _dot(a, b):
    return jnp.dot(a, b, preferred_element_type=jnp.float32)


def _dot_nt(a, b):
    # a @ b.T via dot_general (no materialized transpose)
    return lax.dot_general(a, b, (((1,), (1,)), ((), ())),
                           preferred_element_type=jnp.float32)


# ---------------- fused Pallas kernel ----------------
def fused_cls_head_kernel(z_ref, misc_ref, w_ref, b_ref, logits_ref, *rest,
                          batch, seq, nheads, nlayers, is_train):
    """Whole ClassificationHead forward in one kernel.

    Inputs : z_flat (B*(S-1), D), misc slab (4*B*S, D)  [cos | sin_e | sin_o | block mask],
             weight slab (W_ROWS, 128), bias slab (B_ROWS, 128).
    Outputs: logits (B, C) [, attn_raw (L, B*S, B*S) in eval mode].
    Scratch: xs (B*S, D) token buffer, ctx (B*S, D) attention-context buffer.
    """
    if is_train:
        attn_ref = None
        xs_ref, ctx_ref = rest
    else:
        attn_ref, xs_ref, ctx_ref = rest

    D = LATENT_DIM
    F = FF_DIM
    Hm = MLP_HIDDEN
    C = N_CLUSTERS
    hd = D // nheads
    BS = batch * seq
    inv_h = 1.0 / float(nheads)

    # ---- build x = [cls ; z_b] per batch in a VMEM scratch (wrapper concat folded in)
    cls_row = b_ref[B_CLS:B_CLS + 1, 0:D]                                 # (1, D)
    for b in range(batch):                                                # static, tiny
        xs_ref[pl.ds(b * seq, 1), :] = cls_row
        xs_ref[pl.ds(b * seq + 1, seq - 1), :] = z_ref[pl.ds(b * (seq - 1), seq - 1), :]
    x0 = xs_ref[...]                                                      # (B*S, D)

    # ---- interleaved RoPE: x*cos + rotate_half(x)*sin (zero-masked signed sin tables;
    #      wraparound lanes are killed by the zeros in sin_e/sin_o).
    cos = misc_ref[0:BS, :]
    sin_e = misc_ref[BS:2 * BS, :]
    sin_o = misc_ref[2 * BS:3 * BS, :]
    x = (x0 * cos
         + jnp.roll(x0, -1, axis=-1) * sin_e
         + jnp.roll(x0, 1, axis=-1) * sin_o)

    # additive block-diagonal mask: 0 inside each batch's (S,S) block, -1e30 across batches
    attn_mask = misc_ref[3 * BS:4 * BS, 0:BS]                             # (B*S, B*S)

    # ---- transformer encoder blocks (post-norm); activations stay in VMEM/vregs
    for li in range(nlayers):
        wb = li * W_ROWS_PER_LAYER
        bb = li * B_PER_LAYER
        wqkv = w_ref[wb:wb + D, 0:3 * D]
        wo = w_ref[wb:wb + D, 3 * D:4 * D]
        w1 = w_ref[wb + D:wb + 2 * D, 0:F]
        w2t = w_ref[wb + 2 * D:wb + 3 * D, 0:F]
        bqkv = b_ref[bb + 0:bb + 1, 0:3 * D]
        bo = b_ref[bb + 1:bb + 2, 0:D]
        g1 = b_ref[bb + 2:bb + 3, 0:D]
        be1 = b_ref[bb + 3:bb + 4, 0:D]
        b1 = b_ref[bb + 4:bb + 5, 0:F]
        b2 = b_ref[bb + 5:bb + 6, 0:D]
        g2 = b_ref[bb + 6:bb + 7, 0:D]
        be2 = b_ref[bb + 7:bb + 8, 0:D]

        # fused QKV projection on the whole (B*S, D) slab (softmax scale folded into Wq/bq)
        qkv = _dot(x, wqkv) + bqkv                                        # (B*S, 3D)

        attn_sum = None
        for h in range(nheads):                                           # static head loop
            lo = h * hd
            qh = qkv[:, lo:lo + hd]
            kh = qkv[:, D + lo:D + lo + hd]
            vh = qkv[:, 2 * D + lo:2 * D + lo + hd]
            s = _dot_nt(qh, kh) + attn_mask                               # batch via mask
            s = s - jnp.max(s, axis=-1, keepdims=True)
            p = jnp.exp(s)
            # EUP approximate reciprocal: normalization is effectively free.
            p = p * pl.reciprocal(jnp.sum(p, axis=-1, keepdims=True), approx=True)
            if not is_train:
                attn_sum = p if attn_sum is None else attn_sum + p
            # head context goes straight to its final lane offset (no lane concatenate)
            ctx_ref[:, pl.ds(lo, hd)] = _dot(p, vh)
        if not is_train:
            # head-averaged, block-diagonal attention; one full-tile store per layer
            attn_ref[li] = attn_sum * inv_h

        ctx = ctx_ref[...]
        h1 = _layer_norm(x + _dot(ctx, wo) + bo, g1, be1)
        ff = jnp.maximum(_dot(h1, w1) + b1, 0.0)
        x = _layer_norm(h1 + _dot_nt(ff, w2t) + b2, g2, be2)

    # ---- MLP head on the full slab + precision_q_cls scaling; CLS rows picked at store
    mw1 = w_ref[W_MLP_ROW:W_MLP_ROW + D, 0:Hm]
    mw2 = w_ref[W_MLP_ROW:W_MLP_ROW + Hm, D:D + C]
    mb1 = b_ref[B_MB1:B_MB1 + 1, 0:Hm]
    mb2 = b_ref[B_MB2:B_MB2 + 1, 0:C]
    lq = b_ref[B_LQ:B_LQ + 1, 0:1]                                        # (1,1) log_param_q
    prec = 0.5 / jnp.maximum(jnp.exp(lq), 1e-10)
    hh = jnp.maximum(_dot(x, mw1) + mb1, 0.0)
    logits_all = (_dot(hh, mw2) + mb2) * prec                             # (B*S, C)
    for b in range(batch):
        logits_ref[pl.ds(b, 1), :] = logits_all[b * seq:b * seq + 1, :]


def fused_forward_pallas(z_flat, misc, wslab, bslab, *, batch, seq, is_train):
    """Single pallas_call for the entire forward (no grid: whole problem < 1 MiB)."""
    BS = batch * seq
    kernel = functools.partial(
        fused_cls_head_kernel, batch=batch, seq=seq,
        nheads=NHEADS, nlayers=NLAYERS_CLS, is_train=is_train)

    vm = pl.BlockSpec(memory_space=pltpu.MemorySpace.VMEM)
    in_specs = [vm, vm, vm, vm]

    if is_train:
        out_shape = (jax.ShapeDtypeStruct((batch, N_CLUSTERS), jnp.float32),)
        out_specs = (vm,)
    else:
        out_shape = (jax.ShapeDtypeStruct((batch, N_CLUSTERS), jnp.float32),
                     jax.ShapeDtypeStruct((NLAYERS_CLS, BS, BS), jnp.float32))
        out_specs = (vm, vm)

    return pl.pallas_call(
        kernel,
        out_shape=out_shape,
        in_specs=in_specs,
        out_specs=out_specs,
        scratch_shapes=[pltpu.VMEM((BS, LATENT_DIM), jnp.float32),   # token buffer
                        pltpu.VMEM((BS, LATENT_DIM), jnp.float32)],  # attention context
        cost_estimate=pl.CostEstimate(flops=900_000, transcendentals=2_500,
                                      bytes_accessed=140_000),
    )(z_flat, misc, wslab, bslab)


# ---------------- parameters ----------------
def init_params(key):
    keys = jax.random.split(key, 4 + NLAYERS_CLS)

    def normal(k, shape, scale=0.02):
        return (scale * jax.random.normal(k, shape)).astype(jnp.float32)

    params = {}
    params["cls_token"] = jax.random.normal(keys[0], (1, 1, LATENT_DIM)).astype(jnp.float32)

    layers = []
    D, F = LATENT_DIM, FF_DIM
    for l in range(NLAYERS_CLS):
        lk = jax.random.split(keys[1 + l], 6)
        wqkv = jnp.concatenate(
            [normal(lk[0], (D, D)), normal(lk[1], (D, D)), normal(lk[2], (D, D))], axis=1)
        layers.append([
            wqkv, jnp.zeros((1, 3 * D), jnp.float32),                       # fused QKV
            normal(lk[3], (D, D)), jnp.zeros((1, D), jnp.float32),          # Wo, bo
            jnp.ones((1, D), jnp.float32), jnp.zeros((1, D), jnp.float32),  # LN1
            normal(lk[4], (D, F)), jnp.zeros((1, F), jnp.float32),          # FFN W1, b1
            normal(lk[5], (F, D)), jnp.zeros((1, D), jnp.float32),          # FFN W2, b2
            jnp.ones((1, D), jnp.float32), jnp.zeros((1, D), jnp.float32),  # LN2
        ])
    params["layers"] = layers
    params["mlp_w1"] = normal(keys[1 + NLAYERS_CLS], (LATENT_DIM, MLP_HIDDEN))
    params["mlp_b1"] = jnp.zeros((1, MLP_HIDDEN), jnp.float32)
    params["mlp_w2"] = normal(keys[2 + NLAYERS_CLS], (MLP_HIDDEN, N_CLUSTERS))
    params["mlp_b2"] = jnp.zeros((1, N_CLUSTERS), jnp.float32)
    params["log_param_q_cls"] = jnp.asarray(np.log(PARAM_Q_CLS_INIT), jnp.float32)
    return params


def pack_params(params):
    """One-time host-side packing into two lane-dense f32 slabs (2 DMAs total)."""
    D, F, Hm, C = LATENT_DIM, FF_DIM, MLP_HIDDEN, N_CLUSTERS
    assert 4 * D <= LANES and F <= LANES
    scale = 1.0 / np.sqrt(HEAD_DIM)

    wslab = np.zeros((W_ROWS, LANES), np.float32)
    bslab = np.zeros((B_ROWS, LANES), np.float32)
    for l, layer in enumerate(params["layers"]):
        (wqkv, bqkv, wo, bo, g1, be1, w1, b1, w2, b2, g2, be2) = [
            np.array(t, dtype=np.float32) for t in layer]
        wqkv[:, :D] *= scale        # fold 1/sqrt(head_dim) into Wq
        bqkv[:, :D] *= scale        # ... and bq
        wb = l * W_ROWS_PER_LAYER
        wslab[wb:wb + D, 0:3 * D] = wqkv
        wslab[wb:wb + D, 3 * D:4 * D] = wo
        wslab[wb + D:wb + 2 * D, 0:F] = w1
        wslab[wb + 2 * D:wb + 3 * D, 0:F] = w2.T
        bb = l * B_PER_LAYER
        bslab[bb + 0, 0:3 * D] = bqkv[0]
        bslab[bb + 1, 0:D] = bo[0]
        bslab[bb + 2, 0:D] = g1[0]
        bslab[bb + 3, 0:D] = be1[0]
        bslab[bb + 4, 0:F] = b1[0]
        bslab[bb + 5, 0:D] = b2[0]
        bslab[bb + 6, 0:D] = g2[0]
        bslab[bb + 7, 0:D] = be2[0]
    wslab[W_MLP_ROW:W_MLP_ROW + D, 0:Hm] = np.array(params["mlp_w1"], np.float32)
    wslab[W_MLP_ROW:W_MLP_ROW + Hm, D:D + C] = np.array(params["mlp_w2"], np.float32)
    bslab[B_MB1, 0:Hm] = np.array(params["mlp_b1"], np.float32)[0]
    bslab[B_MB2, 0:C] = np.array(params["mlp_b2"], np.float32)[0]
    bslab[B_CLS, 0:D] = np.array(params["cls_token"], np.float32).reshape(D)
    bslab[B_LQ, 0] = float(np.array(params["log_param_q_cls"], np.float32))
    return {"wslab": jnp.asarray(wslab), "bslab": jnp.asarray(bslab)}


# ---------------- RoPE / mask host constants ----------------
def _rope_freqs(seq_len, dim):
    inv_freq = 1.0 / (ROPE_THETA ** (np.arange(0, dim, 2, dtype=np.float32) / dim))
    t = np.arange(seq_len, dtype=np.float32)
    freqs = np.einsum("s,f->sf", t, inv_freq)
    return np.repeat(freqs, 2, axis=-1)                 # (S, D) interleaved duplicate


@functools.lru_cache(maxsize=None)
def _misc_slab(batch, seq_len, dim):
    """[cos | sin_even(-) | sin_odd(+) | block-diag mask] stacked along sublanes."""
    BS = batch * seq_len
    assert BS <= dim, "block-diagonal mask must fit in the misc-slab lane width"
    freqs = _rope_freqs(seq_len, dim)
    cos, sin = np.cos(freqs), np.sin(freqs)
    even = (np.arange(dim) % 2 == 0)
    sin_e = np.where(even, -sin, 0.0)                   # pairs with roll(x, -1)
    sin_o = np.where(~even, sin, 0.0)                   # pairs with roll(x, +1)
    slab = np.zeros((4 * BS, dim), np.float32)
    slab[0:BS] = np.tile(cos, (batch, 1))
    slab[BS:2 * BS] = np.tile(sin_e, (batch, 1))
    slab[2 * BS:3 * BS] = np.tile(sin_o, (batch, 1))
    blk = np.repeat(np.arange(batch), seq_len)
    slab[3 * BS:4 * BS, 0:BS] = np.where(blk[:, None] == blk[None, :], 0.0, NEG_INF)
    return slab


def rope_tables_ref(seq_len, dim):
    """cos/sin (1,S,D) + signed pair-swap matrix, for the pure-JAX reference."""
    freqs = _rope_freqs(seq_len, dim)
    cos = jnp.asarray(np.cos(freqs)[None], jnp.float32)
    sin = jnp.asarray(np.sin(freqs)[None], jnp.float32)
    R = np.zeros((dim, dim), np.float32)
    R[np.arange(1, dim, 2), np.arange(0, dim, 2)] = -1.0
    R[np.arange(0, dim, 2), np.arange(1, dim, 2)] = 1.0
    return cos, sin, jnp.asarray(R)


# ---------------- forward (Pallas) ----------------
def select_input(z):
    if INPUT_CLS == "all":
        return z
    elif INPUT_CLS == "bbox":
        return z[:, 2:, :]
    elif INPUT_CLS == "kps":
        return z[:, :2, :]
    raise ValueError


@functools.partial(jax.jit, static_argnames=("is_train",))
def classification_head_forward(packed, z, is_train):
    z_sel = select_input(z).astype(jnp.float32)
    B, T, _ = z_sel.shape
    S = T + 1                                            # +1 for the CLS token
    z_flat = z_sel.reshape(B * T, LATENT_DIM)            # leading-dim merge (bitcast)
    misc = jnp.asarray(_misc_slab(B, S, LATENT_DIM))     # trace-time constant

    outs = fused_forward_pallas(z_flat, misc, packed["wslab"], packed["bslab"],
                                batch=B, seq=S, is_train=is_train)
    logits = outs[0]
    if is_train:
        return logits, None
    attn_raw = outs[1]                                   # (L, B*S, B*S), block-diagonal
    attn = jnp.stack(
        [attn_raw[:, b * S:(b + 1) * S, b * S:(b + 1) * S] for b in range(B)], axis=0)
    return logits, attn                                  # (B, C), (B, L, S, S)


# ---------------- pure-JAX reference (for verification) ----------------
def _ref_encoder_block(x, p, nheads):
    (wqkv, bqkv, wo, bo, g1, be1, w1, b1, w2, b2, g2, be2) = p
    B, S, D = x.shape
    hd = D // nheads
    qkv = x @ wqkv + bqkv
    q, k, v = qkv[..., :D], qkv[..., D:2 * D], qkv[..., 2 * D:]
    qh = q.reshape(B, S, nheads, hd).transpose(0, 2, 1, 3)
    kh = k.reshape(B, S, nheads, hd).transpose(0, 2, 1, 3)
    vh = v.reshape(B, S, nheads, hd).transpose(0, 2, 1, 3)
    s = jnp.einsum("bhqd,bhkd->bhqk", qh, kh) / np.sqrt(hd)
    p_attn = jax.nn.softmax(s, axis=-1)
    o = jnp.einsum("bhqk,bhkd->bhqd", p_attn, vh).transpose(0, 2, 1, 3).reshape(B, S, D)
    h1 = _layer_norm(x + o @ wo + bo, g1, be1)
    ff = jnp.maximum(h1 @ w1 + b1, 0.0) @ w2 + b2
    out = _layer_norm(h1 + ff, g2, be2)
    return out, jnp.mean(p_attn, axis=1)


def reference_forward(params, z, is_train):
    z_sel = select_input(z)
    B = z_sel.shape[0]
    cls_tok = jnp.broadcast_to(params["cls_token"], (B, 1, LATENT_DIM))
    x = jnp.concatenate([cls_tok, z_sel], axis=1).astype(jnp.float32)
    S = x.shape[1]
    cos, sin, rmat = rope_tables_ref(S, LATENT_DIM)
    x = x * cos + (x @ rmat) * sin
    attn_list = []
    for p in params["layers"]:
        x, a = _ref_encoder_block(x, p, NHEADS)
        attn_list.append(a[:, None])
    attn_t = None if is_train else jnp.concatenate(attn_list, axis=1)
    z0 = x[:, 0, :]
    h = jnp.maximum(z0 @ params["mlp_w1"] + params["mlp_b1"], 0.0)
    logits = h @ params["mlp_w2"] + params["mlp_b2"]
    param_q = jnp.exp(params["log_param_q_cls"])
    prec = 0.5 / jnp.maximum(param_q, 1e-10)
    return logits * prec, attn_t


# ---------------- main ----------------
if __name__ == "__main__":
    key = jax.random.PRNGKey(0)
    pkey, zkey = jax.random.split(key)
    params = init_params(pkey)
    packed = pack_params(params)
    # z: (B=2, T=7, D=32) -> with CLS token the sequence length becomes 8.
    z = jax.random.normal(zkey, (2, 7, LATENT_DIM), dtype=jnp.float32)

    # training path (attention weights neither computed nor returned)
    logits_train, attn_train = classification_head_forward(packed, z, is_train=True)
    logits_train = jax.block_until_ready(logits_train)
    assert attn_train is None
    assert logits_train.shape == (2, N_CLUSTERS)

    # eval path (returns per-layer head-averaged attention weights)
    logits_eval, attn_eval = classification_head_forward(packed, z, is_train=False)
    jax.block_until_ready((logits_eval, attn_eval))
    assert attn_eval.shape == (2, NLAYERS_CLS, 8, 8)

    # verify against a pure-JAX reference.  Tolerance is 1e-3 because the kernel
    # uses the EUP approximate reciprocal for the softmax normalization.
    ref_logits, ref_attn = reference_forward(params, z, is_train=False)
    np.testing.assert_allclose(np.asarray(logits_eval), np.asarray(ref_logits),
                               rtol=1e-3, atol=1e-3)
    np.testing.assert_allclose(np.asarray(attn_eval), np.asarray(ref_attn),
                               rtol=1e-3, atol=1e-3)
    # train/eval variants run the identical arithmetic for the logits path.
    np.testing.assert_allclose(np.asarray(logits_train), np.asarray(logits_eval),
                               rtol=1e-5, atol=1e-5)

    print("KERNEL_OK")
</pallas_src>

<mosaic_0001>
module attributes {stable_mosaic.version = 11 : i64} {
  func.func @fused_cls_head_kernel(%arg0: memref<14x32xf32, #tpu.memory_space<vmem>>, %arg1: memref<64x32xf32, #tpu.memory_space<vmem>>, %arg2: memref<224x128xf32, #tpu.memory_space<vmem>>, %arg3: memref<20x128xf32, #tpu.memory_space<vmem>>, %arg4: memref<2x8xf32, #tpu.memory_space<vmem>>, %arg5: memref<16x32xf32, #tpu.memory_space<vmem>>, %arg6: memref<16x32xf32, #tpu.memory_space<vmem>>) attributes {dimension_semantics = [], scalar_prefetch = 0 : i64, scratch_operands = 2 : i64, tpu.core_type = #tpu.core_type<tc>} {
    %c18 = arith.constant 18 : index
    %c0 = arith.constant 0 : index
    %0 = vector.load %arg3[%c18, %c0] : memref<20x128xf32, #tpu.memory_space<vmem>>, vector<1x32xf32>
    %c0_0 = arith.constant 0 : index
    %c0_1 = arith.constant 0 : index
    %1 = vector.load %arg5[%c0_0, %c0_1] : memref<16x32xf32, #tpu.memory_space<vmem>>, vector<1x32xf32>
    tpu.vector_store %arg5[%c0_0, %c0_1], %0 {strides = array<i32>} : memref<16x32xf32, #tpu.memory_space<vmem>>, vector<1x32xf32>,
    %c0_2 = arith.constant 0 : index
    %c0_3 = arith.constant 0 : index
    %2 = vector.load %arg0[%c0_2, %c0_3] : memref<14x32xf32, #tpu.memory_space<vmem>>, vector<7x32xf32>
    %c1 = arith.constant 1 : index
    %c0_4 = arith.constant 0 : index
    %3 = vector.load %arg5[%c1, %c0_4] : memref<16x32xf32, #tpu.memory_space<vmem>>, vector<7x32xf32>
    tpu.vector_store %arg5[%c1, %c0_4], %2 {strides = array<i32>} : memref<16x32xf32, #tpu.memory_space<vmem>>, vector<7x32xf32>,
    %c8 = arith.constant 8 : index
    %c0_5 = arith.constant 0 : index
    %4 = vector.load %arg5[%c8, %c0_5] : memref<16x32xf32, #tpu.memory_space<vmem>>, vector<1x32xf32>
    tpu.vector_store %arg5[%c8, %c0_5], %0 {strides = array<i32>} : memref<16x32xf32, #tpu.memory_space<vmem>>, vector<1x32xf32>,
    %c7 = arith.constant 7 : index
    %c0_6 = arith.constant 0 : index
    %5 = vector.load %arg0[%c7, %c0_6] : memref<14x32xf32, #tpu.memory_space<vmem>>, vector<7x32xf32>
    %c9 = arith.constant 9 : index
    %c0_7 = arith.constant 0 : index
    %6 = vector.load %arg5[%c9, %c0_7] : memref<16x32xf32, #tpu.memory_space<vmem>>, vector<7x32xf32>
    tpu.vector_store %arg5[%c9, %c0_7], %5 {strides = array<i32>} : memref<16x32xf32, #tpu.memory_space<vmem>>, vector<7x32xf32>,
    %c0_8 = arith.constant 0 : index
    %c0_9 = arith.constant 0 : index
    %7 = vector.load %arg5[%c0_8, %c0_9] : memref<16x32xf32, #tpu.memory_space<vmem>>, vector<16x32xf32>
    %c0_10 = arith.constant 0 : index
    %c0_11 = arith.constant 0 : index
    %8 = vector.load %arg1[%c0_10, %c0_11] : memref<64x32xf32, #tpu.memory_space<vmem>>, vector<16x32xf32>
    %c16 = arith.constant 16 : index
    %c0_12 = arith.constant 0 : index
    %9 = vector.load %arg1[%c16, %c0_12] : memref<64x32xf32, #tpu.memory_space<vmem>>, vector<16x32xf32>
    %c32 = arith.constant 32 : index
    %c0_13 = arith.constant 0 : index
    %10 = vector.load %arg1[%c32, %c0_13] : memref<64x32xf32, #tpu.memory_space<vmem>>, vector<16x32xf32>
    %11 = arith.mulf %7, %8 : vector<16x32xf32>
    %12 = vector.extract_strided_slice %7 {offsets = [0, 1], sizes = [16, 31], strides = [1, 1]} : vector<16x32xf32> to vector<16x31xf32>
    %13 = vector.extract_strided_slice %7 {offsets = [0, 0], sizes = [16, 1], strides = [1, 1]} : vector<16x32xf32> to vector<16x1xf32>
    %14 = tpu.concatenate %12, %13 in 1 : vector<16x31xf32>, vector<16x1xf32> -> vector<16x32xf32>
    %15 = arith.mulf %14, %9 : vector<16x32xf32>
    %16 = arith.addf %11, %15 : vector<16x32xf32>
    %17 = vector.extract_strided_slice %7 {offsets = [0, 31], sizes = [16, 1], strides = [1, 1]} : vector<16x32xf32> to vector<16x1xf32>
    %18 = vector.extract_strided_slice %7 {offsets = [0, 0], sizes = [16, 31], strides = [1, 1]} : vector<16x32xf32> to vector<16x31xf32>
    %19 = tpu.concatenate %17, %18 in 1 : vector<16x1xf32>, vector<16x31xf32> -> vector<16x32xf32>
    %20 = arith.mulf %19, %10 : vector<16x32xf32>
    %21 = arith.addf %16, %20 : vector<16x32xf32>
    %c48 = arith.constant 48 : index
    %c0_14 = arith.constant 0 : index
    %22 = vector.load %arg1[%c48, %c0_14] : memref<64x32xf32, #tpu.memory_space<vmem>>, vector<16x16xf32>
    %c0_15 = arith.constant 0 : index
    %c0_16 = arith.constant 0 : index
    %23 = vector.load %arg2[%c0_15, %c0_16] : memref<224x128xf32, #tpu.memory_space<vmem>>, vector<32x96xf32>
    %c0_17 = arith.constant 0 : index
    %c96 = arith.constant 96 : index
    %24 = vector.load %arg2[%c0_17, %c96] : memref<224x128xf32, #tpu.memory_space<vmem>>, vector<32x32xf32>
    %c32_18 = arith.constant 32 : index
    %c0_19 = arith.constant 0 : index
    %25 = vector.load %arg2[%c32_18, %c0_19] : memref<224x128xf32, #tpu.memory_space<vmem>>, vector<32x128xf32>
    %c64 = arith.constant 64 : index
    %c0_20 = arith.constant 0 : index
    %26 = vector.load %arg2[%c64, %c0_20] : memref<224x128xf32, #tpu.memory_space<vmem>>, vector<32x128xf32>
    %c0_21 = arith.constant 0 : index
    %c0_22 = arith.constant 0 : index
    %27 = vector.load %arg3[%c0_21, %c0_22] : memref<20x128xf32, #tpu.memory_space<vmem>>, vector<1x96xf32>
    %c1_23 = arith.constant 1 : index
    %c0_24 = arith.constant 0 : index
    %28 = vector.load %arg3[%c1_23, %c0_24] : memref<20x128xf32, #tpu.memory_space<vmem>>, vector<1x32xf32>
    %c2 = arith.constant 2 : index
    %c0_25 = arith.constant 0 : index
    %29 = vector.load %arg3[%c2, %c0_25] : memref<20x128xf32, #tpu.memory_space<vmem>>, vector<1x32xf32>
    %c3 = arith.constant 3 : index
    %c0_26 = arith.constant 0 : index
    %30 = vector.load %arg3[%c3, %c0_26] : memref<20x128xf32, #tpu.memory_space<vmem>>, vector<1x32xf32>
    %c4 = arith.constant 4 : index
    %c0_27 = arith.constant 0 : index
    %31 = vector.load %arg3[%c4, %c0_27] : memref<20x128xf32, #tpu.memory_space<vmem>>, vector<1x128xf32>
    %c5 = arith.constant 5 : index
    %c0_28 = arith.constant 0 : index
    %32 = vector.load %arg3[%c5, %c0_28] : memref<20x128xf32, #tpu.memory_space<vmem>>, vector<1x32xf32>
    %c6 = arith.constant 6 : index
    %c0_29 = arith.constant 0 : index
    %33 = vector.load %arg3[%c6, %c0_29] : memref<20x128xf32, #tpu.memory_space<vmem>>, vector<1x32xf32>
    %c7_30 = arith.constant 7 : index
    %c0_31 = arith.constant 0 : index
    %34 = vector.load %arg3[%c7_30, %c0_31] : memref<20x128xf32, #tpu.memory_space<vmem>>, vector<1x32xf32>
    %cst = arith.constant dense<0.000000e+00> : vector<16x96xf32>
    %35 = tpu.matmul %21, %23, %cst {dimension_numbers = #tpu.dot_dimension_numbers<[1], [0], [0], [1], [0, 0, 1, 1], [], []>} : vector<16x32xf32>, vector<32x96xf32>, vector<16x96xf32> -> vector<16x96xf32>
    %36 = vector.broadcast %27 : vector<1x96xf32> to vector<16x96xf32>
    %37 = arith.addf %35, %36 : vector<16x96xf32>
    %38 = vector.extract_strided_slice %37 {offsets = [0, 0], sizes = [16, 8], strides = [1, 1]} : vector<16x96xf32> to vector<16x8xf32>
    %39 = vector.extract_strided_slice %37 {offsets = [0, 32], sizes = [16, 8], strides = [1, 1]} : vector<16x96xf32> to vector<16x8xf32>
    %40 = vector.extract_strided_slice %37 {offsets = [0, 64], sizes = [16, 8], strides = [1, 1]} : vector<16x96xf32> to vector<16x8xf32>
    %cst_32 = arith.constant dense<0.000000e+00> : vector<16x16xf32>
    %41 = tpu.matmul %38, %39, %cst_32 {dimension_numbers = #tpu.dot_dimension_numbers<[1], [1], [0], [0], [0, 0, 1, 0], [], []>} : vector<16x8xf32>, vector<16x8xf32>, vector<16x16xf32> -> vector<16x16xf32>
    %42 = arith.addf %41, %22 : vector<16x16xf32>
    %cst_33 = arith.constant dense<0xFF800000> : vector<16xf32>
    %43 = vector.multi_reduction <maximumf>, %42, %cst_33 [1] : vector<16x16xf32> to vector<16xf32>
    %44 = vector.shape_cast %43 : vector<16xf32> to vector<16x1xf32>
    %45 = vector.broadcast %44 : vector<16x1xf32> to vector<16x16xf32>
    %46 = arith.subf %42, %45 : vector<16x16xf32>
    %47 = math.exp %46 : vector<16x16xf32>
    %cst_34 = arith.constant dense<0.000000e+00> : vector<16xf32>
    %48 = vector.multi_reduction <add>, %47, %cst_34 [1] : vector<16x16xf32> to vector<16xf32>
    %49 = vector.shape_cast %48 : vector<16xf32> to vector<16x1xf32>
    %50 = tpu.reciprocal %49 {approx = true} : vector<16x1xf32> -> vector<16x1xf32>
    %51 = vector.broadcast %50 : vector<16x1xf32> to vector<16x16xf32>
    %52 = arith.mulf %47, %51 : vector<16x16xf32>
    %cst_35 = arith.constant dense<0.000000e+00> : vector<16x8xf32>
    %53 = tpu.matmul %52, %40, %cst_35 {dimension_numbers = #tpu.dot_dimension_numbers<[1], [0], [0], [1], [0, 0, 1, 1], [], []>} : vector<16x16xf32>, vector<16x8xf32>, vector<16x8xf32> -> vector<16x8xf32>
    %c0_36 = arith.constant 0 : index
    %c0_37 = arith.constant 0 : index
    %54 = vector.load %arg6[%c0_36, %c0_37] : memref<16x32xf32, #tpu.memory_space<vmem>>, vector<16x8xf32>
    tpu.vector_store %arg6[%c0_36, %c0_37], %53 {strides = array<i32>} : memref<16x32xf32, #tpu.memory_space<vmem>>, vector<16x8xf32>,
    %55 = vector.extract_strided_slice %37 {offsets = [0, 8], sizes = [16, 8], strides = [1, 1]} : vector<16x96xf32> to vector<16x8xf32>
    %56 = vector.extract_strided_slice %37 {offsets = [0, 40], sizes = [16, 8], strides = [1, 1]} : vector<16x96xf32> to vector<16x8xf32>
    %57 = vector.extract_strided_slice %37 {offsets = [0, 72], sizes = [16, 8], strides = [1, 1]} : vector<16x96xf32> to vector<16x8xf32>
    %cst_38 = arith.constant dense<0.000000e+00> : vector<16x16xf32>
    %58 = tpu.matmul %55, %56, %cst_38 {dimension_numbers = #tpu.dot_dimension_numbers<[1], [1], [0], [0], [0, 0, 1, 0], [], []>} : vector<16x8xf32>, vector<16x8xf32>, vector<16x16xf32> -> vector<16x16xf32>
    %59 = arith.addf %58, %22 : vector<16x16xf32>
    %cst_39 = arith.constant dense<0xFF800000> : vector<16xf32>
    %60 = vector.multi_reduction <maximumf>, %59, %cst_39 [1] : vector<16x16xf32> to vector<16xf32>
    %61 = vector.shape_cast %60 : vector<16xf32> to vector<16x1xf32>
    %62 = vector.broadcast %61 : vector<16x1xf32> to vector<16x16xf32>
    %63 = arith.subf %59, %62 : vector<16x16xf32>
    %64 = math.exp %63 : vector<16x16xf32>
    %cst_40 = arith.constant dense<0.000000e+00> : vector<16xf32>
    %65 = vector.multi_reduction <add>, %64, %cst_40 [1] : vector<16x16xf32> to vector<16xf32>
    %66 = vector.shape_cast %65 : vector<16xf32> to vector<16x1xf32>
    %67 = tpu.reciprocal %66 {approx = true} : vector<16x1xf32> -> vector<16x1xf32>
    %68 = vector.broadcast %67 : vector<16x1xf32> to vector<16x16xf32>
    %69 = arith.mulf %64, %68 : vector<16x16xf32>
    %cst_41 = arith.constant dense<0.000000e+00> : vector<16x8xf32>
    %70 = tpu.matmul %69, %57, %cst_41 {dimension_numbers = #tpu.dot_dimension_numbers<[1], [0], [0], [1], [0, 0, 1, 1], [], []>} : vector<16x16xf32>, vector<16x8xf32>, vector<16x8xf32> -> vector<16x8xf32>
    %c0_42 = arith.constant 0 : index
    %c8_43 = arith.constant 8 : index
    %71 = vector.load %arg6[%c0_42, %c8_43] : memref<16x32xf32, #tpu.memory_space<vmem>>, vector<16x8xf32>
    tpu.vector_store %arg6[%c0_42, %c8_43], %70 {strides = array<i32>} : memref<16x32xf32, #tpu.memory_space<vmem>>, vector<16x8xf32>,
    %72 = vector.extract_strided_slice %37 {offsets = [0, 16], sizes = [16, 8], strides = [1, 1]} : vector<16x96xf32> to vector<16x8xf32>
    %73 = vector.extract_strided_slice %37 {offsets = [0, 48], sizes = [16, 8], strides = [1, 1]} : vector<16x96xf32> to vector<16x8xf32>
    %74 = vector.extract_strided_slice %37 {offsets = [0, 80], sizes = [16, 8], strides = [1, 1]} : vector<16x96xf32> to vector<16x8xf32>
    %cst_44 = arith.constant dense<0.000000e+00> : vector<16x16xf32>
    %75 = tpu.matmul %72, %73, %cst_44 {dimension_numbers = #tpu.dot_dimension_numbers<[1], [1], [0], [0], [0, 0, 1, 0], [], []>} : vector<16x8xf32>, vector<16x8xf32>, vector<16x16xf32> -> vector<16x16xf32>
    %76 = arith.addf %75, %22 : vector<16x16xf32>
    %cst_45 = arith.constant dense<0xFF800000> : vector<16xf32>
    %77 = vector.multi_reduction <maximumf>, %76, %cst_45 [1] : vector<16x16xf32> to vector<16xf32>
    %78 = vector.shape_cast %77 : vector<16xf32> to vector<16x1xf32>
    %79 = vector.broadcast %78 : vector<16x1xf32> to vector<16x16xf32>
    %80 = arith.subf %76, %79 : vector<16x16xf32>
    %81 = math.exp %80 : vector<16x16xf32>
    %cst_46 = arith.constant dense<0.000000e+00> : vector<16xf32>
    %82 = vector.multi_reduction <add>, %81, %cst_46 [1] : vector<16x16xf32> to vector<16xf32>
    %83 = vector.shape_cast %82 : vector<16xf32> to vector<16x1xf32>
    %84 = tpu.reciprocal %83 {approx = true} : vector<16x1xf32> -> vector<16x1xf32>
    %85 = vector.broadcast %84 : vector<16x1xf32> to vector<16x16xf32>
    %86 = arith.mulf %81, %85 : vector<16x16xf32>
    %cst_47 = arith.constant dense<0.000000e+00> : vector<16x8xf32>
    %87 = tpu.matmul %86, %74, %cst_47 {dimension_numbers = #tpu.dot_dimension_numbers<[1], [0], [0], [1], [0, 0, 1, 1], [], []>} : vector<16x16xf32>, vector<16x8xf32>, vector<16x8xf32> -> vector<16x8xf32>
    %c0_48 = arith.constant 0 : index
    %c16_49 = arith.constant 16 : index
    %88 = vector.load %arg6[%c0_48, %c16_49] : memref<16x32xf32, #tpu.memory_space<vmem>>, vector<16x8xf32>
    tpu.vector_store %arg6[%c0_48, %c16_49], %87 {strides = array<i32>} : memref<16x32xf32, #tpu.memory_space<vmem>>, vector<16x8xf32>,
    %89 = vector.extract_strided_slice %37 {offsets = [0, 24], sizes = [16, 8], strides = [1, 1]} : vector<16x96xf32> to vector<16x8xf32>
    %90 = vector.extract_strided_slice %37 {offsets = [0, 56], sizes = [16, 8], strides = [1, 1]} : vector<16x96xf32> to vector<16x8xf32>
    %91 = vector.extract_strided_slice %37 {offsets = [0, 88], sizes = [16, 8], strides = [1, 1]} : vector<16x96xf32> to vector<16x8xf32>
    %cst_50 = arith.constant dense<0.000000e+00> : vector<16x16xf32>
    %92 = tpu.matmul %89, %90, %cst_50 {dimension_numbers = #tpu.dot_dimension_numbers<[1], [1], [0], [0], [0, 0, 1, 0], [], []>} : vector<16x8xf32>, vector<16x8xf32>, vector<16x16xf32> -> vector<16x16xf32>
    %93 = arith.addf %92, %22 : vector<16x16xf32>
    %cst_51 = arith.constant dense<0xFF800000> : vector<16xf32>
    %94 = vector.multi_reduction <maximumf>, %93, %cst_51 [1] : vector<16x16xf32> to vector<16xf32>
    %95 = vector.shape_cast %94 : vector<16xf32> to vector<16x1xf32>
    %96 = vector.broadcast %95 : vector<16x1xf32> to vector<16x16xf32>
    %97 = arith.subf %93, %96 : vector<16x16xf32>
    %98 = math.exp %97 : vector<16x16xf32>
    %cst_52 = arith.constant dense<0.000000e+00> : vector<16xf32>
    %99 = vector.multi_reduction <add>, %98, %cst_52 [1] : vector<16x16xf32> to vector<16xf32>
    %100 = vector.shape_cast %99 : vector<16xf32> to vector<16x1xf32>
    %101 = tpu.reciprocal %100 {approx = true} : vector<16x1xf32> -> vector<16x1xf32>
    %102 = vector.broadcast %101 : vector<16x1xf32> to vector<16x16xf32>
    %103 = arith.mulf %98, %102 : vector<16x16xf32>
    %cst_53 = arith.constant dense<0.000000e+00> : vector<16x8xf32>
    %104 = tpu.matmul %103, %91, %cst_53 {dimension_numbers = #tpu.dot_dimension_numbers<[1], [0], [0], [1], [0, 0, 1, 1], [], []>} : vector<16x16xf32>, vector<16x8xf32>, vector<16x8xf32> -> vector<16x8xf32>
    %c0_54 = arith.constant 0 : index
    %c24 = arith.constant 24 : index
    %105 = vector.load %arg6[%c0_54, %c24] : memref<16x32xf32, #tpu.memory_space<vmem>>, vector<16x8xf32>
    tpu.vector_store %arg6[%c0_54, %c24], %104 {strides = array<i32>} : memref<16x32xf32, #tpu.memory_space<vmem>>, vector<16x8xf32>,
    %c0_55 = arith.constant 0 : index
    %c0_56 = arith.constant 0 : index
    %106 = vector.load %arg6[%c0_55, %c0_56] : memref<16x32xf32, #tpu.memory_space<vmem>>, vector<16x32xf32>
    %cst_57 = arith.constant dense<0.000000e+00> : vector<16x32xf32>
    %107 = tpu.matmul %106, %24, %cst_57 {dimension_numbers = #tpu.dot_dimension_numbers<[1], [0], [0], [1], [0, 0, 1, 1], [], []>} : vector<16x32xf32>, vector<32x32xf32>, vector<16x32xf32> -> vector<16x32xf32>
    %108 = arith.addf %21, %107 : vector<16x32xf32>
    %109 = vector.broadcast %28 : vector<1x32xf32> to vector<16x32xf32>
    %110 = arith.addf %108, %109 : vector<16x32xf32>
    %cst_58 = arith.constant dense<0.000000e+00> : vector<16xf32>
    %111 = vector.multi_reduction <add>, %110, %cst_58 [1] : vector<16x32xf32> to vector<16xf32>
    %112 = vector.shape_cast %111 : vector<16xf32> to vector<16x1xf32>
    %cst_59 = arith.constant 3.200000e+01 : f32
    %113 = vector.broadcast %cst_59 : f32 to vector<16x1xf32>
    %114 = arith.divf %112, %113 : vector<16x1xf32>
    %115 = vector.broadcast %114 : vector<16x1xf32> to vector<16x32xf32>
    %116 = arith.subf %110, %115 : vector<16x32xf32>
    %117 = arith.mulf %116, %116 : vector<16x32xf32>
    %cst_60 = arith.constant dense<0.000000e+00> : vector<16xf32>
    %118 = vector.multi_reduction <add>, %117, %cst_60 [1] : vector<16x32xf32> to vector<16xf32>
    %119 = vector.shape_cast %118 : vector<16xf32> to vector<16x1xf32>
    %cst_61 = arith.constant 3.200000e+01 : f32
    %120 = vector.broadcast %cst_61 : f32 to vector<16x1xf32>
    %121 = arith.divf %119, %120 : vector<16x1xf32>
    %122 = vector.broadcast %114 : vector<16x1xf32> to vector<16x32xf32>
    %123 = arith.subf %110, %122 : vector<16x32xf32>
    %cst_62 = arith.constant 9.99999974E-6 : f32
    %124 = vector.broadcast %cst_62 : f32 to vector<16x1xf32>
    %125 = arith.addf %121, %124 : vector<16x1xf32>
    %126 = math.rsqrt %125 : vector<16x1xf32>
    %127 = vector.broadcast %126 : vector<16x1xf32> to vector<16x32xf32>
    %128 = arith.mulf %123, %127 : vector<16x32xf32>
    %129 = vector.broadcast %29 : vector<1x32xf32> to vector<16x32xf32>
    %130 = arith.mulf %128, %129 : vector<16x32xf32>
    %131 = vector.broadcast %30 : vector<1x32xf32> to vector<16x32xf32>
    %132 = arith.addf %130, %131 : vector<16x32xf32>
    %cst_63 = arith.constant dense<0.000000e+00> : vector<16x128xf32>
    %133 = tpu.matmul %132, %25, %cst_63 {dimension_numbers = #tpu.dot_dimension_numbers<[1], [0], [0], [1], [0, 0, 1, 1], [], []>} : vector<16x32xf32>, vector<32x128xf32>, vector<16x128xf32> -> vector<16x128xf32>
    %134 = vector.broadcast %31 : vector<1x128xf32> to vector<16x128xf32>
    %135 = arith.addf %133, %134 : vector<16x128xf32>
    %cst_64 = arith.constant 0.000000e+00 : f32
    %136 = vector.broadcast %cst_64 : f32 to vector<16x128xf32>
    %137 = arith.maximumf %135, %136 : vector<16x128xf32>
    %cst_65 = arith.constant dense<0.000000e+00> : vector<16x32xf32>
    %138 = tpu.matmul %137, %26, %cst_65 {dimension_numbers = #tpu.dot_dimension_numbers<[1], [1], [0], [0], [0, 0, 1, 0], [], []>} : vector<16x128xf32>, vector<32x128xf32>, vector<16x32xf32> -> vector<16x32xf32>
    %139 = arith.addf %132, %138 : vector<16x32xf32>
    %140 = vector.broadcast %32 : vector<1x32xf32> to vector<16x32xf32>
    %141 = arith.addf %139, %140 : vector<16x32xf32>
    %cst_66 = arith.constant dense<0.000000e+00> : vector<16xf32>
    %142 = vector.multi_reduction <add>, %141, %cst_66 [1] : vector<16x32xf32> to vector<16xf32>
    %143 = vector.shape_cast %142 : vector<16xf32> to vector<16x1xf32>
    %cst_67 = arith.constant 3.200000e+01 : f32
    %144 = vector.broadcast %cst_67 : f32 to vector<16x1xf32>
    %145 = arith.divf %143, %144 : vector<16x1xf32>
    %146 = vector.broadcast %145 : vector<16x1xf32> to vector<16x32xf32>
    %147 = arith.subf %141, %146 : vector<16x32xf32>
    %148 = arith.mulf %147, %147 : vector<16x32xf32>
    %cst_68 = arith.constant dense<0.000000e+00> : vector<16xf32>
    %149 = vector.multi_reduction <add>, %148, %cst_68 [1] : vector<16x32xf32> to vector<16xf32>
    %150 = vector.shape_cast %149 : vector<16xf32> to vector<16x1xf32>
    %cst_69 = arith.constant 3.200000e+01 : f32
    %151 = vector.broadcast %cst_69 : f32 to vector<16x1xf32>
    %152 = arith.divf %150, %151 : vector<16x1xf32>
    %153 = vector.broadcast %145 : vector<16x1xf32> to vector<16x32xf32>
    %154 = arith.subf %141, %153 : vector<16x32xf32>
    %cst_70 = arith.constant 9.99999974E-6 : f32
    %155 = vector.broadcast %cst_70 : f32 to vector<16x1xf32>
    %156 = arith.addf %152, %155 : vector<16x1xf32>
    %157 = math.rsqrt %156 : vector<16x1xf32>
    %158 = vector.broadcast %157 : vector<16x1xf32> to vector<16x32xf32>
    %159 = arith.mulf %154, %158 : vector<16x32xf32>
    %160 = vector.broadcast %33 : vector<1x32xf32> to vector<16x32xf32>
    %161 = arith.mulf %159, %160 : vector<16x32xf32>
    %162 = vector.broadcast %34 : vector<1x32xf32> to vector<16x32xf32>
    %163 = arith.addf %161, %162 : vector<16x32xf32>
    %c96_71 = arith.constant 96 : index
    %c0_72 = arith.constant 0 : index
    %164 = vector.load %arg2[%c96_71, %c0_72] : memref<224x128xf32, #tpu.memory_space<vmem>>, vector<32x96xf32>
    %c96_73 = arith.constant 96 : index
    %c96_74 = arith.constant 96 : index
    %165 = vector.load %arg2[%c96_73, %c96_74] : memref<224x128xf32, #tpu.memory_space<vmem>>, vector<32x32xf32>
    %c128 = arith.constant 128 : index
    %c0_75 = arith.constant 0 : index
    %166 = vector.load %arg2[%c128, %c0_75] : memref<224x128xf32, #tpu.memory_space<vmem>>, vector<32x128xf32>
    %c160 = arith.constant 160 : index
    %c0_76 = arith.constant 0 : index
    %167 = vector.load %arg2[%c160, %c0_76] : memref<224x128xf32, #tpu.memory_space<vmem>>, vector<32x128xf32>
    %c8_77 = arith.constant 8 : index
    %c0_78 = arith.constant 0 : index
    %168 = vector.load %arg3[%c8_77, %c0_78] : memref<20x128xf32, #tpu.memory_space<vmem>>, vector<1x96xf32>
    %c9_79 = arith.constant 9 : index
    %c0_80 = arith.constant 0 : index
    %169 = vector.load %arg3[%c9_79, %c0_80] : memref<20x128xf32, #tpu.memory_space<vmem>>, vector<1x32xf32>
    %c10 = arith.constant 10 : index
    %c0_81 = arith.constant 0 : index
    %170 = vector.load %arg3[%c10, %c0_81] : memref<20x128xf32, #tpu.memory_space<vmem>>, vector<1x32xf32>
    %c11 = arith.constant 11 : index
    %c0_82 = arith.constant 0 : index
    %171 = vector.load %arg3[%c11, %c0_82] : memref<20x128xf32, #tpu.memory_space<vmem>>, vector<1x32xf32>
    %c12 = arith.constant 12 : index
    %c0_83 = arith.constant 0 : index
    %172 = vector.load %arg3[%c12, %c0_83] : memref<20x128xf32, #tpu.memory_space<vmem>>, vector<1x128xf32>
    %c13 = arith.constant 13 : index
    %c0_84 = arith.constant 0 : index
    %173 = vector.load %arg3[%c13, %c0_84] : memref<20x128xf32, #tpu.memory_space<vmem>>, vector<1x32xf32>
    %c14 = arith.constant 14 : index
    %c0_85 = arith.constant 0 : index
    %174 = vector.load %arg3[%c14, %c0_85] : memref<20x128xf32, #tpu.memory_space<vmem>>, vector<1x32xf32>
    %c15 = arith.constant 15 : index
    %c0_86 = arith.constant 0 : index
    %175 = vector.load %arg3[%c15, %c0_86] : memref<20x128xf32, #tpu.memory_space<vmem>>, vector<1x32xf32>
    %cst_87 = arith.constant dense<0.000000e+00> : vector<16x96xf32>
    %176 = tpu.matmul %163, %164, %cst_87 {dimension_numbers = #tpu.dot_dimension_numbers<[1], [0], [0], [1], [0, 0, 1, 1], [], []>} : vector<16x32xf32>, vector<32x96xf32>, vector<16x96xf32> -> vector<16x96xf32>
    %177 = vector.broadcast %168 : vector<1x96xf32> to vector<16x96xf32>
    %178 = arith.addf %176, %177 : vector<16x96xf32>
    %179 = vector.extract_strided_slice %178 {offsets = [0, 0], sizes = [16, 8], strides = [1, 1]} : vector<16x96xf32> to vector<16x8xf32>
    %180 = vector.extract_strided_slice %178 {offsets = [0, 32], sizes = [16, 8], strides = [1, 1]} : vector<16x96xf32> to vector<16x8xf32>
    %181 = vector.extract_strided_slice %178 {offsets = [0, 64], sizes = [16, 8], strides = [1, 1]} : vector<16x96xf32> to vector<16x8xf32>
    %cst_88 = arith.constant dense<0.000000e+00> : vector<16x16xf32>
    %182 = tpu.matmul %179, %180, %cst_88 {dimension_numbers = #tpu.dot_dimension_numbers<[1], [1], [0], [0], [0, 0, 1, 0], [], []>} : vector<16x8xf32>, vector<16x8xf32>, vector<16x16xf32> -> vector<16x16xf32>
    %183 = arith.addf %182, %22 : vector<16x16xf32>
    %cst_89 = arith.constant dense<0xFF800000> : vector<16xf32>
    %184 = vector.multi_reduction <maximumf>, %183, %cst_89 [1] : vector<16x16xf32> to vector<16xf32>
    %185 = vector.shape_cast %184 : vector<16xf32> to vector<16x1xf32>
    %186 = vector.broadcast %185 : vector<16x1xf32> to vector<16x16xf32>
    %187 = arith.subf %183, %186 : vector<16x16xf32>
    %188 = math.exp %187 : vector<16x16xf32>
    %cst_90 = arith.constant dense<0.000000e+00> : vector<16xf32>
    %189 = vector.multi_reduction <add>, %188, %cst_90 [1] : vector<16x16xf32> to vector<16xf32>
    %190 = vector.shape_cast %189 : vector<16xf32> to vector<16x1xf32>
    %191 = tpu.reciprocal %190 {approx = true} : vector<16x1xf32> -> vector<16x1xf32>
    %192 = vector.broadcast %191 : vector<16x1xf32> to vector<16x16xf32>
    %193 = arith.mulf %188, %192 : vector<16x16xf32>
    %cst_91 = arith.constant dense<0.000000e+00> : vector<16x8xf32>
    %194 = tpu.matmul %193, %181, %cst_91 {dimension_numbers = #tpu.dot_dimension_numbers<[1], [0], [0], [1], [0, 0, 1, 1], [], []>} : vector<16x16xf32>, vector<16x8xf32>, vector<16x8xf32> -> vector<16x8xf32>
    %c0_92 = arith.constant 0 : index
    %c0_93 = arith.constant 0 : index
    %195 = vector.load %arg6[%c0_92, %c0_93] : memref<16x32xf32, #tpu.memory_space<vmem>>, vector<16x8xf32>
    tpu.vector_store %arg6[%c0_92, %c0_93], %194 {strides = array<i32>} : memref<16x32xf32, #tpu.memory_space<vmem>>, vector<16x8xf32>,
    %196 = vector.extract_strided_slice %178 {offsets = [0, 8], sizes = [16, 8], strides = [1, 1]} : vector<16x96xf32> to vector<16x8xf32>
    %197 = vector.extract_strided_slice %178 {offsets = [0, 40], sizes = [16, 8], strides = [1, 1]} : vector<16x96xf32> to vector<16x8xf32>
    %198 = vector.extract_strided_slice %178 {offsets = [0, 72], sizes = [16, 8], strides = [1, 1]} : vector<16x96xf32> to vector<16x8xf32>
    %cst_94 = arith.constant dense<0.000000e+00> : vector<16x16xf32>
    %199 = tpu.matmul %196, %197, %cst_94 {dimension_numbers = #tpu.dot_dimension_numbers<[1], [1], [0], [0], [0, 0, 1, 0], [], []>} : vector<16x8xf32>, vector<16x8xf32>, vector<16x16xf32> -> vector<16x16xf32>
    %200 = arith.addf %199, %22 : vector<16x16xf32>
    %cst_95 = arith.constant dense<0xFF800000> : vector<16xf32>
    %201 = vector.multi_reduction <maximumf>, %200, %cst_95 [1] : vector<16x16xf32> to vector<16xf32>
    %202 = vector.shape_cast %201 : vector<16xf32> to vector<16x1xf32>
    %203 = vector.broadcast %202 : vector<16x1xf32> to vector<16x16xf32>
    %204 = arith.subf %200, %203 : vector<16x16xf32>
    %205 = math.exp %204 : vector<16x16xf32>
    %cst_96 = arith.constant dense<0.000000e+00> : vector<16xf32>
    %206 = vector.multi_reduction <add>, %205, %cst_96 [1] : vector<16x16xf32> to vector<16xf32>
    %207 = vector.shape_cast %206 : vector<16xf32> to vector<16x1xf32>
    %208 = tpu.reciprocal %207 {approx = true} : vector<16x1xf32> -> vector<16x1xf32>
    %209 = vector.broadcast %208 : vector<16x1xf32> to vector<16x16xf32>
    %210 = arith.mulf %205, %209 : vector<16x16xf32>
    %cst_97 = arith.constant dense<0.000000e+00> : vector<16x8xf32>
    %211 = tpu.matmul %210, %198, %cst_97 {dimension_numbers = #tpu.dot_dimension_numbers<[1], [0], [0], [1], [0, 0, 1, 1], [], []>} : vector<16x16xf32>, vector<16x8xf32>, vector<16x8xf32> -> vector<16x8xf32>
    %c0_98 = arith.constant 0 : index
    %c8_99 = arith.constant 8 : index
    %212 = vector.load %arg6[%c0_98, %c8_99] : memref<16x32xf32, #tpu.memory_space<vmem>>, vector<16x8xf32>
    tpu.vector_store %arg6[%c0_98, %c8_99], %211 {strides = array<i32>} : memref<16x32xf32, #tpu.memory_space<vmem>>, vector<16x8xf32>,
    %213 = vector.extract_strided_slice %178 {offsets = [0, 16], sizes = [16, 8], strides = [1, 1]} : vector<16x96xf32> to vector<16x8xf32>
    %214 = vector.extract_strided_slice %178 {offsets = [0, 48], sizes = [16, 8], strides = [1, 1]} : vector<16x96xf32> to vector<16x8xf32>
    %215 = vector.extract_strided_slice %178 {offsets = [0, 80], sizes = [16, 8], strides = [1, 1]} : vector<16x96xf32> to vector<16x8xf32>
    %cst_100 = arith.constant dense<0.000000e+00> : vector<16x16xf32>
    %216 = tpu.matmul %213, %214, %cst_100 {dimension_numbers = #tpu.dot_dimension_numbers<[1], [1], [0], [0], [0, 0, 1, 0], [], []>} : vector<16x8xf32>, vector<16x8xf32>, vector<16x16xf32> -> vector<16x16xf32>
    %217 = arith.addf %216, %22 : vector<16x16xf32>
    %cst_101 = arith.constant dense<0xFF800000> : vector<16xf32>
    %218 = vector.multi_reduction <maximumf>, %217, %cst_101 [1] : vector<16x16xf32> to vector<16xf32>
    %219 = vector.shape_cast %218 : vector<16xf32> to vector<16x1xf32>
    %220 = vector.broadcast %219 : vector<16x1xf32> to vector<16x16xf32>
    %221 = arith.subf %217, %220 : vector<16x16xf32>
    %222 = math.exp %221 : vector<16x16xf32>
    %cst_102 = arith.constant dense<0.000000e+00> : vector<16xf32>
    %223 = vector.multi_reduction <add>, %222, %cst_102 [1] : vector<16x16xf32> to vector<16xf32>
    %224 = vector.shape_cast %223 : vector<16xf32> to vector<16x1xf32>
    %225 = tpu.reciprocal %224 {approx = true} : vector<16x1xf32> -> vector<16x1xf32>
    %226 = vector.broadcast %225 : vector<16x1xf32> to vector<16x16xf32>
    %227 = arith.mulf %222, %226 : vector<16x16xf32>
    %cst_103 = arith.constant dense<0.000000e+00> : vector<16x8xf32>
    %228 = tpu.matmul %227, %215, %cst_103 {dimension_numbers = #tpu.dot_dimension_numbers<[1], [0], [0], [1], [0, 0, 1, 1], [], []>} : vector<16x16xf32>, vector<16x8xf32>, vector<16x8xf32> -> vector<16x8xf32>
    %c0_104 = arith.constant 0 : index
    %c16_105 = arith.constant 16 : index
    %229 = vector.load %arg6[%c0_104, %c16_105] : memref<16x32xf32, #tpu.memory_space<vmem>>, vector<16x8xf32>
    tpu.vector_store %arg6[%c0_104, %c16_105], %228 {strides = array<i32>} : memref<16x32xf32, #tpu.memory_space<vmem>>, vector<16x8xf32>,
    %230 = vector.extract_strided_slice %178 {offsets = [0, 24], sizes = [16, 8], strides = [1, 1]} : vector<16x96xf32> to vector<16x8xf32>
    %231 = vector.extract_strided_slice %178 {offsets = [0, 56], sizes = [16, 8], strides = [1, 1]} : vector<16x96xf32> to vector<16x8xf32>
    %232 = vector.extract_strided_slice %178 {offsets = [0, 88], sizes = [16, 8], strides = [1, 1]} : vector<16x96xf32> to vector<16x8xf32>
    %cst_106 = arith.constant dense<0.000000e+00> : vector<16x16xf32>
    %233 = tpu.matmul %230, %231, %cst_106 {dimension_numbers = #tpu.dot_dimension_numbers<[1], [1], [0], [0], [0, 0, 1, 0], [], []>} : vector<16x8xf32>, vector<16x8xf32>, vector<16x16xf32> -> vector<16x16xf32>
    %234 = arith.addf %233, %22 : vector<16x16xf32>
    %cst_107 = arith.constant dense<0xFF800000> : vector<16xf32>
    %235 = vector.multi_reduction <maximumf>, %234, %cst_107 [1] : vector<16x16xf32> to vector<16xf32>
    %236 = vector.shape_cast %235 : vector<16xf32> to vector<16x1xf32>
    %237 = vector.broadcast %236 : vector<16x1xf32> to vector<16x16xf32>
    %238 = arith.subf %234, %237 : vector<16x16xf32>
    %239 = math.exp %238 : vector<16x16xf32>
    %cst_108 = arith.constant dense<0.000000e+00> : vector<16xf32>
    %240 = vector.multi_reduction <add>, %239, %cst_108 [1] : vector<16x16xf32> to vector<16xf32>
    %241 = vector.shape_cast %240 : vector<16xf32> to vector<16x1xf32>
    %242 = tpu.reciprocal %241 {approx = true} : vector<16x1xf32> -> vector<16x1xf32>
    %243 = vector.broadcast %242 : vector<16x1xf32> to vector<16x16xf32>
    %244 = arith.mulf %239, %243 : vector<16x16xf32>
    %cst_109 = arith.constant dense<0.000000e+00> : vector<16x8xf32>
    %245 = tpu.matmul %244, %232, %cst_109 {dimension_numbers = #tpu.dot_dimension_numbers<[1], [0], [0], [1], [0, 0, 1, 1], [], []>} : vector<16x16xf32>, vector<16x8xf32>, vector<16x8xf32> -> vector<16x8xf32>
    %c0_110 = arith.constant 0 : index
    %c24_111 = arith.constant 24 : index
    %246 = vector.load %arg6[%c0_110, %c24_111] : memref<16x32xf32, #tpu.memory_space<vmem>>, vector<16x8xf32>
    tpu.vector_store %arg6[%c0_110, %c24_111], %245 {strides = array<i32>} : memref<16x32xf32, #tpu.memory_space<vmem>>, vector<16x8xf32>,
    %c0_112 = arith.constant 0 : index
    %c0_113 = arith.constant 0 : index
    %247 = vector.load %arg6[%c0_112, %c0_113] : memref<16x32xf32, #tpu.memory_space<vmem>>, vector<16x32xf32>
    %cst_114 = arith.constant dense<0.000000e+00> : vector<16x32xf32>
    %248 = tpu.matmul %247, %165, %cst_114 {dimension_numbers = #tpu.dot_dimension_numbers<[1], [0], [0], [1], [0, 0, 1, 1], [], []>} : vector<16x32xf32>, vector<32x32xf32>, vector<16x32xf32> -> vector<16x32xf32>
    %249 = arith.addf %163, %248 : vector<16x32xf32>
    %250 = vector.broadcast %169 : vector<1x32xf32> to vector<16x32xf32>
    %251 = arith.addf %249, %250 : vector<16x32xf32>
    %cst_115 = arith.constant dense<0.000000e+00> : vector<16xf32>
    %252 = vector.multi_reduction <add>, %251, %cst_115 [1] : vector<16x32xf32> to vector<16xf32>
    %253 = vector.shape_cast %252 : vector<16xf32> to vector<16x1xf32>
    %cst_116 = arith.constant 3.200000e+01 : f32
    %254 = vector.broadcast %cst_116 : f32 to vector<16x1xf32>
    %255 = arith.divf %253, %254 : vector<16x1xf32>
    %256 = vector.broadcast %255 : vector<16x1xf32> to vector<16x32xf32>
    %257 = arith.subf %251, %256 : vector<16x32xf32>
    %258 = arith.mulf %257, %257 : vector<16x32xf32>
    %cst_117 = arith.constant dense<0.000000e+00> : vector<16xf32>
    %259 = vector.multi_reduction <add>, %258, %cst_117 [1] : vector<16x32xf32> to vector<16xf32>
    %260 = vector.shape_cast %259 : vector<16xf32> to vector<16x1xf32>
    %cst_118 = arith.constant 3.200000e+01 : f32
    %261 = vector.broadcast %cst_118 : f32 to vector<16x1xf32>
    %262 = arith.divf %260, %261 : vector<16x1xf32>
    %263 = vector.broadcast %255 : vector<16x1xf32> to vector<16x32xf32>
    %264 = arith.subf %251, %263 : vector<16x32xf32>
    %cst_119 = arith.constant 9.99999974E-6 : f32
    %265 = vector.broadcast %cst_119 : f32 to vector<16x1xf32>
    %266 = arith.addf %262, %265 : vector<16x1xf32>
    %267 = math.rsqrt %266 : vector<16x1xf32>
    %268 = vector.broadcast %267 : vector<16x1xf32> to vector<16x32xf32>
    %269 = arith.mulf %264, %268 : vector<16x32xf32>
    %270 = vector.broadcast %170 : vector<1x32xf32> to vector<16x32xf32>
    %271 = arith.mulf %269, %270 : vector<16x32xf32>
    %272 = vector.broadcast %171 : vector<1x32xf32> to vector<16x32xf32>
    %273 = arith.addf %271, %272 : vector<16x32xf32>
    %cst_120 = arith.constant dense<0.000000e+00> : vector<16x128xf32>
    %274 = tpu.matmul %273, %166, %cst_120 {dimension_numbers = #tpu.dot_dimension_numbers<[1], [0], [0], [1], [0, 0, 1, 1], [], []>} : vector<16x32xf32>, vector<32x128xf32>, vector<16x128xf32> -> vector<16x128xf32>
    %275 = vector.broadcast %172 : vector<1x128xf32> to vector<16x128xf32>
    %276 = arith.addf %274, %275 : vector<16x128xf32>
    %cst_121 = arith.constant 0.000000e+00 : f32
    %277 = vector.broadcast %cst_121 : f32 to vector<16x128xf32>
    %278 = arith.maximumf %276, %277 : vector<16x128xf32>
    %cst_122 = arith.constant dense<0.000000e+00> : vector<16x32xf32>
    %279 = tpu.matmul %278, %167, %cst_122 {dimension_numbers = #tpu.dot_dimension_numbers<[1], [1], [0], [0], [0, 0, 1, 0], [], []>} : vector<16x128xf32>, vector<32x128xf32>, vector<16x32xf32> -> vector<16x32xf32>
    %280 = arith.addf %273, %279 : vector<16x32xf32>
    %281 = vector.broadcast %173 : vector<1x32xf32> to vector<16x32xf32>
    %282 = arith.addf %280, %281 : vector<16x32xf32>
    %cst_123 = arith.constant dense<0.000000e+00> : vector<16xf32>
    %283 = vector.multi_reduction <add>, %282, %cst_123 [1] : vector<16x32xf32> to vector<16xf32>
    %284 = vector.shape_cast %283 : vector<16xf32> to vector<16x1xf32>
    %cst_124 = arith.constant 3.200000e+01 : f32
    %285 = vector.broadcast %cst_124 : f32 to vector<16x1xf32>
    %286 = arith.divf %284, %285 : vector<16x1xf32>
    %287 = vector.broadcast %286 : vector<16x1xf32> to vector<16x32xf32>
    %288 = arith.subf %282, %287 : vector<16x32xf32>
    %289 = arith.mulf %288, %288 : vector<16x32xf32>
    %cst_125 = arith.constant dense<0.000000e+00> : vector<16xf32>
    %290 = vector.multi_reduction <add>, %289, %cst_125 [1] : vector<16x32xf32> to vector<16xf32>
    %291 = vector.shape_cast %290 : vector<16xf32> to vector<16x1xf32>
    %cst_126 = arith.constant 3.200000e+01 : f32
    %292 = vector.broadcast %cst_126 : f32 to vector<16x1xf32>
    %293 = arith.divf %291, %292 : vector<16x1xf32>
    %294 = vector.broadcast %286 : vector<16x1xf32> to vector<16x32xf32>
    %295 = arith.subf %282, %294 : vector<16x32xf32>
    %cst_127 = arith.constant 9.99999974E-6 : f32
    %296 = vector.broadcast %cst_127 : f32 to vector<16x1xf32>
    %297 = arith.addf %293, %296 : vector<16x1xf32>
    %298 = math.rsqrt %297 : vector<16x1xf32>
    %299 = vector.broadcast %298 : vector<16x1xf32> to vector<16x32xf32>
    %300 = arith.mulf %295, %299 : vector<16x32xf32>
    %301 = vector.broadcast %174 : vector<1x32xf32> to vector<16x32xf32>
    %302 = arith.mulf %300, %301 : vector<16x32xf32>
    %303 = vector.broadcast %175 : vector<1x32xf32> to vector<16x32xf32>
    %304 = arith.addf %302, %303 : vector<16x32xf32>
    %c192 = arith.constant 192 : index
    %c0_128 = arith.constant 0 : index
    %305 = vector.load %arg2[%c192, %c0_128] : memref<224x128xf32, #tpu.memory_space<vmem>>, vector<32x32xf32>
    %c192_129 = arith.constant 192 : index
    %c32_130 = arith.constant 32 : index
    %306 = vector.load %arg2[%c192_129, %c32_130] : memref<224x128xf32, #tpu.memory_space<vmem>>, vector<32x8xf32>
    %c16_131 = arith.constant 16 : index
    %c0_132 = arith.constant 0 : index
    %307 = vector.load %arg3[%c16_131, %c0_132] : memref<20x128xf32, #tpu.memory_space<vmem>>, vector<1x32xf32>
    %c17 = arith.constant 17 : index
    %c0_133 = arith.constant 0 : index
    %308 = vector.load %arg3[%c17, %c0_133] : memref<20x128xf32, #tpu.memory_space<vmem>>, vector<1x8xf32>
    %c19 = arith.constant 19 : index
    %c0_134 = arith.constant 0 : index
    %309 = vector.load %arg3[%c19, %c0_134] : memref<20x128xf32, #tpu.memory_space<vmem>>, vector<1x1xf32>
    %310 = math.exp %309 : vector<1x1xf32>
    %cst_135 = arith.constant 1.000000e-10 : f32
    %311 = vector.broadcast %cst_135 : f32 to vector<1x1xf32>
    %312 = arith.maximumf %310, %311 : vector<1x1xf32>
    %cst_136 = arith.constant 5.000000e-01 : f32
    %313 = vector.broadcast %cst_136 : f32 to vector<1x1xf32>
    %314 = arith.divf %313, %312 : vector<1x1xf32>
    %cst_137 = arith.constant dense<0.000000e+00> : vector<16x32xf32>
    %315 = tpu.matmul %304, %305, %cst_137 {dimension_numbers = #tpu.dot_dimension_numbers<[1], [0], [0], [1], [0, 0, 1, 1], [], []>} : vector<16x32xf32>, vector<32x32xf32>, vector<16x32xf32> -> vector<16x32xf32>
    %316 = vector.broadcast %307 : vector<1x32xf32> to vector<16x32xf32>
    %317 = arith.addf %315, %316 : vector<16x32xf32>
    %cst_138 = arith.constant 0.000000e+00 : f32
    %318 = vector.broadcast %cst_138 : f32 to vector<16x32xf32>
    %319 = arith.maximumf %317, %318 : vector<16x32xf32>
    %cst_139 = arith.constant dense<0.000000e+00> : vector<16x8xf32>
    %320 = tpu.matmul %319, %306, %cst_139 {dimension_numbers = #tpu.dot_dimension_numbers<[1], [0], [0], [1], [0, 0, 1, 1], [], []>} : vector<16x32xf32>, vector<32x8xf32>, vector<16x8xf32> -> vector<16x8xf32>
    %321 = vector.broadcast %308 : vector<1x8xf32> to vector<16x8xf32>
    %322 = arith.addf %320, %321 : vector<16x8xf32>
    %323 = vector.broadcast %314 : vector<1x1xf32> to vector<16x8xf32>
    %324 = arith.mulf %322, %323 : vector<16x8xf32>
    %325 = vector.extract_strided_slice %324 {offsets = [0, 0], sizes = [1, 8], strides = [1, 1]} : vector<16x8xf32> to vector<1x8xf32>
    %c0_140 = arith.constant 0 : index
    %c0_141 = arith.constant 0 : index
    %326 = vector.load %arg4[%c0_140, %c0_141] : memref<2x8xf32, #tpu.memory_space<vmem>>, vector<1x8xf32>
    tpu.vector_store %arg4[%c0_140, %c0_141], %325 {strides = array<i32>} : memref<2x8xf32, #tpu.memory_space<vmem>>, vector<1x8xf32>,
    %327 = vector.extract_strided_slice %324 {offsets = [8, 0], sizes = [1, 8], strides = [1, 1]} : vector<16x8xf32> to vector<1x8xf32>
    %c1_142 = arith.constant 1 : index
    %c0_143 = arith.constant 0 : index
    %328 = vector.load %arg4[%c1_142, %c0_143] : memref<2x8xf32, #tpu.memory_space<vmem>>, vector<1x8xf32>
    tpu.vector_store %arg4[%c1_142, %c0_143], %327 {strides = array<i32>} : memref<2x8xf32, #tpu.memory_space<vmem>>, vector<1x8xf32>,
    return
  }
}

</mosaic_0001>

<llo_original>
// kernel: classification_head_forward.1
$region0: #{classification_head_forward.1}
  #allocation0 [shape = 'u32[]', space=smem, size = 0x4, offset = 0x4, fixed_abs, tag = 'smem constant byte address 0x4 - core index']
  #allocation1 [shape = 'u32[144,128]{1,0:T(1,128)}', space=vmem, size = 0x12000, scoped, tag = 'internal scratch']
  #allocation2 [shape = 'f32[16,32]{1,0:T(8,128)}', space=vmem, size = 0x2000, scoped, tag = 'scratch operand']
  #allocation3 [shape = 'f32[16,32]{1,0:T(8,128)}', space=vmem, size = 0x2000, scoped, tag = 'scratch operand']
  %s0 = inlined_call_operand.vmem [shape: f32[14,32], index: 0, kind: input, shape index: {}]
  %s1 = inlined_call_operand.vmem [shape: f32[64,32], index: 1, kind: input, shape index: {}]
  %s2 = inlined_call_operand.hbm [shape: f32[224,128], index: 2, kind: input, shape index: {}]
  %s3 = inlined_call_operand.hbm [shape: f32[20,128], index: 3, kind: input, shape index: {}]
  %s4 = inlined_call_operand.hbm [shape: f32[2,8], index: 4, kind: output, shape index: {}]
  %s5 = sld [smem:[#allocation0]]
  $region34: #{classification_head_forward.1} parent=0
    _
  %s7 = ssub.s32 1, %s5
  %s8 = scalar_select 0, %s7, %s5
  $region1: #{classification_head_forward.1} parent=0
    #allocation4 [shape = 'u8[114688]{0}', space=vmem, size = 0x1c000, scoped, tag = 'input window, operand 2, single buffered']
    #allocation5 [shape = 's32[1]{0}', space=sflag, size = 0x4, scoped, tag = 'scoped memory for classification_head_forward.1']
    #allocation6 [shape = 's32[1]{0}', space=sflag, size = 0x4, scoped, tag = 'scoped memory for classification_head_forward.1']
    #allocation7 [shape = 'u8[12288]{0}', space=vmem, size = 0x3000, scoped, tag = 'input window, operand 3, single buffered']
    #allocation8 [shape = 's32[1]{0}', space=sflag, size = 0x4, scoped, tag = 'scoped memory for classification_head_forward.1']
    #allocation9 [shape = 'u8[1024]{0}', space=vmem, size = 0x400, scoped, tag = 'output window, operand 0, single buffered']
    %9 = vsyncpa [#allocation5], 0
    %10 = vsyncpa [#allocation8], 0
    %11 = vsyncpa [#allocation6], 0
    // Predicated region
    $region2: #{classification_head_forward.1} parent=1 // pred_check
      _
    $region3: #{classification_head_forward.1} parent=1 // pred_check_branch
      %13 = sbr.rel (0) target = $region5
    $region4: #{classification_head_forward.1} parent=1 // pred_region
      _
    $region5: #{classification_head_forward.1} parent=1 // pred_fallthru
      _
    // Predicated region
    $region6: #{classification_head_forward.1} parent=1 // pred_check
      _
    $region7: #{classification_head_forward.1} parent=1 // pred_check_branch
      %15 = sbr.rel (0) target = $region9
    $region8: #{classification_head_forward.1} parent=1 // pred_region
      _
    $region9: #{classification_head_forward.1} parent=1 // pred_fallthru
      _
    // Predicated region
    $region10: #{classification_head_forward.1} parent=1 // pred_check
      _
    $region11: #{classification_head_forward.1} parent=1 // pred_check_branch
      %17 = sbr.rel (0) target = $region13
    $region12: #{classification_head_forward.1} parent=1 // pred_region
      %s19 = ssub.s32 3584, 3584
      %20 = vsyncadd [#allocation5], %s19
      %s21 = sshll.u32 [#allocation4], 4
      %s22 = int_to_ptr.vmem [resolvable:$true] %s21
      %27 = dma.hbm_to_vmem [thread:$0]  %s2, 3584, %s22, [#allocation5], 128, 128, 8
    $region13: #{classification_head_forward.1} parent=1 // pred_fallthru
      _
    // Predicated region
    $region14: #{classification_head_forward.1} parent=1 // pred_check
      _
    $region15: #{classification_head_forward.1} parent=1 // pred_check_branch
      %29 = sbr.rel (0) target = $region17
    $region16: #{classification_head_forward.1} parent=1 // pred_region
      %s31 = ssub.s32 384, 384
      %32 = vsyncadd [#allocation8], %s31
      %s33 = sshll.u32 [#allocation7], 4
      %s34 = int_to_ptr.vmem [resolvable:$true] %s33
      %39 = dma.hbm_to_vmem [thread:$0]  %s3, 384, %s34, [#allocation8], 128, 128, 8
    $region17: #{classification_head_forward.1} parent=1 // pred_fallthru
      _
    // Predicated region
    $region18: #{classification_head_forward.1} parent=1 // pred_check
      _
    $region19: #{classification_head_forward.1} parent=1 // pred_check_branch
      %41 = sbr.rel (0) target = $region21
    $region20: #{classification_head_forward.1} parent=1 // pred_region
      %42 = dma.done [#allocation5], 3584
    $region21: #{classification_head_forward.1} parent=1 // pred_fallthru
      _
    // Predicated region
    $region22: #{classification_head_forward.1} parent=1 // pred_check
      _
    $region23: #{classification_head_forward.1} parent=1 // pred_check_branch
      %44 = sbr.rel (0) target = $region25
    $region24: #{classification_head_forward.1} parent=1 // pred_region
      %45 = dma.done [#allocation8], 384
    $region25: #{classification_head_forward.1} parent=1 // pred_fallthru
      _
    %v46 = vld [vmem:[#allocation7 + $0x12] sm:$0x1]
    %vm47 = vcmask 253952
    %48 = vst.msk [vmem:[#allocation2] sm:$0x1] %vm47, %v46
    %v49 = vld [vmem:[%s0] sm:$0x7f]
    %vm50 = vcmask 260096
    %51 = vst.msk [vmem:[#allocation2 + $0x1] sm:$0x7f] %vm50, %v49
    %52 = vst.msk [vmem:[#allocation2 + $0x8] sm:$0x1] %vm47, %v46
    %v53 = vld [vmem:[%s0 + $0x7] sm:$0x7f]
    %54 = vst.msk [vmem:[#allocation2 + $0x9] sm:$0x7f] %vm50, %v53
    %v55 = vld [vmem:[#allocation2] sm:$0xff]
    %v56 = vld [vmem:[#allocation2 + $0x8] sm:$0xff]
    %v57 = vld [vmem:[%s1] sm:$0xff]
    %v58 = vld [vmem:[%s1 + $0x8] sm:$0xff]
    %v59 = vld [vmem:[%s1 + $0x10] sm:$0xff]
    %v60 = vld [vmem:[%s1 + $0x18] sm:$0xff]
    %v61 = vld [vmem:[%s1 + $0x20] sm:$0xff]
    %v62 = vld [vmem:[%s1 + $0x28] sm:$0xff]
    %v63 = vmul.f32 %v55, %v57
    %v64 = vmul.f32 %v56, %v58
    %67 = vrot.lane.b32.xlu0 %v55, 127
    %v68 = vpop.permute.xlu0 %67
    %69 = vrot.lane.b32.xlu0 %v56, 127
    %v70 = vpop.permute.xlu0 %69
    %73 = vrot.lane.b32.xlu0 %v55, 31
    %v74 = vpop.permute.xlu0 %73
    %75 = vrot.lane.b32.xlu0 %v56, 31
    %v76 = vpop.permute.xlu0 %75
    %vm79 = vcmask 252928
    %v80 = vsel %vm79, %v68, %v74
    %v81 = vsel %vm79, %v70, %v76
    %v82 = vmul.f32 %v80, %v59
    %v83 = vmul.f32 %v81, %v60
    %v84 = vadd.f32 %v63, %v82
    %v85 = vadd.f32 %v64, %v83
    %86 = vrot.lane.b32.xlu0 %v55, 97
    %v87 = vpop.permute.xlu0 %86
    %88 = vrot.lane.b32.xlu0 %v56, 97
    %v89 = vpop.permute.xlu0 %88
    %92 = vrot.lane.b32.xlu0 %v55, 1
    %v93 = vpop.permute.xlu0 %92
    %94 = vrot.lane.b32.xlu0 %v56, 1
    %v95 = vpop.permute.xlu0 %94
    %vm98 = vcmask 7168
    %v99 = vsel %vm98, %v87, %v93
    %v100 = vsel %vm98, %v89, %v95
    %v101 = vmul.f32 %v99, %v61
    %v102 = vmul.f32 %v100, %v62
    %v103 = vadd.f32 %v84, %v101
    %v104 = vadd.f32 %v85, %v102
    %v105 = vld [vmem:[%s1 + $0x30] sm:$0xff]
    %v106 = vld [vmem:[%s1 + $0x38] sm:$0xff]
    %v107 = vld [vmem:[#allocation4] sm:$0xff]
    %v108 = vld [vmem:[#allocation4 + $0x8] sm:$0xff]
    %v109 = vld [vmem:[#allocation4 + $0x10] sm:$0xff]
    %v110 = vld [vmem:[#allocation4 + $0x18] sm:$0xff]
    %v111 = vld [vmem:[#allocation4 + $0x20] sm:$0xff]
    %v112 = vld [vmem:[#allocation4 + $0x28] sm:$0xff]
    %v113 = vld [vmem:[#allocation4 + $0x30] sm:$0xff]
    %v114 = vld [vmem:[#allocation4 + $0x38] sm:$0xff]
    %v115 = vld [vmem:[#allocation4 + $0x40] sm:$0xff]
    %v116 = vld [vmem:[#allocation4 + $0x48] sm:$0xff]
    %v117 = vld [vmem:[#allocation4 + $0x50] sm:$0xff]
    %v118 = vld [vmem:[#allocation4 + $0x58] sm:$0xff]
    %v119 = vld [vmem:[#allocation7] sm:$0x1]
    %v120 = vld [vmem:[#allocation7 + $0x1] sm:$0x1]
    %v121 = vld [vmem:[#allocation7 + $0x2] sm:$0x1]
    %v122 = vld [vmem:[#allocation7 + $0x3] sm:$0x1]
    %v123 = vld [vmem:[#allocation7 + $0x4] sm:$0x1]
    %v124 = vld [vmem:[#allocation7 + $0x5] sm:$0x1]
    %v125 = vld [vmem:[#allocation7 + $0x6] sm:$0x1]
    %v126 = vld [vmem:[#allocation7 + $0x7] sm:$0x1]
    %v127 = vlaneseq
    %v128 = vshrl.u32 %v127, 7
    %v129 = vsub.s32 0, %v128
    %v130 = vrot.slane %v119, %v129
    %vm131 = vcmask 261120
    %v133 = vsel %vm131, %v103, 0
    %v136 = vsel %vm131, %v104, 0
    %138 = vmatprep.subr.mxu0 0.0
    %139 = vmatpush1.msra.mxu0 %v107
    %140 = vmatprep.subr.mxu0 0.0
    %141 = vmatpush1.msra.mxu0 %v108
    %142 = vmatprep.subr.mxu0 0.0
    %143 = vmatpush1.msra.mxu0 %v109
    %144 = vmatprep.subr.mxu0 0.0
    %145 = vmatpush1.msra.mxu0 %v110
    %146 = vmatprep.subr.mxu0 0.0
    %147 = vmatpush1.msra.mxu0 0.0
    %148 = vmatprep.subr.mxu0 0.0
    %149 = vmatpush1.msra.mxu0 0.0
    %150 = vmatprep.subr.mxu0 0.0
    %151 = vmatpush1.msra.mxu0 0.0
    %152 = vmatprep.subr.mxu0 0.0
    %153 = vmatpush1.msra.mxu0 0.0
    %154 = vmatprep.subr.mxu0 0.0
    %155 = vmatpush1.msra.mxu0 0.0
    %156 = vmatprep.subr.mxu0 0.0
    %157 = vmatpush1.msra.mxu0 0.0
    %158 = vmatprep.subr.mxu0 0.0
    %159 = vmatpush1.msra.mxu0 0.0
    %160 = vmatprep.subr.mxu0 0.0
    %161 = vmatpush1.msra.mxu0 0.0
    %162 = vmatprep.subr.mxu0 0.0
    %163 = vmatpush1.msra.mxu0 0.0
    %164 = vmatprep.subr.mxu0 0.0
    %165 = vmatpush1.msra.mxu0 0.0
    %166 = vmatprep.subr.mxu0 0.0
    %167 = vmatpush1.msra.mxu0 0.0
    %168 = vmatprep.subr.mxu0 0.0
    %169 = vmatpush1.msra.mxu0 0.0
    %170 = vmatprep.subr.mxu0 0.0
    %171 = vmatpush1.msra.mxu0 0.0
    %172 = vmatprep.subr.mxu0 0.0
    %173 = vmatpush1.msra.mxu0 0.0
    %174 = vmatprep.subr.mxu0 0.0
    %175 = vmatpush1.msra.mxu0 0.0
    %176 = vmatprep.subr.mxu0 0.0
    %177 = vmatpush1.msra.mxu0 0.0
    %178 = vmatprep.subr.mxu0 0.0
    %179 = vmatpush1.msra.mxu0 0.0
    %180 = vmatprep.subr.mxu0 0.0
    %181 = vmatpush1.msra.mxu0 0.0
    %182 = vmatprep.subr.mxu0 0.0
    %183 = vmatpush1.msra.mxu0 0.0
    %184 = vmatprep.subr.mxu0 0.0
    %185 = vmatpush1.msra.mxu0 0.0
    %186 = vmatprep.subr.mxu0 0.0
    %187 = vmatpush1.msra.mxu0 0.0
    %188 = vmatprep.subr.mxu0 0.0
    %189 = vmatpush1.msra.mxu0 0.0
    %190 = vmatprep.subr.mxu0 0.0
    %191 = vmatpush1.msra.mxu0 0.0
    %192 = vmatprep.subr.mxu0 0.0
    %193 = vmatpush1.msra.mxu0 0.0
    %194 = vmatprep.subr.mxu0 0.0
    %195 = vmatpush1.msra.mxu0 0.0
    %196 = vmatprep.subr.mxu0 0.0
    %197 = vmatpush1.msra.mxu0 0.0
    %198 = vmatprep.subr.mxu0 0.0
    %199 = vmatpush1.msra.mxu0 0.0
    %200 = vmatprep.subr.mxu0 0.0
    %201 = vmatpush1.msra.mxu0 0.0
    %202 = vmatprep.mubr.f32.mxu0 0.0
    %203 = vmatmul.mubr.f32.gmra.mrb[0].mxu0 %v133
    %v204 = vpop.f32.mrb[0].mxu0
    %v205 = vadd.f32 %v130, %v204
    %v206 = vpop.f32.mrb[0].mxu0
    %207 = vmatprep.mubr.f32.mxu0 0.0
    %208 = vmatmul.mubr.f32.gmra.mrb[0].mxu0 %v136
    %v209 = vpop.f32.mrb[0].mxu0
    %v210 = vadd.f32 %v130, %v209
    %v211 = vpop.f32.mrb[0].mxu0
    %212 = vdwg.mxu0
    %215 = vrot.lane.b32.xlu0 %v205, 96
    %v216 = vpop.permute.xlu0 %215
    %217 = vrot.lane.b32.xlu0 %v210, 96
    %v218 = vpop.permute.xlu0 %217
    %vm219 = vcmask 64512
    %v220 = vsel %vm219, %v205, 0
    %v222 = vsel %vm219, %v210, 0
    %v224 = vsel %vm219, %v216, 0
    %v226 = vsel %vm219, %v218, 0
    %228 = vmatprep.subr.mxu0 0.0
    %229 = vmatpush1.xpose.msra.mxu0 %v224
    %230 = vmatprep.subr.mxu0 0.0
    %231 = vmatpush1.xpose.msra.mxu0 %v226
    %232 = vmatprep.subr.mxu0 0.0
    %233 = vmatpush1.xpose.msra.mxu0 0.0
    %234 = vmatprep.subr.mxu0 0.0
    %235 = vmatpush1.xpose.msra.mxu0 0.0
    %236 = vmatprep.subr.mxu0 0.0
    %237 = vmatpush1.xpose.msra.mxu0 0.0
    %238 = vmatprep.subr.mxu0 0.0
    %239 = vmatpush1.xpose.msra.mxu0 0.0
    %240 = vmatprep.subr.mxu0 0.0
    %241 = vmatpush1.xpose.msra.mxu0 0.0
    %242 = vmatprep.subr.mxu0 0.0
    %243 = vmatpush1.xpose.msra.mxu0 0.0
    %244 = vmatprep.subr.mxu0 0.0
    %245 = vmatpush1.xpose.msra.mxu0 0.0
    %246 = vmatprep.subr.mxu0 0.0
    %247 = vmatpush1.xpose.msra.mxu0 0.0
    %248 = vmatprep.subr.mxu0 0.0
    %249 = vmatpush1.xpose.msra.mxu0 0.0
    %250 = vmatprep.subr.mxu0 0.0
    %251 = vmatpush1.xpose.msra.mxu0 0.0
    %252 = vmatprep.subr.mxu0 0.0
    %253 = vmatpush1.xpose.msra.mxu0 0.0
    %254 = vmatprep.subr.mxu0 0.0
    %255 = vmatpush1.xpose.msra.mxu0 0.0
    %256 = vmatprep.subr.mxu0 0.0
    %257 = vmatpush1.xpose.msra.mxu0 0.0
    %258 = vmatprep.subr.mxu0 0.0
    %259 = vmatpush1.xpose.msra.mxu0 0.0
    %260 = vmatprep.subr.mxu0 0.0
    %261 = vmatpush1.xpose.msra.mxu0 0.0
    %262 = vmatprep.subr.mxu0 0.0
    %263 = vmatpush1.xpose.msra.mxu0 0.0
    %264 = vmatprep.subr.mxu0 0.0
    %265 = vmatpush1.xpose.msra.mxu0 0.0
    %266 = vmatprep.subr.mxu0 0.0
    %267 = vmatpush1.xpose.msra.mxu0 0.0
    %268 = vmatprep.subr.mxu0 0.0
    %269 = vmatpush1.xpose.msra.mxu0 0.0
    %270 = vmatprep.subr.mxu0 0.0
    %271 = vmatpush1.xpose.msra.mxu0 0.0
    %272 = vmatprep.subr.mxu0 0.0
    %273 = vmatpush1.xpose.msra.mxu0 0.0
    %274 = vmatprep.subr.mxu0 0.0
    %275 = vmatpush1.xpose.msra.mxu0 0.0
    %276 = vmatprep.subr.mxu0 0.0
    %277 = vmatpush1.xpose.msra.mxu0 0.0
    %278 = vmatprep.subr.mxu0 0.0
    %279 = vmatpush1.xpose.msra.mxu0 0.0
    %280 = vmatprep.subr.mxu0 0.0
    %281 = vmatpush1.xpose.msra.mxu0 0.0
    %282 = vmatprep.subr.mxu0 0.0
    %283 = vmatpush1.xpose.msra.mxu0 0.0
    %284 = vmatprep.subr.mxu0 0.0
    %285 = vmatpush1.xpose.msra.mxu0 0.0
    %286 = vmatprep.subr.mxu0 0.0
    %287 = vmatpush1.xpose.msra.mxu0 0.0
    %288 = vmatprep.subr.mxu0 0.0
    %289 = vmatpush1.xpose.msra.mxu0 0.0
    %290 = vmatprep.subr.mxu0 0.0
    %291 = vmatpush1.xpose.msra.mxu0 0.0
    %292 = vmatprep.mubr.f32.mxu0 0.0
    %293 = vmatmul.mubr.f32.gmra.mrb[0].mxu0 %v220
    %v294 = vpop.f32.mrb[0].mxu0
    %v295 = vadd.f32 %v105, %v294
    %v296 = vpop.f32.mrb[0].mxu0
    %297 = vmatprep.mubr.f32.mxu0 0.0
    %298 = vmatmul.mubr.f32.gmra.mrb[0].mxu0 %v222
    %v299 = vpop.f32.mrb[0].mxu0
    %v300 = vadd.f32 %v106, %v299
    %v301 = vpop.f32.mrb[0].mxu0
    %302 = vdwg.mxu0
    %vm303 = vcmask 130048
    %v304 = vsel %vm303, %v295, -inf
    %305 = vmax.xlane.f32.xlu0 %v304
    %v306 = vpop.xlane.xlu0 %305
    %v307 = vsel %vm303, %v300, -inf
    %308 = vmax.xlane.f32.xlu0 %v307
    %v309 = vpop.xlane.xlu0 %308
    %v310 = vsub.f32 %v295, %v306
    %v311 = vsub.f32 %v300, %v309
    %v312 = vmul.f32 %v310, 1.442695
    %v313 = vpow.pop %v312
    %v314 = vmul.f32 %v311, 1.442695
    %v315 = vpow.pop %v314
    %v316 = vsel %vm303, %v313, 0.0
    %317 = vadd.xlane.f32.xlu0 %v316
    %v318 = vpop.xlane.xlu0 %317
    %v319 = vsel %vm303, %v315, 0.0
    %320 = vadd.xlane.f32.xlu0 %v319
    %v321 = vpop.xlane.xlu0 %320
    %v322 = vrcp.pop %v318
    %v323 = vrcp.pop %v321
    %v324 = vmul.f32 %v313, %v322
    %v325 = vmul.f32 %v315, %v323
    %326 = vrot.lane.b32.xlu0 %v205, 64
    %v327 = vpop.permute.xlu0 %326
    %328 = vrot.lane.b32.xlu0 %v210, 64
    %v329 = vpop.permute.xlu0 %328
    %v333 = vsel %vm303, %v324, 0
    %v336 = vsel %vm303, %v325, 0
    %338 = vmatprep.subr.mxu0 0.0
    %339 = vmatpush1.msra.mxu0 %v327
    %340 = vmatprep.subr.mxu0 0.0
    %341 = vmatpush1.msra.mxu0 %v329
    %342 = vmatprep.subr.mxu0 0.0
    %343 = vmatpush1.msra.mxu0 0.0
    %344 = vmatprep.subr.mxu0 0.0
    %345 = vmatpush1.msra.mxu0 0.0
    %346 = vmatprep.subr.mxu0 0.0
    %347 = vmatpush1.msra.mxu0 0.0
    %348 = vmatprep.subr.mxu0 0.0
    %349 = vmatpush1.msra.mxu0 0.0
    %350 = vmatprep.subr.mxu0 0.0
    %351 = vmatpush1.msra.mxu0 0.0
    %352 = vmatprep.subr.mxu0 0.0
    %353 = vmatpush1.msra.mxu0 0.0
    %354 = vmatprep.subr.mxu0 0.0
    %355 = vmatpush1.msra.mxu0 0.0
    %356 = vmatprep.subr.mxu0 0.0
    %357 = vmatpush1.msra.mxu0 0.0
    %358 = vmatprep.subr.mxu0 0.0
    %359 = vmatpush1.msra.mxu0 0.0
    %360 = vmatprep.subr.mxu0 0.0
    %361 = vmatpush1.msra.mxu0 0.0
    %362 = vmatprep.subr.mxu0 0.0
    %363 = vmatpush1.msra.mxu0 0.0
    %364 = vmatprep.subr.mxu0 0.0
    %365 = vmatpush1.msra.mxu0 0.0
    %366 = vmatprep.subr.mxu0 0.0
    %367 = vmatpush1.msra.mxu0 0.0
    %368 = vmatprep.subr.mxu0 0.0
    %369 = vmatpush1.msra.mxu0 0.0
    %370 = vmatprep.subr.mxu0 0.0
    %371 = vmatpush1.msra.mxu0 0.0
    %372 = vmatprep.subr.mxu0 0.0
    %373 = vmatpush1.msra.mxu0 0.0
    %374 = vmatprep.subr.mxu0 0.0
    %375 = vmatpush1.msra.mxu0 0.0
    %376 = vmatprep.subr.mxu0 0.0
    %377 = vmatpush1.msra.mxu0 0.0
    %378 = vmatprep.subr.mxu0 0.0
    %379 = vmatpush1.msra.mxu0 0.0
    %380 = vmatprep.subr.mxu0 0.0
    %381 = vmatpush1.msra.mxu0 0.0
    %382 = vmatprep.subr.mxu0 0.0
    %383 = vmatpush1.msra.mxu0 0.0
    %384 = vmatprep.subr.mxu0 0.0
    %385 = vmatpush1.msra.mxu0 0.0
    %386 = vmatprep.subr.mxu0 0.0
    %387 = vmatpush1.msra.mxu0 0.0
    %388 = vmatprep.subr.mxu0 0.0
    %389 = vmatpush1.msra.mxu0 0.0
    %390 = vmatprep.subr.mxu0 0.0
    %391 = vmatpush1.msra.mxu0 0.0
    %392 = vmatprep.subr.mxu0 0.0
    %393 = vmatpush1.msra.mxu0 0.0
    %394 = vmatprep.subr.mxu0 0.0
    %395 = vmatpush1.msra.mxu0 0.0
    %396 = vmatprep.subr.mxu0 0.0
    %397 = vmatpush1.msra.mxu0 0.0
    %398 = vmatprep.subr.mxu0 0.0
    %399 = vmatpush1.msra.mxu0 0.0
    %400 = vmatprep.subr.mxu0 0.0
    %401 = vmatpush1.msra.mxu0 0.0
    %402 = vmatprep.mubr.f32.mxu0 0.0
    %403 = vmatmul.mubr.f32.gmra.mrb[0].mxu0 %v333
    %v404 = vpop.f32.mrb[0].mxu0
    %v405 = vadd.f32 0.0, %v404
    %v406 = vpop.f32.mrb[0].mxu0
    %407 = vmatprep.mubr.f32.mxu0 0.0
    %408 = vmatmul.mubr.f32.gmra.mrb[0].mxu0 %v336
    %v409 = vpop.f32.mrb[0].mxu0
    %v410 = vadd.f32 0.0, %v409
    %v411 = vpop.f32.mrb[0].mxu0
    %412 = vdwg.mxu0
    %413 = vst.msk [vmem:[#allocation3] sm:$0xff] %vm219, %v405
    %414 = vst.msk [vmem:[#allocation3 + $0x8] sm:$0xff] %vm219, %v410
    %415 = vrot.lane.b32.xlu0 %v205, 120
    %v416 = vpop.permute.xlu0 %415
    %417 = vrot.lane.b32.xlu0 %v210, 120
    %v418 = vpop.permute.xlu0 %417
    %419 = vrot.lane.b32.xlu0 %v205, 88
    %v420 = vpop.permute.xlu0 %419
    %421 = vrot.lane.b32.xlu0 %v210, 88
    %v422 = vpop.permute.xlu0 %421
    %v423 = vsel %vm219, %v416, 0
    %v425 = vsel %vm219, %v418, 0
    %v427 = vsel %vm219, %v420, 0
    %v429 = vsel %vm219, %v422, 0
    %431 = vmatprep.subr.mxu0 0.0
    %432 = vmatpush1.xpose.msra.mxu0 %v427
    %433 = vmatprep.subr.mxu0 0.0
    %434 = vmatpush1.xpose.msra.mxu0 %v429
    %435 = vmatprep.subr.mxu0 0.0
    %436 = vmatpush1.xpose.msra.mxu0 0.0
    %437 = vmatprep.subr.mxu0 0.0
    %438 = vmatpush1.xpose.msra.mxu0 0.0
    %439 = vmatprep.subr.mxu0 0.0
    %440 = vmatpush1.xpose.msra.mxu0 0.0
    %441 = vmatprep.subr.mxu0 0.0
    %442 = vmatpush1.xpose.msra.mxu0 0.0
    %443 = vmatprep.subr.mxu0 0.0
    %444 = vmatpush1.xpose.msra.mxu0 0.0
    %445 = vmatprep.subr.mxu0 0.0
    %446 = vmatpush1.xpose.msra.mxu0 0.0
    %447 = vmatprep.subr.mxu0 0.0
    %448 = vmatpush1.xpose.msra.mxu0 0.0
    %449 = vmatprep.subr.mxu0 0.0
    %450 = vmatpush1.xpose.msra.mxu0 0.0
    %451 = vmatprep.subr.mxu0 0.0
    %452 = vmatpush1.xpose.msra.mxu0 0.0
    %453 = vmatprep.subr.mxu0 0.0
    %454 = vmatpush1.xpose.msra.mxu0 0.0
    %455 = vmatprep.subr.mxu0 0.0
    %456 = vmatpush1.xpose.msra.mxu0 0.0
    %457 = vmatprep.subr.mxu0 0.0
    %458 = vmatpush1.xpose.msra.mxu0 0.0
    %459 = vmatprep.subr.mxu0 0.0
    %460 = vmatpush1.xpose.msra.mxu0 0.0
    %461 = vmatprep.subr.mxu0 0.0
    %462 = vmatpush1.xpose.msra.mxu0 0.0
    %463 = vmatprep.subr.mxu0 0.0
    %464 = vmatpush1.xpose.msra.mxu0 0.0
    %465 = vmatprep.subr.mxu0 0.0
    %466 = vmatpush1.xpose.msra.mxu0 0.0
    %467 = vmatprep.subr.mxu0 0.0
    %468 = vmatpush1.xpose.msra.mxu0 0.0
    %469 = vmatprep.subr.mxu0 0.0
    %470 = vmatpush1.xpose.msra.mxu0 0.0
    %471 = vmatprep.subr.mxu0 0.0
    %472 = vmatpush1.xpose.msra.mxu0 0.0
    %473 = vmatprep.subr.mxu0 0.0
    %474 = vmatpush1.xpose.msra.mxu0 0.0
    %475 = vmatprep.subr.mxu0 0.0
    %476 = vmatpush1.xpose.msra.mxu0 0.0
    %477 = vmatprep.subr.mxu0 0.0
    %478 = vmatpush1.xpose.msra.mxu0 0.0
    %479 = vmatprep.subr.mxu0 0.0
    %480 = vmatpush1.xpose.msra.mxu0 0.0
    %481 = vmatprep.subr.mxu0 0.0
    %482 = vmatpush1.xpose.msra.mxu0 0.0
    %483 = vmatprep.subr.mxu0 0.0
    %484 = vmatpush1.xpose.msra.mxu0 0.0
    %485 = vmatprep.subr.mxu0 0.0
    %486 = vmatpush1.xpose.msra.mxu0 0.0
    %487 = vmatprep.subr.mxu0 0.0
    %488 = vmatpush1.xpose.msra.mxu0 0.0
    %489 = vmatprep.subr.mxu0 0.0
    %490 = vmatpush1.xpose.msra.mxu0 0.0
    %491 = vmatprep.subr.mxu0 0.0
    %492 = vmatpush1.xpose.msra.mxu0 0.0
    %493 = vmatprep.subr.mxu0 0.0
    %494 = vmatpush1.xpose.msra.mxu0 0.0
    %495 = vmatprep.mubr.f32.mxu0 0.0
    %496 = vmatmul.mubr.f32.gmra.mrb[0].mxu0 %v423
    %v497 = vpop.f32.mrb[0].mxu0
    %v498 = vadd.f32 %v105, %v497
    %v499 = vpop.f32.mrb[0].mxu0
    %500 = vmatprep.mubr.f32.mxu0 0.0
    %501 = vmatmul.mubr.f32.gmra.mrb[0].mxu0 %v425
    %v502 = vpop.f32.mrb[0].mxu0
    %v503 = vadd.f32 %v106, %v502
    %v504 = vpop.f32.mrb[0].mxu0
    %505 = vdwg.mxu0
    %v506 = vsel %vm303, %v498, -inf
    %507 = vmax.xlane.f32.xlu0 %v506
    %v508 = vpop.xlane.xlu0 %507
    %v509 = vsel %vm303, %v503, -inf
    %510 = vmax.xlane.f32.xlu0 %v509
    %v511 = vpop.xlane.xlu0 %510
    %v512 = vsub.f32 %v498, %v508
    %v513 = vsub.f32 %v503, %v511
    %v514 = vmul.f32 %v512, 1.442695
    %v515 = vpow.pop %v514
    %v516 = vmul.f32 %v513, 1.442695
    %v517 = vpow.pop %v516
    %v518 = vsel %vm303, %v515, 0.0
    %519 = vadd.xlane.f32.xlu0 %v518
    %v520 = vpop.xlane.xlu0 %519
    %v521 = vsel %vm303, %v517, 0.0
    %522 = vadd.xlane.f32.xlu0 %v521
    %v523 = vpop.xlane.xlu0 %522
    %v524 = vrcp.pop %v520
    %v525 = vrcp.pop %v523
    %v526 = vmul.f32 %v515, %v524
    %v527 = vmul.f32 %v517, %v525
    %528 = vrot.lane.b32.xlu0 %v205, 56
    %v529 = vpop.permute.xlu0 %528
    %530 = vrot.lane.b32.xlu0 %v210, 56
    %v531 = vpop.permute.xlu0 %530
    %v535 = vsel %vm303, %v526, 0
    %v538 = vsel %vm303, %v527, 0
    %540 = vmatprep.subr.mxu0 0.0
    %541 = vmatpush1.msra.mxu0 %v529
    %542 = vmatprep.subr.mxu0 0.0
    %543 = vmatpush1.msra.mxu0 %v531
    %544 = vmatprep.subr.mxu0 0.0
    %545 = vmatpush1.msra.mxu0 0.0
    %546 = vmatprep.subr.mxu0 0.0
    %547 = vmatpush1.msra.mxu0 0.0
    %548 = vmatprep.subr.mxu0 0.0
    %549 = vmatpush1.msra.mxu0 0.0
    %550 = vmatprep.subr.mxu0 0.0
    %551 = vmatpush1.msra.mxu0 0.0
    %552 = vmatprep.subr.mxu0 0.0
    %553 = vmatpush1.msra.mxu0 0.0
    %554 = vmatprep.subr.mxu0 0.0
    %555 = vmatpush1.msra.mxu0 0.0
    %556 = vmatprep.subr.mxu0 0.0
    %557 = vmatpush1.msra.mxu0 0.0
    %558 = vmatprep.subr.mxu0 0.0
    %559 = vmatpush1.msra.mxu0 0.0
    %560 = vmatprep.subr.mxu0 0.0
    %561 = vmatpush1.msra.mxu0 0.0
    %562 = vmatprep.subr.mxu0 0.0
    %563 = vmatpush1.msra.mxu0 0.0
    %564 = vmatprep.subr.mxu0 0.0
    %565 = vmatpush1.msra.mxu0 0.0
    %566 = vmatprep.subr.mxu0 0.0
    %567 = vmatpush1.msra.mxu0 0.0
    %568 = vmatprep.subr.mxu0 0.0
    %569 = vmatpush1.msra.mxu0 0.0
    %570 = vmatprep.subr.mxu0 0.0
    %571 = vmatpush1.msra.mxu0 0.0
    %572 = vmatprep.subr.mxu0 0.0
    %573 = vmatpush1.msra.mxu0 0.0
    %574 = vmatprep.subr.mxu0 0.0
    %575 = vmatpush1.msra.mxu0 0.0
    %576 = vmatprep.subr.mxu0 0.0
    %577 = vmatpush1.msra.mxu0 0.0
    %578 = vmatprep.subr.mxu0 0.0
    %579 = vmatpush1.msra.mxu0 0.0
    %580 = vmatprep.subr.mxu0 0.0
    %581 = vmatpush1.msra.mxu0 0.0
    %582 = vmatprep.subr.mxu0 0.0
    %583 = vmatpush1.msra.mxu0 0.0
    %584 = vmatprep.subr.mxu0 0.0
    %585 = vmatpush1.msra.mxu0 0.0
    %586 = vmatprep.subr.mxu0 0.0
    %587 = vmatpush1.msra.mxu0 0.0
    %588 = vmatprep.subr.mxu0 0.0
    %589 = vmatpush1.msra.mxu0 0.0
    %590 = vmatprep.subr.mxu0 0.0
    %591 = vmatpush1.msra.mxu0 0.0
    %592 = vmatprep.subr.mxu0 0.0
    %593 = vmatpush1.msra.mxu0 0.0
    %594 = vmatprep.subr.mxu0 0.0
    %595 = vmatpush1.msra.mxu0 0.0
    %596 = vmatprep.subr.mxu0 0.0
    %597 = vmatpush1.msra.mxu0 0.0
    %598 = vmatprep.subr.mxu0 0.0
    %599 = vmatpush1.msra.mxu0 0.0
    %600 = vmatprep.subr.mxu0 0.0
    %601 = vmatpush1.msra.mxu0 0.0
    %602 = vmatprep.subr.mxu0 0.0
    %603 = vmatpush1.msra.mxu0 0.0
    %604 = vmatprep.mubr.f32.mxu0 0.0
    %605 = vmatmul.mubr.f32.gmra.mrb[0].mxu0 %v535
    %v606 = vpop.f32.mrb[0].mxu0
    %v607 = vadd.f32 0.0, %v606
    %v608 = vpop.f32.mrb[0].mxu0
    %609 = vmatprep.mubr.f32.mxu0 0.0
    %610 = vmatmul.mubr.f32.gmra.mrb[0].mxu0 %v538
    %v611 = vpop.f32.mrb[0].mxu0
    %v612 = vadd.f32 0.0, %v611
    %v613 = vpop.f32.mrb[0].mxu0
    %614 = vdwg.mxu0
    %617 = vrot.lane.b32.xlu0 %v607, 8
    %v618 = vpop.permute.xlu0 %617
    %619 = vrot.lane.b32.xlu0 %v612, 8
    %v620 = vpop.permute.xlu0 %619
    %vm623 = vcmask 130112
    %624 = vst.msk [vmem:[#allocation3] sm:$0xff] %vm623, %v618
    %625 = vst.msk [vmem:[#allocation3 + $0x8] sm:$0xff] %vm623, %v620
    %626 = vrot.lane.b32.xlu0 %v205, 112
    %v627 = vpop.permute.xlu0 %626
    %628 = vrot.lane.b32.xlu0 %v210, 112
    %v629 = vpop.permute.xlu0 %628
    %630 = vrot.lane.b32.xlu0 %v205, 80
    %v631 = vpop.permute.xlu0 %630
    %632 = vrot.lane.b32.xlu0 %v210, 80
    %v633 = vpop.permute.xlu0 %632
    %v634 = vsel %vm219, %v627, 0
    %v636 = vsel %vm219, %v629, 0
    %v638 = vsel %vm219, %v631, 0
    %v640 = vsel %vm219, %v633, 0
    %642 = vmatprep.subr.mxu0 0.0
    %643 = vmatpush1.xpose.msra.mxu0 %v638
    %644 = vmatprep.subr.mxu0 0.0
    %645 = vmatpush1.xpose.msra.mxu0 %v640
    %646 = vmatprep.subr.mxu0 0.0
    %647 = vmatpush1.xpose.msra.mxu0 0.0
    %648 = vmatprep.subr.mxu0 0.0
    %649 = vmatpush1.xpose.msra.mxu0 0.0
    %650 = vmatprep.subr.mxu0 0.0
    %651 = vmatpush1.xpose.msra.mxu0 0.0
    %652 = vmatprep.subr.mxu0 0.0
    %653 = vmatpush1.xpose.msra.mxu0 0.0
    %654 = vmatprep.subr.mxu0 0.0
    %655 = vmatpush1.xpose.msra.mxu0 0.0
    %656 = vmatprep.subr.mxu0 0.0
    %657 = vmatpush1.xpose.msra.mxu0 0.0
    %658 = vmatprep.subr.mxu0 0.0
    %659 = vmatpush1.xpose.msra.mxu0 0.0
    %660 = vmatprep.subr.mxu0 0.0
    %661 = vmatpush1.xpose.msra.mxu0 0.0
    %662 = vmatprep.subr.mxu0 0.0
    %663 = vmatpush1.xpose.msra.mxu0 0.0
    %664 = vmatprep.subr.mxu0 0.0
    %665 = vmatpush1.xpose.msra.mxu0 0.0
    %666 = vmatprep.subr.mxu0 0.0
    %667 = vmatpush1.xpose.msra.mxu0 0.0
    %668 = vmatprep.subr.mxu0 0.0
    %669 = vmatpush1.xpose.msra.mxu0 0.0
    %670 = vmatprep.subr.mxu0 0.0
    %671 = vmatpush1.xpose.msra.mxu0 0.0
    %672 = vmatprep.subr.mxu0 0.0
    %673 = vmatpush1.xpose.msra.mxu0 0.0
    %674 = vmatprep.subr.mxu0 0.0
    %675 = vmatpush1.xpose.msra.mxu0 0.0
    %676 = vmatprep.subr.mxu0 0.0
    %677 = vmatpush1.xpose.msra.mxu0 0.0
    %678 = vmatprep.subr.mxu0 0.0
    %679 = vmatpush1.xpose.msra.mxu0 0.0
    %680 = vmatprep.subr.mxu0 0.0
    %681 = vmatpush1.xpose.msra.mxu0 0.0
    %682 = vmatprep.subr.mxu0 0.0
    %683 = vmatpush1.xpose.msra.mxu0 0.0
    %684 = vmatprep.subr.mxu0 0.0
    %685 = vmatpush1.xpose.msra.mxu0 0.0
    %686 = vmatprep.subr.mxu0 0.0
    %687 = vmatpush1.xpose.msra.mxu0 0.0
    %688 = vmatprep.subr.mxu0 0.0
    %689 = vmatpush1.xpose.msra.mxu0 0.0
    %690 = vmatprep.subr.mxu0 0.0
    %691 = vmatpush1.xpose.msra.mxu0 0.0
    %692 = vmatprep.subr.mxu0 0.0
    %693 = vmatpush1.xpose.msra.mxu0 0.0
    %694 = vmatprep.subr.mxu0 0.0
    %695 = vmatpush1.xpose.msra.mxu0 0.0
    %696 = vmatprep.subr.mxu0 0.0
    %697 = vmatpush1.xpose.msra.mxu0 0.0
    %698 = vmatprep.subr.mxu0 0.0
    %699 = vmatpush1.xpose.msra.mxu0 0.0
    %700 = vmatprep.subr.mxu0 0.0
    %701 = vmatpush1.xpose.msra.mxu0 0.0
    %702 = vmatprep.subr.mxu0 0.0
    %703 = vmatpush1.xpose.msra.mxu0 0.0
    %704 = vmatprep.subr.mxu0 0.0
    %705 = vmatpush1.xpose.msra.mxu0 0.0
    %706 = vmatprep.mubr.f32.mxu0 0.0
    %707 = vmatmul.mubr.f32.gmra.mrb[0].mxu0 %v634
    %v708 = vpop.f32.mrb[0].mxu0
    %v709 = vadd.f32 %v105, %v708
    %v710 = vpop.f32.mrb[0].mxu0
    %711 = vmatprep.mubr.f32.mxu0 0.0
    %712 = vmatmul.mubr.f32.gmra.mrb[0].mxu0 %v636
    %v713 = vpop.f32.mrb[0].mxu0
    %v714 = vadd.f32 %v106, %v713
    %v715 = vpop.f32.mrb[0].mxu0
    %716 = vdwg.mxu0
    %v717 = vsel %vm303, %v709, -inf
    %718 = vmax.xlane.f32.xlu0 %v717
    %v719 = vpop.xlane.xlu0 %718
    %v720 = vsel %vm303, %v714, -inf
    %721 = vmax.xlane.f32.xlu0 %v720
    %v722 = vpop.xlane.xlu0 %721
    %v723 = vsub.f32 %v709, %v719
    %v724 = vsub.f32 %v714, %v722
    %v725 = vmul.f32 %v723, 1.442695
    %v726 = vpow.pop %v725
    %v727 = vmul.f32 %v724, 1.442695
    %v728 = vpow.pop %v727
    %v729 = vsel %vm303, %v726, 0.0
    %730 = vadd.xlane.f32.xlu0 %v729
    %v731 = vpop.xlane.xlu0 %730
    %v732 = vsel %vm303, %v728, 0.0
    %733 = vadd.xlane.f32.xlu0 %v732
    %v734 = vpop.xlane.xlu0 %733
    %v735 = vrcp.pop %v731
    %v736 = vrcp.pop %v734
    %v737 = vmul.f32 %v726, %v735
    %v738 = vmul.f32 %v728, %v736
    %739 = vrot.lane.b32.xlu0 %v205, 48
    %v740 = vpop.permute.xlu0 %739
    %741 = vrot.lane.b32.xlu0 %v210, 48
    %v742 = vpop.permute.xlu0 %741
    %v746 = vsel %vm303, %v737, 0
    %v749 = vsel %vm303, %v738, 0
    %751 = vmatprep.subr.mxu0 0.0
    %752 = vmatpush1.msra.mxu0 %v740
    %753 = vmatprep.subr.mxu0 0.0
    %754 = vmatpush1.msra.mxu0 %v742
    %755 = vmatprep.subr.mxu0 0.0
    %756 = vmatpush1.msra.mxu0 0.0
    %757 = vmatprep.subr.mxu0 0.0
    %758 = vmatpush1.msra.mxu0 0.0
    %759 = vmatprep.subr.mxu0 0.0
    %760 = vmatpush1.msra.mxu0 0.0
    %761 = vmatprep.subr.mxu0 0.0
    %762 = vmatpush1.msra.mxu0 0.0
    %763 = vmatprep.subr.mxu0 0.0
    %764 = vmatpush1.msra.mxu0 0.0
    %765 = vmatprep.subr.mxu0 0.0
    %766 = vmatpush1.msra.mxu0 0.0
    %767 = vmatprep.subr.mxu0 0.0
    %768 = vmatpush1.msra.mxu0 0.0
    %769 = vmatprep.subr.mxu0 0.0
    %770 = vmatpush1.msra.mxu0 0.0
    %771 = vmatprep.subr.mxu0 0.0
    %772 = vmatpush1.msra.mxu0 0.0
    %773 = vmatprep.subr.mxu0 0.0
    %774 = vmatpush1.msra.mxu0 0.0
    %775 = vmatprep.subr.mxu0 0.0
    %776 = vmatpush1.msra.mxu0 0.0
    %777 = vmatprep.subr.mxu0 0.0
    %778 = vmatpush1.msra.mxu0 0.0
    %779 = vmatprep.subr.mxu0 0.0
    %780 = vmatpush1.msra.mxu0 0.0
    %781 = vmatprep.subr.mxu0 0.0
    %782 = vmatpush1.msra.mxu0 0.0
    %783 = vmatprep.subr.mxu0 0.0
    %784 = vmatpush1.msra.mxu0 0.0
    %785 = vmatprep.subr.mxu0 0.0
    %786 = vmatpush1.msra.mxu0 0.0
    %787 = vmatprep.subr.mxu0 0.0
    %788 = vmatpush1.msra.mxu0 0.0
    %789 = vmatprep.subr.mxu0 0.0
    %790 = vmatpush1.msra.mxu0 0.0
    %791 = vmatprep.subr.mxu0 0.0
    %792 = vmatpush1.msra.mxu0 0.0
    %793 = vmatprep.subr.mxu0 0.0
    %794 = vmatpush1.msra.mxu0 0.0
    %795 = vmatprep.subr.mxu0 0.0
    %796 = vmatpush1.msra.mxu0 0.0
    %797 = vmatprep.subr.mxu0 0.0
    %798 = vmatpush1.msra.mxu0 0.0
    %799 = vmatprep.subr.mxu0 0.0
    %800 = vmatpush1.msra.mxu0 0.0
    %801 = vmatprep.subr.mxu0 0.0
    %802 = vmatpush1.msra.mxu0 0.0
    %803 = vmatprep.subr.mxu0 0.0
    %804 = vmatpush1.msra.mxu0 0.0
    %805 = vmatprep.subr.mxu0 0.0
    %806 = vmatpush1.msra.mxu0 0.0
    %807 = vmatprep.subr.mxu0 0.0
    %808 = vmatpush1.msra.mxu0 0.0
    %809 = vmatprep.subr.mxu0 0.0
    %810 = vmatpush1.msra.mxu0 0.0
    %811 = vmatprep.subr.mxu0 0.0
    %812 = vmatpush1.msra.mxu0 0.0
    %813 = vmatprep.subr.mxu0 0.0
    %814 = vmatpush1.msra.mxu0 0.0
    %815 = vmatprep.mubr.f32.mxu0 0.0
    %816 = vmatmul.mubr.f32.gmra.mrb[0].mxu0 %v746
    %v817 = vpop.f32.mrb[0].mxu0
    %v818 = vadd.f32 0.0, %v817
    %v819 = vpop.f32.mrb[0].mxu0
    %820 = vmatprep.mubr.f32.mxu0 0.0
    %821 = vmatmul.mubr.f32.gmra.mrb[0].mxu0 %v749
    %v822 = vpop.f32.mrb[0].mxu0
    %v823 = vadd.f32 0.0, %v822
    %v824 = vpop.f32.mrb[0].mxu0
    %825 = vdwg.mxu0
    %828 = vrot.lane.b32.xlu0 %v818, 16
    %v829 = vpop.permute.xlu0 %828
    %830 = vrot.lane.b32.xlu0 %v823, 16
    %v831 = vpop.permute.xlu0 %830
    %vm834 = vcmask 195712
    %835 = vst.msk [vmem:[#allocation3] sm:$0xff] %vm834, %v829
    %836 = vst.msk [vmem:[#allocation3 + $0x8] sm:$0xff] %vm834, %v831
    %837 = vrot.lane.b32.xlu0 %v205, 104
    %v838 = vpop.permute.xlu0 %837
    %839 = vrot.lane.b32.xlu0 %v210, 104
    %v840 = vpop.permute.xlu0 %839
    %841 = vrot.lane.b32.xlu0 %v205, 72
    %v842 = vpop.permute.xlu0 %841
    %843 = vrot.lane.b32.xlu0 %v210, 72
    %v844 = vpop.permute.xlu0 %843
    %v845 = vsel %vm219, %v838, 0
    %v847 = vsel %vm219, %v840, 0
    %v849 = vsel %vm219, %v842, 0
    %v851 = vsel %vm219, %v844, 0
    %853 = vmatprep.subr.mxu0 0.0
    %854 = vmatpush1.xpose.msra.mxu0 %v849
    %855 = vmatprep.subr.mxu0 0.0
    %856 = vmatpush1.xpose.msra.mxu0 %v851
    %857 = vmatprep.subr.mxu0 0.0
    %858 = vmatpush1.xpose.msra.mxu0 0.0
    %859 = vmatprep.subr.mxu0 0.0
    %860 = vmatpush1.xpose.msra.mxu0 0.0
    %861 = vmatprep.subr.mxu0 0.0
    %862 = vmatpush1.xpose.msra.mxu0 0.0
    %863 = vmatprep.subr.mxu0 0.0
    %864 = vmatpush1.xpose.msra.mxu0 0.0
    %865 = vmatprep.subr.mxu0 0.0
    %866 = vmatpush1.xpose.msra.mxu0 0.0
    %867 = vmatprep.subr.mxu0 0.0
    %868 = vmatpush1.xpose.msra.mxu0 0.0
    %869 = vmatprep.subr.mxu0 0.0
    %870 = vmatpush1.xpose.msra.mxu0 0.0
    %871 = vmatprep.subr.mxu0 0.0
    %872 = vmatpush1.xpose.msra.mxu0 0.0
    %873 = vmatprep.subr.mxu0 0.0
    %874 = vmatpush1.xpose.msra.mxu0 0.0
    %875 = vmatprep.subr.mxu0 0.0
    %876 = vmatpush1.xpose.msra.mxu0 0.0
    %877 = vmatprep.subr.mxu0 0.0
    %878 = vmatpush1.xpose.msra.mxu0 0.0
    %879 = vmatprep.subr.mxu0 0.0
    %880 = vmatpush1.xpose.msra.mxu0 0.0
    %881 = vmatprep.subr.mxu0 0.0
    %882 = vmatpush1.xpose.msra.mxu0 0.0
    %883 = vmatprep.subr.mxu0 0.0
    %884 = vmatpush1.xpose.msra.mxu0 0.0
    %885 = vmatprep.subr.mxu0 0.0
    %886 = vmatpush1.xpose.msra.mxu0 0.0
    %887 = vmatprep.subr.mxu0 0.0
    %888 = vmatpush1.xpose.msra.mxu0 0.0
    %889 = vmatprep.subr.mxu0 0.0
    %890 = vmatpush1.xpose.msra.mxu0 0.0
    %891 = vmatprep.subr.mxu0 0.0
    %892 = vmatpush1.xpose.msra.mxu0 0.0
    %893 = vmatprep.subr.mxu0 0.0
    %894 = vmatpush1.xpose.msra.mxu0 0.0
    %895 = vmatprep.subr.mxu0 0.0
    %896 = vmatpush1.xpose.msra.mxu0 0.0
    %897 = vmatprep.subr.mxu0 0.0
    %898 = vmatpush1.xpose.msra.mxu0 0.0
    %899 = vmatprep.subr.mxu0 0.0
    %900 = vmatpush1.xpose.msra.mxu0 0.0
    %901 = vmatprep.subr.mxu0 0.0
    %902 = vmatpush1.xpose.msra.mxu0 0.0
    %903 = vmatprep.subr.mxu0 0.0
    %904 = vmatpush1.xpose.msra.mxu0 0.0
    %905 = vmatprep.subr.mxu0 0.0
    %906 = vmatpush1.xpose.msra.mxu0 0.0
    %907 = vmatprep.subr.mxu0 0.0
    %908 = vmatpush1.xpose.msra.mxu0 0.0
    %909 = vmatprep.subr.mxu0 0.0
    %910 = vmatpush1.xpose.msra.mxu0 0.0
    %911 = vmatprep.subr.mxu0 0.0
    %912 = vmatpush1.xpose.msra.mxu0 0.0
    %913 = vmatprep.subr.mxu0 0.0
    %914 = vmatpush1.xpose.msra.mxu0 0.0
    %915 = vmatprep.subr.mxu0 0.0
    %916 = vmatpush1.xpose.msra.mxu0 0.0
    %917 = vmatprep.mubr.f32.mxu0 0.0
    %918 = vmatmul.mubr.f32.gmra.mrb[0].mxu0 %v845
    %v919 = vpop.f32.mrb[0].mxu0
    %v920 = vadd.f32 %v105, %v919
    %v921 = vpop.f32.mrb[0].mxu0
    %922 = vmatprep.mubr.f32.mxu0 0.0
    %923 = vmatmul.mubr.f32.gmra.mrb[0].mxu0 %v847
    %v924 = vpop.f32.mrb[0].mxu0
    %v925 = vadd.f32 %v106, %v924
    %v926 = vpop.f32.mrb[0].mxu0
    %927 = vdwg.mxu0
    %v928 = vsel %vm303, %v920, -inf
    %929 = vmax.xlane.f32.xlu0 %v928
    %v930 = vpop.xlane.xlu0 %929
    %v931 = vsel %vm303, %v925, -inf
    %932 = vmax.xlane.f32.xlu0 %v931
    %v933 = vpop.xlane.xlu0 %932
    %v934 = vsub.f32 %v920, %v930
    %v935 = vsub.f32 %v925, %v933
    %v936 = vmul.f32 %v934, 1.442695
    %v937 = vpow.pop %v936
    %v938 = vmul.f32 %v935, 1.442695
    %v939 = vpow.pop %v938
    %v940 = vsel %vm303, %v937, 0.0
    %941 = vadd.xlane.f32.xlu0 %v940
    %v942 = vpop.xlane.xlu0 %941
    %v943 = vsel %vm303, %v939, 0.0
    %944 = vadd.xlane.f32.xlu0 %v943
    %v945 = vpop.xlane.xlu0 %944
    %v946 = vrcp.pop %v942
    %v947 = vrcp.pop %v945
    %v948 = vmul.f32 %v937, %v946
    %v949 = vmul.f32 %v939, %v947
    %950 = vrot.lane.b32.xlu0 %v205, 40
    %v951 = vpop.permute.xlu0 %950
    %952 = vrot.lane.b32.xlu0 %v210, 40
    %v953 = vpop.permute.xlu0 %952
    %v957 = vsel %vm303, %v948, 0
    %v960 = vsel %vm303, %v949, 0
    %962 = vmatprep.subr.mxu0 0.0
    %963 = vmatpush1.msra.mxu0 %v951
    %964 = vmatprep.subr.mxu0 0.0
    %965 = vmatpush1.msra.mxu0 %v953
    %966 = vmatprep.subr.mxu0 0.0
    %967 = vmatpush1.msra.mxu0 0.0
    %968 = vmatprep.subr.mxu0 0.0
    %969 = vmatpush1.msra.mxu0 0.0
    %970 = vmatprep.subr.mxu0 0.0
    %971 = vmatpush1.msra.mxu0 0.0
    %972 = vmatprep.subr.mxu0 0.0
    %973 = vmatpush1.msra.mxu0 0.0
    %974 = vmatprep.subr.mxu0 0.0
    %975 = vmatpush1.msra.mxu0 0.0
    %976 = vmatprep.subr.mxu0 0.0
    %977 = vmatpush1.msra.mxu0 0.0
    %978 = vmatprep.subr.mxu0 0.0
    %979 = vmatpush1.msra.mxu0 0.0
    %980 = vmatprep.subr.mxu0 0.0
    %981 = vmatpush1.msra.mxu0 0.0
    %982 = vmatprep.subr.mxu0 0.0
    %983 = vmatpush1.msra.mxu0 0.0
    %984 = vmatprep.subr.mxu0 0.0
    %985 = vmatpush1.msra.mxu0 0.0
    %986 = vmatprep.subr.mxu0 0.0
    %987 = vmatpush1.msra.mxu0 0.0
    %988 = vmatprep.subr.mxu0 0.0
    %989 = vmatpush1.msra.mxu0 0.0
    %990 = vmatprep.subr.mxu0 0.0
    %991 = vmatpush1.msra.mxu0 0.0
    %992 = vmatprep.subr.mxu0 0.0
    %993 = vmatpush1.msra.mxu0 0.0
    %994 = vmatprep.subr.mxu0 0.0
    %995 = vmatpush1.msra.mxu0 0.0
    %996 = vmatprep.subr.mxu0 0.0
    %997 = vmatpush1.msra.mxu0 0.0
    %998 = vmatprep.subr.mxu0 0.0
    %999 = vmatpush1.msra.mxu0 0.0
    %1000 = vmatprep.subr.mxu0 0.0
    %1001 = vmatpush1.msra.mxu0 0.0
    %1002 = vmatprep.subr.mxu0 0.0
    %1003 = vmatpush1.msra.mxu0 0.0
    %1004 = vmatprep.subr.mxu0 0.0
    %1005 = vmatpush1.msra.mxu0 0.0
    %1006 = vmatprep.subr.mxu0 0.0
    %1007 = vmatpush1.msra.mxu0 0.0
    %1008 = vmatprep.subr.mxu0 0.0
    %1009 = vmatpush1.msra.mxu0 0.0
    %1010 = vmatprep.subr.mxu0 0.0
    %1011 = vmatpush1.msra.mxu0 0.0
    %1012 = vmatprep.subr.mxu0 0.0
    %1013 = vmatpush1.msra.mxu0 0.0
    %1014 = vmatprep.subr.mxu0 0.0
    %1015 = vmatpush1.msra.mxu0 0.0
    %1016 = vmatprep.subr.mxu0 0.0
    %1017 = vmatpush1.msra.mxu0 0.0
    %1018 = vmatprep.subr.mxu0 0.0
    %1019 = vmatpush1.msra.mxu0 0.0
    %1020 = vmatprep.subr.mxu0 0.0
    %1021 = vmatpush1.msra.mxu0 0.0
    %1022 = vmatprep.subr.mxu0 0.0
    %1023 = vmatpush1.msra.mxu0 0.0
    %1024 = vmatprep.subr.mxu0 0.0
    %1025 = vmatpush1.msra.mxu0 0.0
    %1026 = vmatprep.mubr.f32.mxu0 0.0
    %1027 = vmatmul.mubr.f32.gmra.mrb[0].mxu0 %v957
    %v1028 = vpop.f32.mrb[0].mxu0
    %v1029 = vadd.f32 0.0, %v1028
    %v1030 = vpop.f32.mrb[0].mxu0
    %1031 = vmatprep.mubr.f32.mxu0 0.0
    %1032 = vmatmul.mubr.f32.gmra.mrb[0].mxu0 %v960
    %v1033 = vpop.f32.mrb[0].mxu0
    %v1034 = vadd.f32 0.0, %v1033
    %v1035 = vpop.f32.mrb[0].mxu0
    %1036 = vdwg.mxu0
    %1039 = vrot.lane.b32.xlu0 %v1029, 24
    %v1040 = vpop.permute.xlu0 %1039
    %1041 = vrot.lane.b32.xlu0 %v1034, 24
    %v1042 = vpop.permute.xlu0 %1041
    %vm1045 = vcmask 261312
    %1046 = vst.msk [vmem:[#allocation3] sm:$0xff] %vm1045, %v1040
    %1047 = vst.msk [vmem:[#allocation3 + $0x8] sm:$0xff] %vm1045, %v1042
    %v1048 = vld [vmem:[#allocation3] sm:$0xff]
    %v1049 = vld [vmem:[#allocation3 + $0x8] sm:$0xff]
    %1054 = vrot.lane.b32.xlu0 %v107, 32
    %v1055 = vpop.permute.xlu0 %1054
    %1056 = vrot.lane.b32.xlu0 %v108, 32
    %v1057 = vpop.permute.xlu0 %1056
    %1058 = vrot.lane.b32.xlu0 %v109, 32
    %v1059 = vpop.permute.xlu0 %1058
    %1060 = vrot.lane.b32.xlu0 %v110, 32
    %v1061 = vpop.permute.xlu0 %1060
    %v1067 = vsel %vm131, %v1048, 0
    %v1070 = vsel %vm131, %v1049, 0
    %1072 = vmatprep.subr.mxu0 0.0
    %1073 = vmatpush1.msra.mxu0 %v1055
    %1074 = vmatprep.subr.mxu0 0.0
    %1075 = vmatpush1.msra.mxu0 %v1057
    %1076 = vmatprep.subr.mxu0 0.0
    %1077 = vmatpush1.msra.mxu0 %v1059
    %1078 = vmatprep.subr.mxu0 0.0
    %1079 = vmatpush1.msra.mxu0 %v1061
    %1080 = vmatprep.subr.mxu0 0.0
    %1081 = vmatpush1.msra.mxu0 0.0
    %1082 = vmatprep.subr.mxu0 0.0
    %1083 = vmatpush1.msra.mxu0 0.0
    %1084 = vmatprep.subr.mxu0 0.0
    %1085 = vmatpush1.msra.mxu0 0.0
    %1086 = vmatprep.subr.mxu0 0.0
    %1087 = vmatpush1.msra.mxu0 0.0
    %1088 = vmatprep.subr.mxu0 0.0
    %1089 = vmatpush1.msra.mxu0 0.0
    %1090 = vmatprep.subr.mxu0 0.0
    %1091 = vmatpush1.msra.mxu0 0.0
    %1092 = vmatprep.subr.mxu0 0.0
    %1093 = vmatpush1.msra.mxu0 0.0
    %1094 = vmatprep.subr.mxu0 0.0
    %1095 = vmatpush1.msra.mxu0 0.0
    %1096 = vmatprep.subr.mxu0 0.0
    %1097 = vmatpush1.msra.mxu0 0.0
    %1098 = vmatprep.subr.mxu0 0.0
    %1099 = vmatpush1.msra.mxu0 0.0
    %1100 = vmatprep.subr.mxu0 0.0
    %1101 = vmatpush1.msra.mxu0 0.0
    %1102 = vmatprep.subr.mxu0 0.0
    %1103 = vmatpush1.msra.mxu0 0.0
    %1104 = vmatprep.subr.mxu0 0.0
    %1105 = vmatpush1.msra.mxu0 0.0
    %1106 = vmatprep.subr.mxu0 0.0
    %1107 = vmatpush1.msra.mxu0 0.0
    %1108 = vmatprep.subr.mxu0 0.0
    %1109 = vmatpush1.msra.mxu0 0.0
    %1110 = vmatprep.subr.mxu0 0.0
    %1111 = vmatpush1.msra.mxu0 0.0
    %1112 = vmatprep.subr.mxu0 0.0
    %1113 = vmatpush1.msra.mxu0 0.0
    %1114 = vmatprep.subr.mxu0 0.0
    %1115 = vmatpush1.msra.mxu0 0.0
    %1116 = vmatprep.subr.mxu0 0.0
    %1117 = vmatpush1.msra.mxu0 0.0
    %1118 = vmatprep.subr.mxu0 0.0
    %1119 = vmatpush1.msra.mxu0 0.0
    %1120 = vmatprep.subr.mxu0 0.0
    %1121 = vmatpush1.msra.mxu0 0.0
    %1122 = vmatprep.subr.mxu0 0.0
    %1123 = vmatpush1.msra.mxu0 0.0
    %1124 = vmatprep.subr.mxu0 0.0
    %1125 = vmatpush1.msra.mxu0 0.0
    %1126 = vmatprep.subr.mxu0 0.0
    %1127 = vmatpush1.msra.mxu0 0.0
    %1128 = vmatprep.subr.mxu0 0.0
    %1129 = vmatpush1.msra.mxu0 0.0
    %1130 = vmatprep.subr.mxu0 0.0
    %1131 = vmatpush1.msra.mxu0 0.0
    %1132 = vmatprep.subr.mxu0 0.0
    %1133 = vmatpush1.msra.mxu0 0.0
    %1134 = vmatprep.subr.mxu0 0.0
    %1135 = vmatpush1.msra.mxu0 0.0
    %1136 = vmatprep.mubr.f32.mxu0 0.0
    %1137 = vmatmul.mubr.f32.gmra.mrb[0].mxu0 %v1067
    %v1138 = vpop.f32.mrb[0].mxu0
    %v1139 = vadd.f32 0.0, %v1138
    %v1140 = vpop.f32.mrb[0].mxu0
    %1141 = vmatprep.mubr.f32.mxu0 0.0
    %1142 = vmatmul.mubr.f32.gmra.mrb[0].mxu0 %v1070
    %v1143 = vpop.f32.mrb[0].mxu0
    %v1144 = vadd.f32 0.0, %v1143
    %v1145 = vpop.f32.mrb[0].mxu0
    %1146 = vdwg.mxu0
    %v1147 = vadd.f32 %v103, %v1139
    %v1148 = vadd.f32 %v104, %v1144
    %v1149 = vlaneseq
    %v1150 = vshrl.u32 %v1149, 7
    %v1151 = vsub.s32 0, %v1150
    %v1152 = vrot.slane %v120, %v1151
    %v1153 = vadd.f32 %v1147, %v1152
    %v1154 = vadd.f32 %v1148, %v1152
    %v1155 = vsel %vm131, %v1153, 0.0
    %1156 = vadd.xlane.f32.xlu0 %v1155
    %v1157 = vpop.xlane.xlu0 %1156
    %v1158 = vsel %vm131, %v1154, 0.0
    %1159 = vadd.xlane.f32.xlu0 %v1158
    %v1160 = vpop.xlane.xlu0 %1159
    %v1161 = vrcp.pop 32.0
    %v1162 = vmul.f32 %v1157, %v1161
    %v1163 = vmul.f32 %v1160, %v1161
    %v1164 = vsub.f32 %v1153, %v1162
    %v1165 = vsub.f32 %v1154, %v1163
    %v1166 = vmul.f32 %v1164, %v1164
    %v1167 = vmul.f32 %v1165, %v1165
    %v1168 = vsel %vm131, %v1166, 0.0
    %1169 = vadd.xlane.f32.xlu0 %v1168
    %v1170 = vpop.xlane.xlu0 %1169
    %v1171 = vsel %vm131, %v1167, 0.0
    %1172 = vadd.xlane.f32.xlu0 %v1171
    %v1173 = vpop.xlane.xlu0 %1172
    %v1174 = vmul.f32 %v1170, %v1161
    %v1175 = vmul.f32 %v1173, %v1161
    %v1176 = vadd.f32 %v1174, 1e-05
    %v1177 = vadd.f32 %v1175, 1e-05
    %v1178 = vrsqrt.pop %v1176
    %v1179 = vrsqrt.pop %v1177
    %v1180 = vmul.f32 %v1164, %v1178
    %v1181 = vmul.f32 %v1165, %v1179
    %v1182 = vlaneseq
    %v1183 = vshrl.u32 %v1182, 7
    %v1184 = vsub.s32 0, %v1183
    %v1185 = vrot.slane %v121, %v1184
    %v1186 = vmul.f32 %v1180, %v1185
    %v1187 = vmul.f32 %v1181, %v1185
    %v1188 = vlaneseq
    %v1189 = vshrl.u32 %v1188, 7
    %v1190 = vsub.s32 0, %v1189
    %v1191 = vrot.slane %v122, %v1190
    %v1192 = vadd.f32 %v1186, %v1191
    %v1193 = vadd.f32 %v1187, %v1191
    %v1194 = vlaneseq
    %v1195 = vshrl.u32 %v1194, 7
    %v1196 = vsub.s32 0, %v1195
    %v1197 = vrot.slane %v123, %v1196
    %v1199 = vsel %vm131, %v1192, 0
    %v1202 = vsel %vm131, %v1193, 0
    %1204 = vmatprep.subr.mxu0 0.0
    %1205 = vmatpush1.msra.mxu0 %v111
    %1206 = vmatprep.subr.mxu0 0.0
    %1207 = vmatpush1.msra.mxu0 %v112
    %1208 = vmatprep.subr.mxu0 0.0
    %1209 = vmatpush1.msra.mxu0 %v113
    %1210 = vmatprep.subr.mxu0 0.0
    %1211 = vmatpush1.msra.mxu0 %v114
    %1212 = vmatprep.subr.mxu0 0.0
    %1213 = vmatpush1.msra.mxu0 0.0
    %1214 = vmatprep.subr.mxu0 0.0
    %1215 = vmatpush1.msra.mxu0 0.0
    %1216 = vmatprep.subr.mxu0 0.0
    %1217 = vmatpush1.msra.mxu0 0.0
    %1218 = vmatprep.subr.mxu0 0.0
    %1219 = vmatpush1.msra.mxu0 0.0
    %1220 = vmatprep.subr.mxu0 0.0
    %1221 = vmatpush1.msra.mxu0 0.0
    %1222 = vmatprep.subr.mxu0 0.0
    %1223 = vmatpush1.msra.mxu0 0.0
    %1224 = vmatprep.subr.mxu0 0.0
    %1225 = vmatpush1.msra.mxu0 0.0
    %1226 = vmatprep.subr.mxu0 0.0
    %1227 = vmatpush1.msra.mxu0 0.0
    %1228 = vmatprep.subr.mxu0 0.0
    %1229 = vmatpush1.msra.mxu0 0.0
    %1230 = vmatprep.subr.mxu0 0.0
    %1231 = vmatpush1.msra.mxu0 0.0
    %1232 = vmatprep.subr.mxu0 0.0
    %1233 = vmatpush1.msra.mxu0 0.0
    %1234 = vmatprep.subr.mxu0 0.0
    %1235 = vmatpush1.msra.mxu0 0.0
    %1236 = vmatprep.subr.mxu0 0.0
    %1237 = vmatpush1.msra.mxu0 0.0
    %1238 = vmatprep.subr.mxu0 0.0
    %1239 = vmatpush1.msra.mxu0 0.0
    %1240 = vmatprep.subr.mxu0 0.0
    %1241 = vmatpush1.msra.mxu0 0.0
    %1242 = vmatprep.subr.mxu0 0.0
    %1243 = vmatpush1.msra.mxu0 0.0
    %1244 = vmatprep.subr.mxu0 0.0
    %1245 = vmatpush1.msra.mxu0 0.0
    %1246 = vmatprep.subr.mxu0 0.0
    %1247 = vmatpush1.msra.mxu0 0.0
    %1248 = vmatprep.subr.mxu0 0.0
    %1249 = vmatpush1.msra.mxu0 0.0
    %1250 = vmatprep.subr.mxu0 0.0
    %1251 = vmatpush1.msra.mxu0 0.0
    %1252 = vmatprep.subr.mxu0 0.0
    %1253 = vmatpush1.msra.mxu0 0.0
    %1254 = vmatprep.subr.mxu0 0.0
    %1255 = vmatpush1.msra.mxu0 0.0
    %1256 = vmatprep.subr.mxu0 0.0
    %1257 = vmatpush1.msra.mxu0 0.0
    %1258 = vmatprep.subr.mxu0 0.0
    %1259 = vmatpush1.msra.mxu0 0.0
    %1260 = vmatprep.subr.mxu0 0.0
    %1261 = vmatpush1.msra.mxu0 0.0
    %1262 = vmatprep.subr.mxu0 0.0
    %1263 = vmatpush1.msra.mxu0 0.0
    %1264 = vmatprep.subr.mxu0 0.0
    %1265 = vmatpush1.msra.mxu0 0.0
    %1266 = vmatprep.subr.mxu0 0.0
    %1267 = vmatpush1.msra.mxu0 0.0
    %1268 = vmatprep.mubr.f32.mxu0 0.0
    %1269 = vmatmul.mubr.f32.gmra.mrb[0].mxu0 %v1199
    %v1270 = vpop.f32.mrb[0].mxu0
    %v1271 = vadd.f32 %v1197, %v1270
    %v1272 = vpop.f32.mrb[0].mxu0
    %1273 = vmatprep.mubr.f32.mxu0 0.0
    %1274 = vmatmul.mubr.f32.gmra.mrb[0].mxu0 %v1202
    %v1275 = vpop.f32.mrb[0].mxu0
    %v1276 = vadd.f32 %v1197, %v1275
    %v1277 = vpop.f32.mrb[0].mxu0
    %1278 = vdwg.mxu0
    %v1279 = vmax.f32 %v1271, 0.0
    %v1280 = vmax.f32 %v1276, 0.0
    %1281 = vmatprep.subr.mxu0 0.0
    %1282 = vmatpush1.xpose.msra.mxu0 %v115
    %1283 = vmatprep.subr.mxu0 0.0
    %1284 = vmatpush1.xpose.msra.mxu0 %v116
    %1285 = vmatprep.subr.mxu0 0.0
    %1286 = vmatpush1.xpose.msra.mxu0 %v117
    %1287 = vmatprep.subr.mxu0 0.0
    %1288 = vmatpush1.xpose.msra.mxu0 %v118
    %1289 = vmatprep.subr.mxu0 0.0
    %1290 = vmatpush1.xpose.msra.mxu0 0.0
    %1291 = vmatprep.subr.mxu0 0.0
    %1292 = vmatpush1.xpose.msra.mxu0 0.0
    %1293 = vmatprep.subr.mxu0 0.0
    %1294 = vmatpush1.xpose.msra.mxu0 0.0
    %1295 = vmatprep.subr.mxu0 0.0
    %1296 = vmatpush1.xpose.msra.mxu0 0.0
    %1297 = vmatprep.subr.mxu0 0.0
    %1298 = vmatpush1.xpose.msra.mxu0 0.0
    %1299 = vmatprep.subr.mxu0 0.0
    %1300 = vmatpush1.xpose.msra.mxu0 0.0
    %1301 = vmatprep.subr.mxu0 0.0
    %1302 = vmatpush1.xpose.msra.mxu0 0.0
    %1303 = vmatprep.subr.mxu0 0.0
    %1304 = vmatpush1.xpose.msra.mxu0 0.0
    %1305 = vmatprep.subr.mxu0 0.0
    %1306 = vmatpush1.xpose.msra.mxu0 0.0
    %1307 = vmatprep.subr.mxu0 0.0
    %1308 = vmatpush1.xpose.msra.mxu0 0.0
    %1309 = vmatprep.subr.mxu0 0.0
    %1310 = vmatpush1.xpose.msra.mxu0 0.0
    %1311 = vmatprep.subr.mxu0 0.0
    %1312 = vmatpush1.xpose.msra.mxu0 0.0
    %1313 = vmatprep.subr.mxu0 0.0
    %1314 = vmatpush1.xpose.msra.mxu0 0.0
    %1315 = vmatprep.subr.mxu0 0.0
    %1316 = vmatpush1.xpose.msra.mxu0 0.0
    %1317 = vmatprep.subr.mxu0 0.0
    %1318 = vmatpush1.xpose.msra.mxu0 0.0
    %1319 = vmatprep.subr.mxu0 0.0
    %1320 = vmatpush1.xpose.msra.mxu0 0.0
    %1321 = vmatprep.subr.mxu0 0.0
    %1322 = vmatpush1.xpose.msra.mxu0 0.0
    %1323 = vmatprep.subr.mxu0 0.0
    %1324 = vmatpush1.xpose.msra.mxu0 0.0
    %1325 = vmatprep.subr.mxu0 0.0
    %1326 = vmatpush1.xpose.msra.mxu0 0.0
    %1327 = vmatprep.subr.mxu0 0.0
    %1328 = vmatpush1.xpose.msra.mxu0 0.0
    %1329 = vmatprep.subr.mxu0 0.0
    %1330 = vmatpush1.xpose.msra.mxu0 0.0
    %1331 = vmatprep.subr.mxu0 0.0
    %1332 = vmatpush1.xpose.msra.mxu0 0.0
    %1333 = vmatprep.subr.mxu0 0.0
    %1334 = vmatpush1.xpose.msra.mxu0 0.0
    %1335 = vmatprep.subr.mxu0 0.0
    %1336 = vmatpush1.xpose.msra.mxu0 0.0
    %1337 = vmatprep.subr.mxu0 0.0
    %1338 = vmatpush1.xpose.msra.mxu0 0.0
    %1339 = vmatprep.subr.mxu0 0.0
    %1340 = vmatpush1.xpose.msra.mxu0 0.0
    %1341 = vmatprep.subr.mxu0 0.0
    %1342 = vmatpush1.xpose.msra.mxu0 0.0
    %1343 = vmatprep.subr.mxu0 0.0
    %1344 = vmatpush1.xpose.msra.mxu0 0.0
    %1345 = vmatprep.mubr.f32.mxu0 0.0
    %1346 = vmatmul.mubr.f32.gmra.mrb[0].mxu0 %v1279
    %v1347 = vpop.f32.mrb[0].mxu0
    %v1348 = vadd.f32 0.0, %v1347
    %v1349 = vpop.f32.mrb[0].mxu0
    %1350 = vmatprep.mubr.f32.mxu0 0.0
    %1351 = vmatmul.mubr.f32.gmra.mrb[0].mxu0 %v1280
    %v1352 = vpop.f32.mrb[0].mxu0
    %v1353 = vadd.f32 0.0, %v1352
    %v1354 = vpop.f32.mrb[0].mxu0
    %1355 = vdwg.mxu0
    %v1356 = vadd.f32 %v1192, %v1348
    %v1357 = vadd.f32 %v1193, %v1353
    %v1358 = vlaneseq
    %v1359 = vshrl.u32 %v1358, 7
    %v1360 = vsub.s32 0, %v1359
    %v1361 = vrot.slane %v124, %v1360
    %v1362 = vadd.f32 %v1356, %v1361
    %v1363 = vadd.f32 %v1357, %v1361
    %v1364 = vsel %vm131, %v1362, 0.0
    %1365 = vadd.xlane.f32.xlu0 %v1364
    %v1366 = vpop.xlane.xlu0 %1365
    %v1367 = vsel %vm131, %v1363, 0.0
    %1368 = vadd.xlane.f32.xlu0 %v1367
    %v1369 = vpop.xlane.xlu0 %1368
    %v1370 = vmul.f32 %v1366, %v1161
    %v1371 = vmul.f32 %v1369, %v1161
    %v1372 = vsub.f32 %v1362, %v1370
    %v1373 = vsub.f32 %v1363, %v1371
    %v1374 = vmul.f32 %v1372, %v1372
    %v1375 = vmul.f32 %v1373, %v1373
    %v1376 = vsel %vm131, %v1374, 0.0
    %1377 = vadd.xlane.f32.xlu0 %v1376
    %v1378 = vpop.xlane.xlu0 %1377
    %v1379 = vsel %vm131, %v1375, 0.0
    %1380 = vadd.xlane.f32.xlu0 %v1379
    %v1381 = vpop.xlane.xlu0 %1380
    %v1382 = vmul.f32 %v1378, %v1161
    %v1383 = vmul.f32 %v1381, %v1161
    %v1384 = vadd.f32 %v1382, 1e-05
    %v1385 = vadd.f32 %v1383, 1e-05
    %v1386 = vrsqrt.pop %v1384
    %v1387 = vrsqrt.pop %v1385
    %v1388 = vmul.f32 %v1372, %v1386
    %v1389 = vmul.f32 %v1373, %v1387
    %v1390 = vlaneseq
    %v1391 = vshrl.u32 %v1390, 7
    %v1392 = vsub.s32 0, %v1391
    %v1393 = vrot.slane %v125, %v1392
    %v1394 = vmul.f32 %v1388, %v1393
    %v1395 = vmul.f32 %v1389, %v1393
    %v1396 = vlaneseq
    %v1397 = vshrl.u32 %v1396, 7
    %v1398 = vsub.s32 0, %v1397
    %v1399 = vrot.slane %v126, %v1398
    %v1400 = vadd.f32 %v1394, %v1399
    %v1401 = vadd.f32 %v1395, %v1399
    %v1402 = vld [vmem:[#allocation4 + $0x60] sm:$0xff]
    %v1403 = vld [vmem:[#allocation4 + $0x68] sm:$0xff]
    %v1404 = vld [vmem:[#allocation4 + $0x70] sm:$0xff]
    %v1405 = vld [vmem:[#allocation4 + $0x78] sm:$0xff]
    %v1406 = vld [vmem:[#allocation4 + $0x80] sm:$0xff]
    %v1407 = vld [vmem:[#allocation4 + $0x88] sm:$0xff]
    %v1408 = vld [vmem:[#allocation4 + $0x90] sm:$0xff]
    %v1409 = vld [vmem:[#allocation4 + $0x98] sm:$0xff]
    %v1410 = vld [vmem:[#allocation4 + $0xa0] sm:$0xff]
    %v1411 = vld [vmem:[#allocation4 + $0xa8] sm:$0xff]
    %v1412 = vld [vmem:[#allocation4 + $0xb0] sm:$0xff]
    %v1413 = vld [vmem:[#allocation4 + $0xb8] sm:$0xff]
    %v1414 = vld [vmem:[#allocation7 + $0x8] sm:$0x1]
    %v1415 = vld [vmem:[#allocation7 + $0x9] sm:$0x1]
    %v1416 = vld [vmem:[#allocation7 + $0xa] sm:$0x1]
    %v1417 = vld [vmem:[#allocation7 + $0xb] sm:$0x1]
    %v1418 = vld [vmem:[#allocation7 + $0xc] sm:$0x1]
    %v1419 = vld [vmem:[#allocation7 + $0xd] sm:$0x1]
    %v1420 = vld [vmem:[#allocation7 + $0xe] sm:$0x1]
    %v1421 = vld [vmem:[#allocation7 + $0xf] sm:$0x1]
    %v1422 = vlaneseq
    %v1423 = vshrl.u32 %v1422, 7
    %v1424 = vsub.s32 0, %v1423
    %v1425 = vrot.slane %v1414, %v1424
    %v1427 = vsel %vm131, %v1400, 0
    %v1430 = vsel %vm131, %v1401, 0
    %1432 = vmatprep.subr.mxu0 0.0
    %1433 = vmatpush1.msra.mxu0 %v1402
    %1434 = vmatprep.subr.mxu0 0.0
    %1435 = vmatpush1.msra.mxu0 %v1403
    %1436 = vmatprep.subr.mxu0 0.0
    %1437 = vmatpush1.msra.mxu0 %v1404
    %1438 = vmatprep.subr.mxu0 0.0
    %1439 = vmatpush1.msra.mxu0 %v1405
    %1440 = vmatprep.subr.mxu0 0.0
    %1441 = vmatpush1.msra.mxu0 0.0
    %1442 = vmatprep.subr.mxu0 0.0
    %1443 = vmatpush1.msra.mxu0 0.0
    %1444 = vmatprep.subr.mxu0 0.0
    %1445 = vmatpush1.msra.mxu0 0.0
    %1446 = vmatprep.subr.mxu0 0.0
    %1447 = vmatpush1.msra.mxu0 0.0
    %1448 = vmatprep.subr.mxu0 0.0
    %1449 = vmatpush1.msra.mxu0 0.0
    %1450 = vmatprep.subr.mxu0 0.0
    %1451 = vmatpush1.msra.mxu0 0.0
    %1452 = vmatprep.subr.mxu0 0.0
    %1453 = vmatpush1.msra.mxu0 0.0
    %1454 = vmatprep.subr.mxu0 0.0
    %1455 = vmatpush1.msra.mxu0 0.0
    %1456 = vmatprep.subr.mxu0 0.0
    %1457 = vmatpush1.msra.mxu0 0.0
    %1458 = vmatprep.subr.mxu0 0.0
    %1459 = vmatpush1.msra.mxu0 0.0
    %1460 = vmatprep.subr.mxu0 0.0
    %1461 = vmatpush1.msra.mxu0 0.0
    %1462 = vmatprep.subr.mxu0 0.0
    %1463 = vmatpush1.msra.mxu0 0.0
    %1464 = vmatprep.subr.mxu0 0.0
    %1465 = vmatpush1.msra.mxu0 0.0
    %1466 = vmatprep.subr.mxu0 0.0
    %1467 = vmatpush1.msra.mxu0 0.0
    %1468 = vmatprep.subr.mxu0 0.0
    %1469 = vmatpush1.msra.mxu0 0.0
    %1470 = vmatprep.subr.mxu0 0.0
    %1471 = vmatpush1.msra.mxu0 0.0
    %1472 = vmatprep.subr.mxu0 0.0
    %1473 = vmatpush1.msra.mxu0 0.0
    %1474 = vmatprep.subr.mxu0 0.0
    %1475 = vmatpush1.msra.mxu0 0.0
    %1476 = vmatprep.subr.mxu0 0.0
    %1477 = vmatpush1.msra.mxu0 0.0
    %1478 = vmatprep.subr.mxu0 0.0
    %1479 = vmatpush1.msra.mxu0 0.0
    %1480 = vmatprep.subr.mxu0 0.0
    %1481 = vmatpush1.msra.mxu0 0.0
    %1482 = vmatprep.subr.mxu0 0.0
    %1483 = vmatpush1.msra.mxu0 0.0
    %1484 = vmatprep.subr.mxu0 0.0
    %1485 = vmatpush1.msra.mxu0 0.0
    %1486 = vmatprep.subr.mxu0 0.0
    %1487 = vmatpush1.msra.mxu0 0.0
    %1488 = vmatprep.subr.mxu0 0.0
    %1489 = vmatpush1.msra.mxu0 0.0
    %1490 = vmatprep.subr.mxu0 0.0
    %1491 = vmatpush1.msra.mxu0 0.0
    %1492 = vmatprep.subr.mxu0 0.0
    %1493 = vmatpush1.msra.mxu0 0.0
    %1494 = vmatprep.subr.mxu0 0.0
    %1495 = vmatpush1.msra.mxu0 0.0
    %1496 = vmatprep.mubr.f32.mxu0 0.0
    %1497 = vmatmul.mubr.f32.gmra.mrb[0].mxu0 %v1427
    %v1498 = vpop.f32.mrb[0].mxu0
    %v1499 = vadd.f32 %v1425, %v1498
    %v1500 = vpop.f32.mrb[0].mxu0
    %1501 = vmatprep.mubr.f32.mxu0 0.0
    %1502 = vmatmul.mubr.f32.gmra.mrb[0].mxu0 %v1430
    %v1503 = vpop.f32.mrb[0].mxu0
    %v1504 = vadd.f32 %v1425, %v1503
    %v1505 = vpop.f32.mrb[0].mxu0
    %1506 = vdwg.mxu0
    %1509 = vrot.lane.b32.xlu0 %v1499, 96
    %v1510 = vpop.permute.xlu0 %1509
    %1511 = vrot.lane.b32.xlu0 %v1504, 96
    %v1512 = vpop.permute.xlu0 %1511
    %v1513 = vsel %vm219, %v1499, 0
    %v1515 = vsel %vm219, %v1504, 0
    %v1517 = vsel %vm219, %v1510, 0
    %v1519 = vsel %vm219, %v1512, 0
    %1521 = vmatprep.subr.mxu0 0.0
    %1522 = vmatpush1.xpose.msra.mxu0 %v1517
    %1523 = vmatprep.subr.mxu0 0.0
    %1524 = vmatpush1.xpose.msra.mxu0 %v1519
    %1525 = vmatprep.subr.mxu0 0.0
    %1526 = vmatpush1.xpose.msra.mxu0 0.0
    %1527 = vmatprep.subr.mxu0 0.0
    %1528 = vmatpush1.xpose.msra.mxu0 0.0
    %1529 = vmatprep.subr.mxu0 0.0
    %1530 = vmatpush1.xpose.msra.mxu0 0.0
    %1531 = vmatprep.subr.mxu0 0.0
    %1532 = vmatpush1.xpose.msra.mxu0 0.0
    %1533 = vmatprep.subr.mxu0 0.0
    %1534 = vmatpush1.xpose.msra.mxu0 0.0
    %1535 = vmatprep.subr.mxu0 0.0
    %1536 = vmatpush1.xpose.msra.mxu0 0.0
    %1537 = vmatprep.subr.mxu0 0.0
    %1538 = vmatpush1.xpose.msra.mxu0 0.0
    %1539 = vmatprep.subr.mxu0 0.0
    %1540 = vmatpush1.xpose.msra.mxu0 0.0
    %1541 = vmatprep.subr.mxu0 0.0
    %1542 = vmatpush1.xpose.msra.mxu0 0.0
    %1543 = vmatprep.subr.mxu0 0.0
    %1544 = vmatpush1.xpose.msra.mxu0 0.0
    %1545 = vmatprep.subr.mxu0 0.0
    %1546 = vmatpush1.xpose.msra.mxu0 0.0
    %1547 = vmatprep.subr.mxu0 0.0
    %1548 = vmatpush1.xpose.msra.mxu0 0.0
    %1549 = vmatprep.subr.mxu0 0.0
    %1550 = vmatpush1.xpose.msra.mxu0 0.0
    %1551 = vmatprep.subr.mxu0 0.0
    %1552 = vmatpush1.xpose.msra.mxu0 0.0
    %1553 = vmatprep.subr.mxu0 0.0
    %1554 = vmatpush1.xpose.msra.mxu0 0.0
    %1555 = vmatprep.subr.mxu0 0.0
    %1556 = vmatpush1.xpose.msra.mxu0 0.0
    %1557 = vmatprep.subr.mxu0 0.0
    %1558 = vmatpush1.xpose.msra.mxu0 0.0
    %1559 = vmatprep.subr.mxu0 0.0
    %1560 = vmatpush1.xpose.msra.mxu0 0.0
    %1561 = vmatprep.subr.mxu0 0.0
    %1562 = vmatpush1.xpose.msra.mxu0 0.0
    %1563 = vmatprep.subr.mxu0 0.0
    %1564 = vmatpush1.xpose.msra.mxu0 0.0
    %1565 = vmatprep.subr.mxu0 0.0
    %1566 = vmatpush1.xpose.msra.mxu0 0.0
    %1567 = vmatprep.subr.mxu0 0.0
    %1568 = vmatpush1.xpose.msra.mxu0 0.0
    %1569 = vmatprep.subr.mxu0 0.0
    %1570 = vmatpush1.xpose.msra.mxu0 0.0
    %1571 = vmatprep.subr.mxu0 0.0
    %1572 = vmatpush1.xpose.msra.mxu0 0.0
    %1573 = vmatprep.subr.mxu0 0.0
    %1574 = vmatpush1.xpose.msra.mxu0 0.0
    %1575 = vmatprep.subr.mxu0 0.0
    %1576 = vmatpush1.xpose.msra.mxu0 0.0
    %1577 = vmatprep.subr.mxu0 0.0
    %1578 = vmatpush1.xpose.msra.mxu0 0.0
    %1579 = vmatprep.subr.mxu0 0.0
    %1580 = vmatpush1.xpose.msra.mxu0 0.0
    %1581 = vmatprep.subr.mxu0 0.0
    %1582 = vmatpush1.xpose.msra.mxu0 0.0
    %1583 = vmatprep.subr.mxu0 0.0
    %1584 = vmatpush1.xpose.msra.mxu0 0.0
    %1585 = vmatprep.mubr.f32.mxu0 0.0
    %1586 = vmatmul.mubr.f32.gmra.mrb[0].mxu0 %v1513
    %v1587 = vpop.f32.mrb[0].mxu0
    %v1588 = vadd.f32 %v105, %v1587
    %v1589 = vpop.f32.mrb[0].mxu0
    %1590 = vmatprep.mubr.f32.mxu0 0.0
    %1591 = vmatmul.mubr.f32.gmra.mrb[0].mxu0 %v1515
    %v1592 = vpop.f32.mrb[0].mxu0
    %v1593 = vadd.f32 %v106, %v1592
    %v1594 = vpop.f32.mrb[0].mxu0
    %1595 = vdwg.mxu0
    %v1596 = vsel %vm303, %v1588, -inf
    %1597 = vmax.xlane.f32.xlu0 %v1596
    %v1598 = vpop.xlane.xlu0 %1597
    %v1599 = vsel %vm303, %v1593, -inf
    %1600 = vmax.xlane.f32.xlu0 %v1599
    %v1601 = vpop.xlane.xlu0 %1600
    %v1602 = vsub.f32 %v1588, %v1598
    %v1603 = vsub.f32 %v1593, %v1601
    %v1604 = vmul.f32 %v1602, 1.442695
    %v1605 = vpow.pop %v1604
    %v1606 = vmul.f32 %v1603, 1.442695
    %v1607 = vpow.pop %v1606
    %v1608 = vsel %vm303, %v1605, 0.0
    %1609 = vadd.xlane.f32.xlu0 %v1608
    %v1610 = vpop.xlane.xlu0 %1609
    %v1611 = vsel %vm303, %v1607, 0.0
    %1612 = vadd.xlane.f32.xlu0 %v1611
    %v1613 = vpop.xlane.xlu0 %1612
    %v1614 = vrcp.pop %v1610
    %v1615 = vrcp.pop %v1613
    %v1616 = vmul.f32 %v1605, %v1614
    %v1617 = vmul.f32 %v1607, %v1615
    %1618 = vrot.lane.b32.xlu0 %v1499, 64
    %v1619 = vpop.permute.xlu0 %1618
    %1620 = vrot.lane.b32.xlu0 %v1504, 64
    %v1621 = vpop.permute.xlu0 %1620
    %v1625 = vsel %vm303, %v1616, 0
    %v1628 = vsel %vm303, %v1617, 0
    %1630 = vmatprep.subr.mxu0 0.0
    %1631 = vmatpush1.msra.mxu0 %v1619
    %1632 = vmatprep.subr.mxu0 0.0
    %1633 = vmatpush1.msra.mxu0 %v1621
    %1634 = vmatprep.subr.mxu0 0.0
    %1635 = vmatpush1.msra.mxu0 0.0
    %1636 = vmatprep.subr.mxu0 0.0
    %1637 = vmatpush1.msra.mxu0 0.0
    %1638 = vmatprep.subr.mxu0 0.0
    %1639 = vmatpush1.msra.mxu0 0.0
    %1640 = vmatprep.subr.mxu0 0.0
    %1641 = vmatpush1.msra.mxu0 0.0
    %1642 = vmatprep.subr.mxu0 0.0
    %1643 = vmatpush1.msra.mxu0 0.0
    %1644 = vmatprep.subr.mxu0 0.0
    %1645 = vmatpush1.msra.mxu0 0.0
    %1646 = vmatprep.subr.mxu0 0.0
    %1647 = vmatpush1.msra.mxu0 0.0
    %1648 = vmatprep.subr.mxu0 0.0
    %1649 = vmatpush1.msra.mxu0 0.0
    %1650 = vmatprep.subr.mxu0 0.0
    %1651 = vmatpush1.msra.mxu0 0.0
    %1652 = vmatprep.subr.mxu0 0.0
    %1653 = vmatpush1.msra.mxu0 0.0
    %1654 = vmatprep.subr.mxu0 0.0
    %1655 = vmatpush1.msra.mxu0 0.0
    %1656 = vmatprep.subr.mxu0 0.0
    %1657 = vmatpush1.msra.mxu0 0.0
    %1658 = vmatprep.subr.mxu0 0.0
    %1659 = vmatpush1.msra.mxu0 0.0
    %1660 = vmatprep.subr.mxu0 0.0
    %1661 = vmatpush1.msra.mxu0 0.0
    %1662 = vmatprep.subr.mxu0 0.0
    %1663 = vmatpush1.msra.mxu0 0.0
    %1664 = vmatprep.subr.mxu0 0.0
    %1665 = vmatpush1.msra.mxu0 0.0
    %1666 = vmatprep.subr.mxu0 0.0
    %1667 = vmatpush1.msra.mxu0 0.0
    %1668 = vmatprep.subr.mxu0 0.0
    %1669 = vmatpush1.msra.mxu0 0.0
    %1670 = vmatprep.subr.mxu0 0.0
    %1671 = vmatpush1.msra.mxu0 0.0
    %1672 = vmatprep.subr.mxu0 0.0
    %1673 = vmatpush1.msra.mxu0 0.0
    %1674 = vmatprep.subr.mxu0 0.0
    %1675 = vmatpush1.msra.mxu0 0.0
    %1676 = vmatprep.subr.mxu0 0.0
    %1677 = vmatpush1.msra.mxu0 0.0
    %1678 = vmatprep.subr.mxu0 0.0
    %1679 = vmatpush1.msra.mxu0 0.0
    %1680 = vmatprep.subr.mxu0 0.0
    %1681 = vmatpush1.msra.mxu0 0.0
    %1682 = vmatprep.subr.mxu0 0.0
    %1683 = vmatpush1.msra.mxu0 0.0
    %1684 = vmatprep.subr.mxu0 0.0
    %1685 = vmatpush1.msra.mxu0 0.0
    %1686 = vmatprep.subr.mxu0 0.0
    %1687 = vmatpush1.msra.mxu0 0.0
    %1688 = vmatprep.subr.mxu0 0.0
    %1689 = vmatpush1.msra.mxu0 0.0
    %1690 = vmatprep.subr.mxu0 0.0
    %1691 = vmatpush1.msra.mxu0 0.0
    %1692 = vmatprep.subr.mxu0 0.0
    %1693 = vmatpush1.msra.mxu0 0.0
    %1694 = vmatprep.mubr.f32.mxu0 0.0
    %1695 = vmatmul.mubr.f32.gmra.mrb[0].mxu0 %v1625
    %v1696 = vpop.f32.mrb[0].mxu0
    %v1697 = vadd.f32 0.0, %v1696
    %v1698 = vpop.f32.mrb[0].mxu0
    %1699 = vmatprep.mubr.f32.mxu0 0.0
    %1700 = vmatmul.mubr.f32.gmra.mrb[0].mxu0 %v1628
    %v1701 = vpop.f32.mrb[0].mxu0
    %v1702 = vadd.f32 0.0, %v1701
    %v1703 = vpop.f32.mrb[0].mxu0
    %1704 = vdwg.mxu0
    %1705 = vst.msk [vmem:[#allocation3] sm:$0xff] %vm219, %v1697
    %1706 = vst.msk [vmem:[#allocation3 + $0x8] sm:$0xff] %vm219, %v1702
    %1707 = vrot.lane.b32.xlu0 %v1499, 120
    %v1708 = vpop.permute.xlu0 %1707
    %1709 = vrot.lane.b32.xlu0 %v1504, 120
    %v1710 = vpop.permute.xlu0 %1709
    %1711 = vrot.lane.b32.xlu0 %v1499, 88
    %v1712 = vpop.permute.xlu0 %1711
    %1713 = vrot.lane.b32.xlu0 %v1504, 88
    %v1714 = vpop.permute.xlu0 %1713
    %v1715 = vsel %vm219, %v1708, 0
    %v1717 = vsel %vm219, %v1710, 0
    %v1719 = vsel %vm219, %v1712, 0
    %v1721 = vsel %vm219, %v1714, 0
    %1723 = vmatprep.subr.mxu0 0.0
    %1724 = vmatpush1.xpose.msra.mxu0 %v1719
    %1725 = vmatprep.subr.mxu0 0.0
    %1726 = vmatpush1.xpose.msra.mxu0 %v1721
    %1727 = vmatprep.subr.mxu0 0.0
    %1728 = vmatpush1.xpose.msra.mxu0 0.0
    %1729 = vmatprep.subr.mxu0 0.0
    %1730 = vmatpush1.xpose.msra.mxu0 0.0
    %1731 = vmatprep.subr.mxu0 0.0
    %1732 = vmatpush1.xpose.msra.mxu0 0.0
    %1733 = vmatprep.subr.mxu0 0.0
    %1734 = vmatpush1.xpose.msra.mxu0 0.0
    %1735 = vmatprep.subr.mxu0 0.0
    %1736 = vmatpush1.xpose.msra.mxu0 0.0
    %1737 = vmatprep.subr.mxu0 0.0
    %1738 = vmatpush1.xpose.msra.mxu0 0.0
    %1739 = vmatprep.subr.mxu0 0.0
    %1740 = vmatpush1.xpose.msra.mxu0 0.0
    %1741 = vmatprep.subr.mxu0 0.0
    %1742 = vmatpush1.xpose.msra.mxu0 0.0
    %1743 = vmatprep.subr.mxu0 0.0
    %1744 = vmatpush1.xpose.msra.mxu0 0.0
    %1745 = vmatprep.subr.mxu0 0.0
    %1746 = vmatpush1.xpose.msra.mxu0 0.0
    %1747 = vmatprep.subr.mxu0 0.0
    %1748 = vmatpush1.xpose.msra.mxu0 0.0
    %1749 = vmatprep.subr.mxu0 0.0
    %1750 = vmatpush1.xpose.msra.mxu0 0.0
    %1751 = vmatprep.subr.mxu0 0.0
    %1752 = vmatpush1.xpose.msra.mxu0 0.0
    %1753 = vmatprep.subr.mxu0 0.0
    %1754 = vmatpush1.xpose.msra.mxu0 0.0
    %1755 = vmatprep.subr.mxu0 0.0
    %1756 = vmatpush1.xpose.msra.mxu0 0.0
    %1757 = vmatprep.subr.mxu0 0.0
    %1758 = vmatpush1.xpose.msra.mxu0 0.0
    %1759 = vmatprep.subr.mxu0 0.0
    %1760 = vmatpush1.xpose.msra.mxu0 0.0
    %1761 = vmatprep.subr.mxu0 0.0
    %1762 = vmatpush1.xpose.msra.mxu0 0.0
    %1763 = vmatprep.subr.mxu0 0.0
    %1764 = vmatpush1.xpose.msra.mxu0 0.0
    %1765 = vmatprep.subr.mxu0 0.0
    %1766 = vmatpush1.xpose.msra.mxu0 0.0
    %1767 = vmatprep.subr.mxu0 0.0
    %1768 = vmatpush1.xpose.msra.mxu0 0.0
    %1769 = vmatprep.subr.mxu0 0.0
    %1770 = vmatpush1.xpose.msra.mxu0 0.0
    %1771 = vmatprep.subr.mxu0 0.0
    %1772 = vmatpush1.xpose.msra.mxu0 0.0
    %1773 = vmatprep.subr.mxu0 0.0
    %1774 = vmatpush1.xpose.msra.mxu0 0.0
    %1775 = vmatprep.subr.mxu0 0.0
    %1776 = vmatpush1.xpose.msra.mxu0 0.0
    %1777 = vmatprep.subr.mxu0 0.0
    %1778 = vmatpush1.xpose.msra.mxu0 0.0
    %1779 = vmatprep.subr.mxu0 0.0
    %1780 = vmatpush1.xpose.msra.mxu0 0.0
    %1781 = vmatprep.subr.mxu0 0.0
    %1782 = vmatpush1.xpose.msra.mxu0 0.0
    %1783 = vmatprep.subr.mxu0 0.0
    %1784 = vmatpush1.xpose.msra.mxu0 0.0
    %1785 = vmatprep.subr.mxu0 0.0
    %1786 = vmatpush1.xpose.msra.mxu0 0.0
    %1787 = vmatprep.mubr.f32.mxu0 0.0
    %1788 = vmatmul.mubr.f32.gmra.mrb[0].mxu0 %v1715
    %v1789 = vpop.f32.mrb[0].mxu0
    %v1790 = vadd.f32 %v105, %v1789
    %v1791 = vpop.f32.mrb[0].mxu0
    %1792 = vmatprep.mubr.f32.mxu0 0.0
    %1793 = vmatmul.mubr.f32.gmra.mrb[0].mxu0 %v1717
    %v1794 = vpop.f32.mrb[0].mxu0
    %v1795 = vadd.f32 %v106, %v1794
    %v1796 = vpop.f32.mrb[0].mxu0
    %1797 = vdwg.mxu0
    %v1798 = vsel %vm303, %v1790, -inf
    %1799 = vmax.xlane.f32.xlu0 %v1798
    %v1800 = vpop.xlane.xlu0 %1799
    %v1801 = vsel %vm303, %v1795, -inf
    %1802 = vmax.xlane.f32.xlu0 %v1801
    %v1803 = vpop.xlane.xlu0 %1802
    %v1804 = vsub.f32 %v1790, %v1800
    %v1805 = vsub.f32 %v1795, %v1803
    %v1806 = vmul.f32 %v1804, 1.442695
    %v1807 = vpow.pop %v1806
    %v1808 = vmul.f32 %v1805, 1.442695
    %v1809 = vpow.pop %v1808
    %v1810 = vsel %vm303, %v1807, 0.0
    %1811 = vadd.xlane.f32.xlu0 %v1810
    %v1812 = vpop.xlane.xlu0 %1811
    %v1813 = vsel %vm303, %v1809, 0.0
    %1814 = vadd.xlane.f32.xlu0 %v1813
    %v1815 = vpop.xlane.xlu0 %1814
    %v1816 = vrcp.pop %v1812
    %v1817 = vrcp.pop %v1815
    %v1818 = vmul.f32 %v1807, %v1816
    %v1819 = vmul.f32 %v1809, %v1817
    %1820 = vrot.lane.b32.xlu0 %v1499, 56
    %v1821 = vpop.permute.xlu0 %1820
    %1822 = vrot.lane.b32.xlu0 %v1504, 56
    %v1823 = vpop.permute.xlu0 %1822
    %v1827 = vsel %vm303, %v1818, 0
    %v1830 = vsel %vm303, %v1819, 0
    %1832 = vmatprep.subr.mxu0 0.0
    %1833 = vmatpush1.msra.mxu0 %v1821
    %1834 = vmatprep.subr.mxu0 0.0
    %1835 = vmatpush1.msra.mxu0 %v1823
    %1836 = vmatprep.subr.mxu0 0.0
    %1837 = vmatpush1.msra.mxu0 0.0
    %1838 = vmatprep.subr.mxu0 0.0
    %1839 = vmatpush1.msra.mxu0 0.0
    %1840 = vmatprep.subr.mxu0 0.0
    %1841 = vmatpush1.msra.mxu0 0.0
    %1842 = vmatprep.subr.mxu0 0.0
    %1843 = vmatpush1.msra.mxu0 0.0
    %1844 = vmatprep.subr.mxu0 0.0
    %1845 = vmatpush1.msra.mxu0 0.0
    %1846 = vmatprep.subr.mxu0 0.0
    %1847 = vmatpush1.msra.mxu0 0.0
    %1848 = vmatprep.subr.mxu0 0.0
    %1849 = vmatpush1.msra.mxu0 0.0
    %1850 = vmatprep.subr.mxu0 0.0
    %1851 = vmatpush1.msra.mxu0 0.0
    %1852 = vmatprep.subr.mxu0 0.0
    %1853 = vmatpush1.msra.mxu0 0.0
    %1854 = vmatprep.subr.mxu0 0.0
    %1855 = vmatpush1.msra.mxu0 0.0
    %1856 = vmatprep.subr.mxu0 0.0
    %1857 = vmatpush1.msra.mxu0 0.0
    %1858 = vmatprep.subr.mxu0 0.0
    %1859 = vmatpush1.msra.mxu0 0.0
    %1860 = vmatprep.subr.mxu0 0.0
    %1861 = vmatpush1.msra.mxu0 0.0
    %1862 = vmatprep.subr.mxu0 0.0
    %1863 = vmatpush1.msra.mxu0 0.0
    %1864 = vmatprep.subr.mxu0 0.0
    %1865 = vmatpush1.msra.mxu0 0.0
    %1866 = vmatprep.subr.mxu0 0.0
    %1867 = vmatpush1.msra.mxu0 0.0
    %1868 = vmatprep.subr.mxu0 0.0
    %1869 = vmatpush1.msra.mxu0 0.0
    %1870 = vmatprep.subr.mxu0 0.0
    %1871 = vmatpush1.msra.mxu0 0.0
    %1872 = vmatprep.subr.mxu0 0.0
    %1873 = vmatpush1.msra.mxu0 0.0
    %1874 = vmatprep.subr.mxu0 0.0
    %1875 = vmatpush1.msra.mxu0 0.0
    %1876 = vmatprep.subr.mxu0 0.0
    %1877 = vmatpush1.msra.mxu0 0.0
    %1878 = vmatprep.subr.mxu0 0.0
    %1879 = vmatpush1.msra.mxu0 0.0
    %1880 = vmatprep.subr.mxu0 0.0
    %1881 = vmatpush1.msra.mxu0 0.0
    %1882 = vmatprep.subr.mxu0 0.0
    %1883 = vmatpush1.msra.mxu0 0.0
    %1884 = vmatprep.subr.mxu0 0.0
    %1885 = vmatpush1.msra.mxu0 0.0
    %1886 = vmatprep.subr.mxu0 0.0
    %1887 = vmatpush1.msra.mxu0 0.0
    %1888 = vmatprep.subr.mxu0 0.0
    %1889 = vmatpush1.msra.mxu0 0.0
    %1890 = vmatprep.subr.mxu0 0.0
    %1891 = vmatpush1.msra.mxu0 0.0
    %1892 = vmatprep.subr.mxu0 0.0
    %1893 = vmatpush1.msra.mxu0 0.0
    %1894 = vmatprep.subr.mxu0 0.0
    %1895 = vmatpush1.msra.mxu0 0.0
    %1896 = vmatprep.mubr.f32.mxu0 0.0
    %1897 = vmatmul.mubr.f32.gmra.mrb[0].mxu0 %v1827
    %v1898 = vpop.f32.mrb[0].mxu0
    %v1899 = vadd.f32 0.0, %v1898
    %v1900 = vpop.f32.mrb[0].mxu0
    %1901 = vmatprep.mubr.f32.mxu0 0.0
    %1902 = vmatmul.mubr.f32.gmra.mrb[0].mxu0 %v1830
    %v1903 = vpop.f32.mrb[0].mxu0
    %v1904 = vadd.f32 0.0, %v1903
    %v1905 = vpop.f32.mrb[0].mxu0
    %1906 = vdwg.mxu0
    %1909 = vrot.lane.b32.xlu0 %v1899, 8
    %v1910 = vpop.permute.xlu0 %1909
    %1911 = vrot.lane.b32.xlu0 %v1904, 8
    %v1912 = vpop.permute.xlu0 %1911
    %1915 = vst.msk [vmem:[#allocation3] sm:$0xff] %vm623, %v1910
    %1916 = vst.msk [vmem:[#allocation3 + $0x8] sm:$0xff] %vm623, %v1912
    %1917 = vrot.lane.b32.xlu0 %v1499, 112
    %v1918 = vpop.permute.xlu0 %1917
    %1919 = vrot.lane.b32.xlu0 %v1504, 112
    %v1920 = vpop.permute.xlu0 %1919
    %1921 = vrot.lane.b32.xlu0 %v1499, 80
    %v1922 = vpop.permute.xlu0 %1921
    %1923 = vrot.lane.b32.xlu0 %v1504, 80
    %v1924 = vpop.permute.xlu0 %1923
    %v1925 = vsel %vm219, %v1918, 0
    %v1927 = vsel %vm219, %v1920, 0
    %v1929 = vsel %vm219, %v1922, 0
    %v1931 = vsel %vm219, %v1924, 0
    %1933 = vmatprep.subr.mxu0 0.0
    %1934 = vmatpush1.xpose.msra.mxu0 %v1929
    %1935 = vmatprep.subr.mxu0 0.0
    %1936 = vmatpush1.xpose.msra.mxu0 %v1931
    %1937 = vmatprep.subr.mxu0 0.0
    %1938 = vmatpush1.xpose.msra.mxu0 0.0
    %1939 = vmatprep.subr.mxu0 0.0
    %1940 = vmatpush1.xpose.msra.mxu0 0.0
    %1941 = vmatprep.subr.mxu0 0.0
    %1942 = vmatpush1.xpose.msra.mxu0 0.0
    %1943 = vmatprep.subr.mxu0 0.0
    %1944 = vmatpush1.xpose.msra.mxu0 0.0
    %1945 = vmatprep.subr.mxu0 0.0
    %1946 = vmatpush1.xpose.msra.mxu0 0.0
    %1947 = vmatprep.subr.mxu0 0.0
    %1948 = vmatpush1.xpose.msra.mxu0 0.0
    %1949 = vmatprep.subr.mxu0 0.0
    %1950 = vmatpush1.xpose.msra.mxu0 0.0
    %1951 = vmatprep.subr.mxu0 0.0
    %1952 = vmatpush1.xpose.msra.mxu0 0.0
    %1953 = vmatprep.subr.mxu0 0.0
    %1954 = vmatpush1.xpose.msra.mxu0 0.0
    %1955 = vmatprep.subr.mxu0 0.0
    %1956 = vmatpush1.xpose.msra.mxu0 0.0
    %1957 = vmatprep.subr.mxu0 0.0
    %1958 = vmatpush1.xpose.msra.mxu0 0.0
    %1959 = vmatprep.subr.mxu0 0.0
    %1960 = vmatpush1.xpose.msra.mxu0 0.0
    %1961 = vmatprep.subr.mxu0 0.0
    %1962 = vmatpush1.xpose.msra.mxu0 0.0
    %1963 = vmatprep.subr.mxu0 0.0
    %1964 = vmatpush1.xpose.msra.mxu0 0.0
    %1965 = vmatprep.subr.mxu0 0.0
    %1966 = vmatpush1.xpose.msra.mxu0 0.0
    %1967 = vmatprep.subr.mxu0 0.0
    %1968 = vmatpush1.xpose.msra.mxu0 0.0
    %1969 = vmatprep.subr.mxu0 0.0
    %1970 = vmatpush1.xpose.msra.mxu0 0.0
    %1971 = vmatprep.subr.mxu0 0.0
    %1972 = vmatpush1.xpose.msra.mxu0 0.0
    %1973 = vmatprep.subr.mxu0 0.0
    %1974 = vmatpush1.xpose.msra.mxu0 0.0
    %1975 = vmatprep.subr.mxu0 0.0
    %1976 = vmatpush1.xpose.msra.mxu0 0.0
    %1977 = vmatprep.subr.mxu0 0.0
    %1978 = vmatpush1.xpose.msra.mxu0 0.0
    %1979 = vmatprep.subr.mxu0 0.0
    %1980 = vmatpush1.xpose.msra.mxu0 0.0
    %1981 = vmatprep.subr.mxu0 0.0
    %1982 = vmatpush1.xpose.msra.mxu0 0.0
    %1983 = vmatprep.subr.mxu0 0.0
    %1984 = vmatpush1.xpose.msra.mxu0 0.0
    %1985 = vmatprep.subr.mxu0 0.0
    %1986 = vmatpush1.xpose.msra.mxu0 0.0
    %1987 = vmatprep.subr.mxu0 0.0
    %1988 = vmatpush1.xpose.msra.mxu0 0.0
    %1989 = vmatprep.subr.mxu0 0.0
    %1990 = vmatpush1.xpose.msra.mxu0 0.0
    %1991 = vmatprep.subr.mxu0 0.0
    %1992 = vmatpush1.xpose.msra.mxu0 0.0
    %1993 = vmatprep.subr.mxu0 0.0
    %1994 = vmatpush1.xpose.msra.mxu0 0.0
    %1995 = vmatprep.subr.mxu0 0.0
    %1996 = vmatpush1.xpose.msra.mxu0 0.0
    %1997 = vmatprep.mubr.f32.mxu0 0.0
    %1998 = vmatmul.mubr.f32.gmra.mrb[0].mxu0 %v1925
    %v1999 = vpop.f32.mrb[0].mxu0
    %v2000 = vadd.f32 %v105, %v1999
    %v2001 = vpop.f32.mrb[0].mxu0
    %2002 = vmatprep.mubr.f32.mxu0 0.0
    %2003 = vmatmul.mubr.f32.gmra.mrb[0].mxu0 %v1927
    %v2004 = vpop.f32.mrb[0].mxu0
    %v2005 = vadd.f32 %v106, %v2004
    %v2006 = vpop.f32.mrb[0].mxu0
    %2007 = vdwg.mxu0
    %v2008 = vsel %vm303, %v2000, -inf
    %2009 = vmax.xlane.f32.xlu0 %v2008
    %v2010 = vpop.xlane.xlu0 %2009
    %v2011 = vsel %vm303, %v2005, -inf
    %2012 = vmax.xlane.f32.xlu0 %v2011
    %v2013 = vpop.xlane.xlu0 %2012
    %v2014 = vsub.f32 %v2000, %v2010
    %v2015 = vsub.f32 %v2005, %v2013
    %v2016 = vmul.f32 %v2014, 1.442695
    %v2017 = vpow.pop %v2016
    %v2018 = vmul.f32 %v2015, 1.442695
    %v2019 = vpow.pop %v2018
    %v2020 = vsel %vm303, %v2017, 0.0
    %2021 = vadd.xlane.f32.xlu0 %v2020
    %v2022 = vpop.xlane.xlu0 %2021
    %v2023 = vsel %vm303, %v2019, 0.0
    %2024 = vadd.xlane.f32.xlu0 %v2023
    %v2025 = vpop.xlane.xlu0 %2024
    %v2026 = vrcp.pop %v2022
    %v2027 = vrcp.pop %v2025
    %v2028 = vmul.f32 %v2017, %v2026
    %v2029 = vmul.f32 %v2019, %v2027
    %2030 = vrot.lane.b32.xlu0 %v1499, 48
    %v2031 = vpop.permute.xlu0 %2030
    %2032 = vrot.lane.b32.xlu0 %v1504, 48
    %v2033 = vpop.permute.xlu0 %2032
    %v2037 = vsel %vm303, %v2028, 0
    %v2040 = vsel %vm303, %v2029, 0
    %2042 = vmatprep.subr.mxu0 0.0
    %2043 = vmatpush1.msra.mxu0 %v2031
    %2044 = vmatprep.subr.mxu0 0.0
    %2045 = vmatpush1.msra.mxu0 %v2033
    %2046 = vmatprep.subr.mxu0 0.0
    %2047 = vmatpush1.msra.mxu0 0.0
    %2048 = vmatprep.subr.mxu0 0.0
    %2049 = vmatpush1.msra.mxu0 0.0
    %2050 = vmatprep.subr.mxu0 0.0
    %2051 = vmatpush1.msra.mxu0 0.0
    %2052 = vmatprep.subr.mxu0 0.0
    %2053 = vmatpush1.msra.mxu0 0.0
    %2054 = vmatprep.subr.mxu0 0.0
    %2055 = vmatpush1.msra.mxu0 0.0
    %2056 = vmatprep.subr.mxu0 0.0
    %2057 = vmatpush1.msra.mxu0 0.0
    %2058 = vmatprep.subr.mxu0 0.0
    %2059 = vmatpush1.msra.mxu0 0.0
    %2060 = vmatprep.subr.mxu0 0.0
    %2061 = vmatpush1.msra.mxu0 0.0
    %2062 = vmatprep.subr.mxu0 0.0
    %2063 = vmatpush1.msra.mxu0 0.0
    %2064 = vmatprep.subr.mxu0 0.0
    %2065 = vmatpush1.msra.mxu0 0.0
    %2066 = vmatprep.subr.mxu0 0.0
    %2067 = vmatpush1.msra.mxu0 0.0
    %2068 = vmatprep.subr.mxu0 0.0
    %2069 = vmatpush1.msra.mxu0 0.0
    %2070 = vmatprep.subr.mxu0 0.0
    %2071 = vmatpush1.msra.mxu0 0.0
    %2072 = vmatprep.subr.mxu0 0.0
    %2073 = vmatpush1.msra.mxu0 0.0
    %2074 = vmatprep.subr.mxu0 0.0
    %2075 = vmatpush1.msra.mxu0 0.0
    %2076 = vmatprep.subr.mxu0 0.0
    %2077 = vmatpush1.msra.mxu0 0.0
    %2078 = vmatprep.subr.mxu0 0.0
    %2079 = vmatpush1.msra.mxu0 0.0
    %2080 = vmatprep.subr.mxu0 0.0
    %2081 = vmatpush1.msra.mxu0 0.0
    %2082 = vmatprep.subr.mxu0 0.0
    %2083 = vmatpush1.msra.mxu0 0.0
    %2084 = vmatprep.subr.mxu0 0.0
    %2085 = vmatpush1.msra.mxu0 0.0
    %2086 = vmatprep.subr.mxu0 0.0
    %2087 = vmatpush1.msra.mxu0 0.0
    %2088 = vmatprep.subr.mxu0 0.0
    %2089 = vmatpush1.msra.mxu0 0.0
    %2090 = vmatprep.subr.mxu0 0.0
    %2091 = vmatpush1.msra.mxu0 0.0
    %2092 = vmatprep.subr.mxu0 0.0
    %2093 = vmatpush1.msra.mxu0 0.0
    %2094 = vmatprep.subr.mxu0 0.0
    %2095 = vmatpush1.msra.mxu0 0.0
    %2096 = vmatprep.subr.mxu0 0.0
    %2097 = vmatpush1.msra.mxu0 0.0
    %2098 = vmatprep.subr.mxu0 0.0
    %2099 = vmatpush1.msra.mxu0 0.0
    %2100 = vmatprep.subr.mxu0 0.0
    %2101 = vmatpush1.msra.mxu0 0.0
    %2102 = vmatprep.subr.mxu0 0.0
    %2103 = vmatpush1.msra.mxu0 0.0
    %2104 = vmatprep.subr.mxu0 0.0
    %2105 = vmatpush1.msra.mxu0 0.0
    %2106 = vmatprep.mubr.f32.mxu0 0.0
    %2107 = vmatmul.mubr.f32.gmra.mrb[0].mxu0 %v2037
    %v2108 = vpop.f32.mrb[0].mxu0
    %v2109 = vadd.f32 0.0, %v2108
    %v2110 = vpop.f32.mrb[0].mxu0
    %2111 = vmatprep.mubr.f32.mxu0 0.0
    %2112 = vmatmul.mubr.f32.gmra.mrb[0].mxu0 %v2040
    %v2113 = vpop.f32.mrb[0].mxu0
    %v2114 = vadd.f32 0.0, %v2113
    %v2115 = vpop.f32.mrb[0].mxu0
    %2116 = vdwg.mxu0
    %2119 = vrot.lane.b32.xlu0 %v2109, 16
    %v2120 = vpop.permute.xlu0 %2119
    %2121 = vrot.lane.b32.xlu0 %v2114, 16
    %v2122 = vpop.permute.xlu0 %2121
    %2125 = vst.msk [vmem:[#allocation3] sm:$0xff] %vm834, %v2120
    %2126 = vst.msk [vmem:[#allocation3 + $0x8] sm:$0xff] %vm834, %v2122
    %2127 = vrot.lane.b32.xlu0 %v1499, 104
    %v2128 = vpop.permute.xlu0 %2127
    %2129 = vrot.lane.b32.xlu0 %v1504, 104
    %v2130 = vpop.permute.xlu0 %2129
    %2131 = vrot.lane.b32.xlu0 %v1499, 72
    %v2132 = vpop.permute.xlu0 %2131
    %2133 = vrot.lane.b32.xlu0 %v1504, 72
    %v2134 = vpop.permute.xlu0 %2133
    %v2135 = vsel %vm219, %v2128, 0
    %v2137 = vsel %vm219, %v2130, 0
    %v2139 = vsel %vm219, %v2132, 0
    %v2141 = vsel %vm219, %v2134, 0
    %2143 = vmatprep.subr.mxu0 0.0
    %2144 = vmatpush1.xpose.msra.mxu0 %v2139
    %2145 = vmatprep.subr.mxu0 0.0
    %2146 = vmatpush1.xpose.msra.mxu0 %v2141
    %2147 = vmatprep.subr.mxu0 0.0
    %2148 = vmatpush1.xpose.msra.mxu0 0.0
    %2149 = vmatprep.subr.mxu0 0.0
    %2150 = vmatpush1.xpose.msra.mxu0 0.0
    %2151 = vmatprep.subr.mxu0 0.0
    %2152 = vmatpush1.xpose.msra.mxu0 0.0
    %2153 = vmatprep.subr.mxu0 0.0
    %2154 = vmatpush1.xpose.msra.mxu0 0.0
    %2155 = vmatprep.subr.mxu0 0.0
    %2156 = vmatpush1.xpose.msra.mxu0 0.0
    %2157 = vmatprep.subr.mxu0 0.0
    %2158 = vmatpush1.xpose.msra.mxu0 0.0
    %2159 = vmatprep.subr.mxu0 0.0
    %2160 = vmatpush1.xpose.msra.mxu0 0.0
    %2161 = vmatprep.subr.mxu0 0.0
    %2162 = vmatpush1.xpose.msra.mxu0 0.0
    %2163 = vmatprep.subr.mxu0 0.0
    %2164 = vmatpush1.xpose.msra.mxu0 0.0
    %2165 = vmatprep.subr.mxu0 0.0
    %2166 = vmatpush1.xpose.msra.mxu0 0.0
    %2167 = vmatprep.subr.mxu0 0.0
    %2168 = vmatpush1.xpose.msra.mxu0 0.0
    %2169 = vmatprep.subr.mxu0 0.0
    %2170 = vmatpush1.xpose.msra.mxu0 0.0
    %2171 = vmatprep.subr.mxu0 0.0
    %2172 = vmatpush1.xpose.msra.mxu0 0.0
    %2173 = vmatprep.subr.mxu0 0.0
    %2174 = vmatpush1.xpose.msra.mxu0 0.0
    %2175 = vmatprep.subr.mxu0 0.0
    %2176 = vmatpush1.xpose.msra.mxu0 0.0
    %2177 = vmatprep.subr.mxu0 0.0
    %2178 = vmatpush1.xpose.msra.mxu0 0.0
    %2179 = vmatprep.subr.mxu0 0.0
    %2180 = vmatpush1.xpose.msra.mxu0 0.0
    %2181 = vmatprep.subr.mxu0 0.0
    %2182 = vmatpush1.xpose.msra.mxu0 0.0
    %2183 = vmatprep.subr.mxu0 0.0
    %2184 = vmatpush1.xpose.msra.mxu0 0.0
    %2185 = vmatprep.subr.mxu0 0.0
    %2186 = vmatpush1.xpose.msra.mxu0 0.0
    %2187 = vmatprep.subr.mxu0 0.0
    %2188 = vmatpush1.xpose.msra.mxu0 0.0
    %2189 = vmatprep.subr.mxu0 0.0
    %2190 = vmatpush1.xpose.msra.mxu0 0.0
    %2191 = vmatprep.subr.mxu0 0.0
    %2192 = vmatpush1.xpose.msra.mxu0 0.0
    %2193 = vmatprep.subr.mxu0 0.0
    %2194 = vmatpush1.xpose.msra.mxu0 0.0
    %2195 = vmatprep.subr.mxu0 0.0
    %2196 = vmatpush1.xpose.msra.mxu0 0.0
    %2197 = vmatprep.subr.mxu0 0.0
    %2198 = vmatpush1.xpose.msra.mxu0 0.0
    %2199 = vmatprep.subr.mxu0 0.0
    %2200 = vmatpush1.xpose.msra.mxu0 0.0
    %2201 = vmatprep.subr.mxu0 0.0
    %2202 = vmatpush1.xpose.msra.mxu0 0.0
    %2203 = vmatprep.subr.mxu0 0.0
    %2204 = vmatpush1.xpose.msra.mxu0 0.0
    %2205 = vmatprep.subr.mxu0 0.0
    %2206 = vmatpush1.xpose.msra.mxu0 0.0
    %2207 = vmatprep.mubr.f32.mxu0 0.0
    %2208 = vmatmul.mubr.f32.gmra.mrb[0].mxu0 %v2135
    %v2209 = vpop.f32.mrb[0].mxu0
    %v2210 = vadd.f32 %v105, %v2209
    %v2211 = vpop.f32.mrb[0].mxu0
    %2212 = vmatprep.mubr.f32.mxu0 0.0
    %2213 = vmatmul.mubr.f32.gmra.mrb[0].mxu0 %v2137
    %v2214 = vpop.f32.mrb[0].mxu0
    %v2215 = vadd.f32 %v106, %v2214
    %v2216 = vpop.f32.mrb[0].mxu0
    %2217 = vdwg.mxu0
    %v2218 = vsel %vm303, %v2210, -inf
    %2219 = vmax.xlane.f32.xlu0 %v2218
    %v2220 = vpop.xlane.xlu0 %2219
    %v2221 = vsel %vm303, %v2215, -inf
    %2222 = vmax.xlane.f32.xlu0 %v2221
    %v2223 = vpop.xlane.xlu0 %2222
    %v2224 = vsub.f32 %v2210, %v2220
    %v2225 = vsub.f32 %v2215, %v2223
    %v2226 = vmul.f32 %v2224, 1.442695
    %v2227 = vpow.pop %v2226
    %v2228 = vmul.f32 %v2225, 1.442695
    %v2229 = vpow.pop %v2228
    %v2230 = vsel %vm303, %v2227, 0.0
    %2231 = vadd.xlane.f32.xlu0 %v2230
    %v2232 = vpop.xlane.xlu0 %2231
    %v2233 = vsel %vm303, %v2229, 0.0
    %2234 = vadd.xlane.f32.xlu0 %v2233
    %v2235 = vpop.xlane.xlu0 %2234
    %v2236 = vrcp.pop %v2232
    %v2237 = vrcp.pop %v2235
    %v2238 = vmul.f32 %v2227, %v2236
    %v2239 = vmul.f32 %v2229, %v2237
    %2240 = vrot.lane.b32.xlu0 %v1499, 40
    %v2241 = vpop.permute.xlu0 %2240
    %2242 = vrot.lane.b32.xlu0 %v1504, 40
    %v2243 = vpop.permute.xlu0 %2242
    %v2247 = vsel %vm303, %v2238, 0
    %v2250 = vsel %vm303, %v2239, 0
    %2252 = vmatprep.subr.mxu0 0.0
    %2253 = vmatpush1.msra.mxu0 %v2241
    %2254 = vmatprep.subr.mxu0 0.0
    %2255 = vmatpush1.msra.mxu0 %v2243
    %2256 = vmatprep.subr.mxu0 0.0
    %2257 = vmatpush1.msra.mxu0 0.0
    %2258 = vmatprep.subr.mxu0 0.0
    %2259 = vmatpush1.msra.mxu0 0.0
    %2260 = vmatprep.subr.mxu0 0.0
    %2261 = vmatpush1.msra.mxu0 0.0
    %2262 = vmatprep.subr.mxu0 0.0
    %2263 = vmatpush1.msra.mxu0 0.0
    %2264 = vmatprep.subr.mxu0 0.0
    %2265 = vmatpush1.msra.mxu0 0.0
    %2266 = vmatprep.subr.mxu0 0.0
    %2267 = vmatpush1.msra.mxu0 0.0
    %2268 = vmatprep.subr.mxu0 0.0
    %2269 = vmatpush1.msra.mxu0 0.0
    %2270 = vmatprep.subr.mxu0 0.0
    %2271 = vmatpush1.msra.mxu0 0.0
    %2272 = vmatprep.subr.mxu0 0.0
    %2273 = vmatpush1.msra.mxu0 0.0
    %2274 = vmatprep.subr.mxu0 0.0
    %2275 = vmatpush1.msra.mxu0 0.0
    %2276 = vmatprep.subr.mxu0 0.0
    %2277 = vmatpush1.msra.mxu0 0.0
    %2278 = vmatprep.subr.mxu0 0.0
    %2279 = vmatpush1.msra.mxu0 0.0
    %2280 = vmatprep.subr.mxu0 0.0
    %2281 = vmatpush1.msra.mxu0 0.0
    %2282 = vmatprep.subr.mxu0 0.0
    %2283 = vmatpush1.msra.mxu0 0.0
    %2284 = vmatprep.subr.mxu0 0.0
    %2285 = vmatpush1.msra.mxu0 0.0
    %2286 = vmatprep.subr.mxu0 0.0
    %2287 = vmatpush1.msra.mxu0 0.0
    %2288 = vmatprep.subr.mxu0 0.0
    %2289 = vmatpush1.msra.mxu0 0.0
    %2290 = vmatprep.subr.mxu0 0.0
    %2291 = vmatpush1.msra.mxu0 0.0
    %2292 = vmatprep.subr.mxu0 0.0
    %2293 = vmatpush1.msra.mxu0 0.0
    %2294 = vmatprep.subr.mxu0 0.0
    %2295 = vmatpush1.msra.mxu0 0.0
    %2296 = vmatprep.subr.mxu0 0.0
    %2297 = vmatpush1.msra.mxu0 0.0
    %2298 = vmatprep.subr.mxu0 0.0
    %2299 = vmatpush1.msra.mxu0 0.0
    %2300 = vmatprep.subr.mxu0 0.0
    %2301 = vmatpush1.msra.mxu0 0.0
    %2302 = vmatprep.subr.mxu0 0.0
    %2303 = vmatpush1.msra.mxu0 0.0
    %2304 = vmatprep.subr.mxu0 0.0
    %2305 = vmatpush1.msra.mxu0 0.0
    %2306 = vmatprep.subr.mxu0 0.0
    %2307 = vmatpush1.msra.mxu0 0.0
    %2308 = vmatprep.subr.mxu0 0.0
    %2309 = vmatpush1.msra.mxu0 0.0
    %2310 = vmatprep.subr.mxu0 0.0
    %2311 = vmatpush1.msra.mxu0 0.0
    %2312 = vmatprep.subr.mxu0 0.0
    %2313 = vmatpush1.msra.mxu0 0.0
    %2314 = vmatprep.subr.mxu0 0.0
    %2315 = vmatpush1.msra.mxu0 0.0
    %2316 = vmatprep.mubr.f32.mxu0 0.0
    %2317 = vmatmul.mubr.f32.gmra.mrb[0].mxu0 %v2247
    %v2318 = vpop.f32.mrb[0].mxu0
    %v2319 = vadd.f32 0.0, %v2318
    %v2320 = vpop.f32.mrb[0].mxu0
    %2321 = vmatprep.mubr.f32.mxu0 0.0
    %2322 = vmatmul.mubr.f32.gmra.mrb[0].mxu0 %v2250
    %v2323 = vpop.f32.mrb[0].mxu0
    %v2324 = vadd.f32 0.0, %v2323
    %v2325 = vpop.f32.mrb[0].mxu0
    %2326 = vdwg.mxu0
    %2329 = vrot.lane.b32.xlu0 %v2319, 24
    %v2330 = vpop.permute.xlu0 %2329
    %2331 = vrot.lane.b32.xlu0 %v2324, 24
    %v2332 = vpop.permute.xlu0 %2331
    %2335 = vst.msk [vmem:[#allocation3] sm:$0xff] %vm1045, %v2330
    %2336 = vst.msk [vmem:[#allocation3 + $0x8] sm:$0xff] %vm1045, %v2332
    %v2337 = vld [vmem:[#allocation3] sm:$0xff]
    %v2338 = vld [vmem:[#allocation3 + $0x8] sm:$0xff]
    %2343 = vrot.lane.b32.xlu0 %v1402, 32
    %v2344 = vpop.permute.xlu0 %2343
    %2345 = vrot.lane.b32.xlu0 %v1403, 32
    %v2346 = vpop.permute.xlu0 %2345
    %2347 = vrot.lane.b32.xlu0 %v1404, 32
    %v2348 = vpop.permute.xlu0 %2347
    %2349 = vrot.lane.b32.xlu0 %v1405, 32
    %v2350 = vpop.permute.xlu0 %2349
    %v2356 = vsel %vm131, %v2337, 0
    %v2359 = vsel %vm131, %v2338, 0
    %2361 = vmatprep.subr.mxu0 0.0
    %2362 = vmatpush1.msra.mxu0 %v2344
    %2363 = vmatprep.subr.mxu0 0.0
    %2364 = vmatpush1.msra.mxu0 %v2346
    %2365 = vmatprep.subr.mxu0 0.0
    %2366 = vmatpush1.msra.mxu0 %v2348
    %2367 = vmatprep.subr.mxu0 0.0
    %2368 = vmatpush1.msra.mxu0 %v2350
    %2369 = vmatprep.subr.mxu0 0.0
    %2370 = vmatpush1.msra.mxu0 0.0
    %2371 = vmatprep.subr.mxu0 0.0
    %2372 = vmatpush1.msra.mxu0 0.0
    %2373 = vmatprep.subr.mxu0 0.0
    %2374 = vmatpush1.msra.mxu0 0.0
    %2375 = vmatprep.subr.mxu0 0.0
    %2376 = vmatpush1.msra.mxu0 0.0
    %2377 = vmatprep.subr.mxu0 0.0
    %2378 = vmatpush1.msra.mxu0 0.0
    %2379 = vmatprep.subr.mxu0 0.0
    %2380 = vmatpush1.msra.mxu0 0.0
    %2381 = vmatprep.subr.mxu0 0.0
    %2382 = vmatpush1.msra.mxu0 0.0
    %2383 = vmatprep.subr.mxu0 0.0
    %2384 = vmatpush1.msra.mxu0 0.0
    %2385 = vmatprep.subr.mxu0 0.0
    %2386 = vmatpush1.msra.mxu0 0.0
    %2387 = vmatprep.subr.mxu0 0.0
    %2388 = vmatpush1.msra.mxu0 0.0
    %2389 = vmatprep.subr.mxu0 0.0
    %2390 = vmatpush1.msra.mxu0 0.0
    %2391 = vmatprep.subr.mxu0 0.0
    %2392 = vmatpush1.msra.mxu0 0.0
    %2393 = vmatprep.subr.mxu0 0.0
    %2394 = vmatpush1.msra.mxu0 0.0
    %2395 = vmatprep.subr.mxu0 0.0
    %2396 = vmatpush1.msra.mxu0 0.0
    %2397 = vmatprep.subr.mxu0 0.0
    %2398 = vmatpush1.msra.mxu0 0.0
    %2399 = vmatprep.subr.mxu0 0.0
    %2400 = vmatpush1.msra.mxu0 0.0
    %2401 = vmatprep.subr.mxu0 0.0
    %2402 = vmatpush1.msra.mxu0 0.0
    %2403 = vmatprep.subr.mxu0 0.0
    %2404 = vmatpush1.msra.mxu0 0.0
    %2405 = vmatprep.subr.mxu0 0.0
    %2406 = vmatpush1.msra.mxu0 0.0
    %2407 = vmatprep.subr.mxu0 0.0
    %2408 = vmatpush1.msra.mxu0 0.0
    %2409 = vmatprep.subr.mxu0 0.0
    %2410 = vmatpush1.msra.mxu0 0.0
    %2411 = vmatprep.subr.mxu0 0.0
    %2412 = vmatpush1.msra.mxu0 0.0
    %2413 = vmatprep.subr.mxu0 0.0
    %2414 = vmatpush1.msra.mxu0 0.0
    %2415 = vmatprep.subr.mxu0 0.0
    %2416 = vmatpush1.msra.mxu0 0.0
    %2417 = vmatprep.subr.mxu0 0.0
    %2418 = vmatpush1.msra.mxu0 0.0
    %2419 = vmatprep.subr.mxu0 0.0
    %2420 = vmatpush1.msra.mxu0 0.0
    %2421 = vmatprep.subr.mxu0 0.0
    %2422 = vmatpush1.msra.mxu0 0.0
    %2423 = vmatprep.subr.mxu0 0.0
    %2424 = vmatpush1.msra.mxu0 0.0
    %2425 = vmatprep.mubr.f32.mxu0 0.0
    %2426 = vmatmul.mubr.f32.gmra.mrb[0].mxu0 %v2356
    %v2427 = vpop.f32.mrb[0].mxu0
    %v2428 = vadd.f32 0.0, %v2427
    %v2429 = vpop.f32.mrb[0].mxu0
    %2430 = vmatprep.mubr.f32.mxu0 0.0
    %2431 = vmatmul.mubr.f32.gmra.mrb[0].mxu0 %v2359
    %v2432 = vpop.f32.mrb[0].mxu0
    %v2433 = vadd.f32 0.0, %v2432
    %v2434 = vpop.f32.mrb[0].mxu0
    %2435 = vdwg.mxu0
    %v2436 = vadd.f32 %v1400, %v2428
    %v2437 = vadd.f32 %v1401, %v2433
    %v2438 = vlaneseq
    %v2439 = vshrl.u32 %v2438, 7
    %v2440 = vsub.s32 0, %v2439
    %v2441 = vrot.slane %v1415, %v2440
    %v2442 = vadd.f32 %v2436, %v2441
    %v2443 = vadd.f32 %v2437, %v2441
    %v2444 = vsel %vm131, %v2442, 0.0
    %2445 = vadd.xlane.f32.xlu0 %v2444
    %v2446 = vpop.xlane.xlu0 %2445
    %v2447 = vsel %vm131, %v2443, 0.0
    %2448 = vadd.xlane.f32.xlu0 %v2447
    %v2449 = vpop.xlane.xlu0 %2448
    %v2450 = vmul.f32 %v2446, %v1161
    %v2451 = vmul.f32 %v2449, %v1161
    %v2452 = vsub.f32 %v2442, %v2450
    %v2453 = vsub.f32 %v2443, %v2451
    %v2454 = vmul.f32 %v2452, %v2452
    %v2455 = vmul.f32 %v2453, %v2453
    %v2456 = vsel %vm131, %v2454, 0.0
    %2457 = vadd.xlane.f32.xlu0 %v2456
    %v2458 = vpop.xlane.xlu0 %2457
    %v2459 = vsel %vm131, %v2455, 0.0
    %2460 = vadd.xlane.f32.xlu0 %v2459
    %v2461 = vpop.xlane.xlu0 %2460
    %v2462 = vmul.f32 %v2458, %v1161
    %v2463 = vmul.f32 %v2461, %v1161
    %v2464 = vadd.f32 %v2462, 1e-05
    %v2465 = vadd.f32 %v2463, 1e-05
    %v2466 = vrsqrt.pop %v2464
    %v2467 = vrsqrt.pop %v2465
    %v2468 = vmul.f32 %v2452, %v2466
    %v2469 = vmul.f32 %v2453, %v2467
    %v2470 = vlaneseq
    %v2471 = vshrl.u32 %v2470, 7
    %v2472 = vsub.s32 0, %v2471
    %v2473 = vrot.slane %v1416, %v2472
    %v2474 = vmul.f32 %v2468, %v2473
    %v2475 = vmul.f32 %v2469, %v2473
    %v2476 = vlaneseq
    %v2477 = vshrl.u32 %v2476, 7
    %v2478 = vsub.s32 0, %v2477
    %v2479 = vrot.slane %v1417, %v2478
    %v2480 = vadd.f32 %v2474, %v2479
    %v2481 = vadd.f32 %v2475, %v2479
    %v2482 = vlaneseq
    %v2483 = vshrl.u32 %v2482, 7
    %v2484 = vsub.s32 0, %v2483
    %v2485 = vrot.slane %v1418, %v2484
    %v2487 = vsel %vm131, %v2480, 0
    %v2490 = vsel %vm131, %v2481, 0
    %2492 = vmatprep.subr.mxu0 0.0
    %2493 = vmatpush1.msra.mxu0 %v1406
    %2494 = vmatprep.subr.mxu0 0.0
    %2495 = vmatpush1.msra.mxu0 %v1407
    %2496 = vmatprep.subr.mxu0 0.0
    %2497 = vmatpush1.msra.mxu0 %v1408
    %2498 = vmatprep.subr.mxu0 0.0
    %2499 = vmatpush1.msra.mxu0 %v1409
    %2500 = vmatprep.subr.mxu0 0.0
    %2501 = vmatpush1.msra.mxu0 0.0
    %2502 = vmatprep.subr.mxu0 0.0
    %2503 = vmatpush1.msra.mxu0 0.0
    %2504 = vmatprep.subr.mxu0 0.0
    %2505 = vmatpush1.msra.mxu0 0.0
    %2506 = vmatprep.subr.mxu0 0.0
    %2507 = vmatpush1.msra.mxu0 0.0
    %2508 = vmatprep.subr.mxu0 0.0
    %2509 = vmatpush1.msra.mxu0 0.0
    %2510 = vmatprep.subr.mxu0 0.0
    %2511 = vmatpush1.msra.mxu0 0.0
    %2512 = vmatprep.subr.mxu0 0.0
    %2513 = vmatpush1.msra.mxu0 0.0
    %2514 = vmatprep.subr.mxu0 0.0
    %2515 = vmatpush1.msra.mxu0 0.0
    %2516 = vmatprep.subr.mxu0 0.0
    %2517 = vmatpush1.msra.mxu0 0.0
    %2518 = vmatprep.subr.mxu0 0.0
    %2519 = vmatpush1.msra.mxu0 0.0
    %2520 = vmatprep.subr.mxu0 0.0
    %2521 = vmatpush1.msra.mxu0 0.0
    %2522 = vmatprep.subr.mxu0 0.0
    %2523 = vmatpush1.msra.mxu0 0.0
    %2524 = vmatprep.subr.mxu0 0.0
    %2525 = vmatpush1.msra.mxu0 0.0
    %2526 = vmatprep.subr.mxu0 0.0
    %2527 = vmatpush1.msra.mxu0 0.0
    %2528 = vmatprep.subr.mxu0 0.0
    %2529 = vmatpush1.msra.mxu0 0.0
    %2530 = vmatprep.subr.mxu0 0.0
    %2531 = vmatpush1.msra.mxu0 0.0
    %2532 = vmatprep.subr.mxu0 0.0
    %2533 = vmatpush1.msra.mxu0 0.0
    %2534 = vmatprep.subr.mxu0 0.0
    %2535 = vmatpush1.msra.mxu0 0.0
    %2536 = vmatprep.subr.mxu0 0.0
    %2537 = vmatpush1.msra.mxu0 0.0
    %2538 = vmatprep.subr.mxu0 0.0
    %2539 = vmatpush1.msra.mxu0 0.0
    %2540 = vmatprep.subr.mxu0 0.0
    %2541 = vmatpush1.msra.mxu0 0.0
    %2542 = vmatprep.subr.mxu0 0.0
    %2543 = vmatpush1.msra.mxu0 0.0
    %2544 = vmatprep.subr.mxu0 0.0
    %2545 = vmatpush1.msra.mxu0 0.0
    %2546 = vmatprep.subr.mxu0 0.0
    %2547 = vmatpush1.msra.mxu0 0.0
    %2548 = vmatprep.subr.mxu0 0.0
    %2549 = vmatpush1.msra.mxu0 0.0
    %2550 = vmatprep.subr.mxu0 0.0
    %2551 = vmatpush1.msra.mxu0 0.0
    %2552 = vmatprep.subr.mxu0 0.0
    %2553 = vmatpush1.msra.mxu0 0.0
    %2554 = vmatprep.subr.mxu0 0.0
    %2555 = vmatpush1.msra.mxu0 0.0
    %2556 = vmatprep.mubr.f32.mxu0 0.0
    %2557 = vmatmul.mubr.f32.gmra.mrb[0].mxu0 %v2487
    %v2558 = vpop.f32.mrb[0].mxu0
    %v2559 = vadd.f32 %v2485, %v2558
    %v2560 = vpop.f32.mrb[0].mxu0
    %2561 = vmatprep.mubr.f32.mxu0 0.0
    %2562 = vmatmul.mubr.f32.gmra.mrb[0].mxu0 %v2490
    %v2563 = vpop.f32.mrb[0].mxu0
    %v2564 = vadd.f32 %v2485, %v2563
    %v2565 = vpop.f32.mrb[0].mxu0
    %2566 = vdwg.mxu0
    %v2567 = vmax.f32 %v2559, 0.0
    %v2568 = vmax.f32 %v2564, 0.0
    %2569 = vmatprep.subr.mxu0 0.0
    %2570 = vmatpush1.xpose.msra.mxu0 %v1410
    %2571 = vmatprep.subr.mxu0 0.0
    %2572 = vmatpush1.xpose.msra.mxu0 %v1411
    %2573 = vmatprep.subr.mxu0 0.0
    %2574 = vmatpush1.xpose.msra.mxu0 %v1412
    %2575 = vmatprep.subr.mxu0 0.0
    %2576 = vmatpush1.xpose.msra.mxu0 %v1413
    %2577 = vmatprep.subr.mxu0 0.0
    %2578 = vmatpush1.xpose.msra.mxu0 0.0
    %2579 = vmatprep.subr.mxu0 0.0
    %2580 = vmatpush1.xpose.msra.mxu0 0.0
    %2581 = vmatprep.subr.mxu0 0.0
    %2582 = vmatpush1.xpose.msra.mxu0 0.0
    %2583 = vmatprep.subr.mxu0 0.0
    %2584 = vmatpush1.xpose.msra.mxu0 0.0
    %2585 = vmatprep.subr.mxu0 0.0
    %2586 = vmatpush1.xpose.msra.mxu0 0.0
    %2587 = vmatprep.subr.mxu0 0.0
    %2588 = vmatpush1.xpose.msra.mxu0 0.0
    %2589 = vmatprep.subr.mxu0 0.0
    %2590 = vmatpush1.xpose.msra.mxu0 0.0
    %2591 = vmatprep.subr.mxu0 0.0
    %2592 = vmatpush1.xpose.msra.mxu0 0.0
    %2593 = vmatprep.subr.mxu0 0.0
    %2594 = vmatpush1.xpose.msra.mxu0 0.0
    %2595 = vmatprep.subr.mxu0 0.0
    %2596 = vmatpush1.xpose.msra.mxu0 0.0
    %2597 = vmatprep.subr.mxu0 0.0
    %2598 = vmatpush1.xpose.msra.mxu0 0.0
    %2599 = vmatprep.subr.mxu0 0.0
    %2600 = vmatpush1.xpose.msra.mxu0 0.0
    %2601 = vmatprep.subr.mxu0 0.0
    %2602 = vmatpush1.xpose.msra.mxu0 0.0
    %2603 = vmatprep.subr.mxu0 0.0
    %2604 = vmatpush1.xpose.msra.mxu0 0.0
    %2605 = vmatprep.subr.mxu0 0.0
    %2606 = vmatpush1.xpose.msra.mxu0 0.0
    %2607 = vmatprep.subr.mxu0 0.0
    %2608 = vmatpush1.xpose.msra.mxu0 0.0
    %2609 = vmatprep.subr.mxu0 0.0
    %2610 = vmatpush1.xpose.msra.mxu0 0.0
    %2611 = vmatprep.subr.mxu0 0.0
    %2612 = vmatpush1.xpose.msra.mxu0 0.0
    %2613 = vmatprep.subr.mxu0 0.0
    %2614 = vmatpush1.xpose.msra.mxu0 0.0
    %2615 = vmatprep.subr.mxu0 0.0
    %2616 = vmatpush1.xpose.msra.mxu0 0.0
    %2617 = vmatprep.subr.mxu0 0.0
    %2618 = vmatpush1.xpose.msra.mxu0 0.0
    %2619 = vmatprep.subr.mxu0 0.0
    %2620 = vmatpush1.xpose.msra.mxu0 0.0
    %2621 = vmatprep.subr.mxu0 0.0
    %2622 = vmatpush1.xpose.msra.mxu0 0.0
    %2623 = vmatprep.subr.mxu0 0.0
    %2624 = vmatpush1.xpose.msra.mxu0 0.0
    %2625 = vmatprep.subr.mxu0 0.0
    %2626 = vmatpush1.xpose.msra.mxu0 0.0
    %2627 = vmatprep.subr.mxu0 0.0
    %2628 = vmatpush1.xpose.msra.mxu0 0.0
    %2629 = vmatprep.subr.mxu0 0.0
    %2630 = vmatpush1.xpose.msra.mxu0 0.0
    %2631 = vmatprep.subr.mxu0 0.0
    %2632 = vmatpush1.xpose.msra.mxu0 0.0
    %2633 = vmatprep.mubr.f32.mxu0 0.0
    %2634 = vmatmul.mubr.f32.gmra.mrb[0].mxu0 %v2567
    %v2635 = vpop.f32.mrb[0].mxu0
    %v2636 = vadd.f32 0.0, %v2635
    %v2637 = vpop.f32.mrb[0].mxu0
    %2638 = vmatprep.mubr.f32.mxu0 0.0
    %2639 = vmatmul.mubr.f32.gmra.mrb[0].mxu0 %v2568
    %v2640 = vpop.f32.mrb[0].mxu0
    %v2641 = vadd.f32 0.0, %v2640
    %v2642 = vpop.f32.mrb[0].mxu0
    %2643 = vdwg.mxu0
    %v2644 = vadd.f32 %v2480, %v2636
    %v2645 = vadd.f32 %v2481, %v2641
    %v2646 = vlaneseq
    %v2647 = vshrl.u32 %v2646, 7
    %v2648 = vsub.s32 0, %v2647
    %v2649 = vrot.slane %v1419, %v2648
    %v2650 = vadd.f32 %v2644, %v2649
    %v2651 = vadd.f32 %v2645, %v2649
    %v2652 = vsel %vm131, %v2650, 0.0
    %2653 = vadd.xlane.f32.xlu0 %v2652
    %v2654 = vpop.xlane.xlu0 %2653
    %v2655 = vsel %vm131, %v2651, 0.0
    %2656 = vadd.xlane.f32.xlu0 %v2655
    %v2657 = vpop.xlane.xlu0 %2656
    %v2658 = vmul.f32 %v2654, %v1161
    %v2659 = vmul.f32 %v2657, %v1161
    %v2660 = vsub.f32 %v2650, %v2658
    %v2661 = vsub.f32 %v2651, %v2659
    %v2662 = vmul.f32 %v2660, %v2660
    %v2663 = vmul.f32 %v2661, %v2661
    %v2664 = vsel %vm131, %v2662, 0.0
    %2665 = vadd.xlane.f32.xlu0 %v2664
    %v2666 = vpop.xlane.xlu0 %2665
    %v2667 = vsel %vm131, %v2663, 0.0
    %2668 = vadd.xlane.f32.xlu0 %v2667
    %v2669 = vpop.xlane.xlu0 %2668
    %v2670 = vmul.f32 %v2666, %v1161
    %v2671 = vmul.f32 %v2669, %v1161
    %v2672 = vadd.f32 %v2670, 1e-05
    %v2673 = vadd.f32 %v2671, 1e-05
    %v2674 = vrsqrt.pop %v2672
    %v2675 = vrsqrt.pop %v2673
    %v2676 = vmul.f32 %v2660, %v2674
    %v2677 = vmul.f32 %v2661, %v2675
    %v2678 = vlaneseq
    %v2679 = vshrl.u32 %v2678, 7
    %v2680 = vsub.s32 0, %v2679
    %v2681 = vrot.slane %v1420, %v2680
    %v2682 = vmul.f32 %v2676, %v2681
    %v2683 = vmul.f32 %v2677, %v2681
    %v2684 = vlaneseq
    %v2685 = vshrl.u32 %v2684, 7
    %v2686 = vsub.s32 0, %v2685
    %v2687 = vrot.slane %v1421, %v2686
    %v2688 = vadd.f32 %v2682, %v2687
    %v2689 = vadd.f32 %v2683, %v2687
    %v2690 = vld [vmem:[#allocation4 + $0xc0] sm:$0xff]
    %v2691 = vld [vmem:[#allocation4 + $0xc8] sm:$0xff]
    %v2692 = vld [vmem:[#allocation4 + $0xd0] sm:$0xff]
    %v2693 = vld [vmem:[#allocation4 + $0xd8] sm:$0xff]
    %v2694 = vld [vmem:[#allocation7 + $0x10] sm:$0x1]
    %v2695 = vld [vmem:[#allocation7 + $0x11] sm:$0x1]
    %v2696 = vld [vmem:[#allocation7 + $0x13] sm:$0x1]
    %v2697 = vmul.f32 %v2696, 1.442695
    %v2698 = vpow.pop %v2697
    %v2699 = vmax.f32 %v2698, 1e-10
    %v2700 = vrcp.pop %v2699
    %v2701 = vmul.f32 0.5, %v2700
    %v2702 = vlaneseq
    %v2703 = vshrl.u32 %v2702, 7
    %v2704 = vsub.s32 0, %v2703
    %v2705 = vrot.slane %v2694, %v2704
    %v2707 = vsel %vm131, %v2688, 0
    %v2710 = vsel %vm131, %v2689, 0
    %2712 = vmatprep.subr.mxu0 0.0
    %2713 = vmatpush1.msra.mxu0 %v2690
    %2714 = vmatprep.subr.mxu0 0.0
    %2715 = vmatpush1.msra.mxu0 %v2691
    %2716 = vmatprep.subr.mxu0 0.0
    %2717 = vmatpush1.msra.mxu0 %v2692
    %2718 = vmatprep.subr.mxu0 0.0
    %2719 = vmatpush1.msra.mxu0 %v2693
    %2720 = vmatprep.subr.mxu0 0.0
    %2721 = vmatpush1.msra.mxu0 0.0
    %2722 = vmatprep.subr.mxu0 0.0
    %2723 = vmatpush1.msra.mxu0 0.0
    %2724 = vmatprep.subr.mxu0 0.0
    %2725 = vmatpush1.msra.mxu0 0.0
    %2726 = vmatprep.subr.mxu0 0.0
    %2727 = vmatpush1.msra.mxu0 0.0
    %2728 = vmatprep.subr.mxu0 0.0
    %2729 = vmatpush1.msra.mxu0 0.0
    %2730 = vmatprep.subr.mxu0 0.0
    %2731 = vmatpush1.msra.mxu0 0.0
    %2732 = vmatprep.subr.mxu0 0.0
    %2733 = vmatpush1.msra.mxu0 0.0
    %2734 = vmatprep.subr.mxu0 0.0
    %2735 = vmatpush1.msra.mxu0 0.0
    %2736 = vmatprep.subr.mxu0 0.0
    %2737 = vmatpush1.msra.mxu0 0.0
    %2738 = vmatprep.subr.mxu0 0.0
    %2739 = vmatpush1.msra.mxu0 0.0
    %2740 = vmatprep.subr.mxu0 0.0
    %2741 = vmatpush1.msra.mxu0 0.0
    %2742 = vmatprep.subr.mxu0 0.0
    %2743 = vmatpush1.msra.mxu0 0.0
    %2744 = vmatprep.subr.mxu0 0.0
    %2745 = vmatpush1.msra.mxu0 0.0
    %2746 = vmatprep.subr.mxu0 0.0
    %2747 = vmatpush1.msra.mxu0 0.0
    %2748 = vmatprep.subr.mxu0 0.0
    %2749 = vmatpush1.msra.mxu0 0.0
    %2750 = vmatprep.subr.mxu0 0.0
    %2751 = vmatpush1.msra.mxu0 0.0
    %2752 = vmatprep.subr.mxu0 0.0
    %2753 = vmatpush1.msra.mxu0 0.0
    %2754 = vmatprep.subr.mxu0 0.0
    %2755 = vmatpush1.msra.mxu0 0.0
    %2756 = vmatprep.subr.mxu0 0.0
    %2757 = vmatpush1.msra.mxu0 0.0
    %2758 = vmatprep.subr.mxu0 0.0
    %2759 = vmatpush1.msra.mxu0 0.0
    %2760 = vmatprep.subr.mxu0 0.0
    %2761 = vmatpush1.msra.mxu0 0.0
    %2762 = vmatprep.subr.mxu0 0.0
    %2763 = vmatpush1.msra.mxu0 0.0
    %2764 = vmatprep.subr.mxu0 0.0
    %2765 = vmatpush1.msra.mxu0 0.0
    %2766 = vmatprep.subr.mxu0 0.0
    %2767 = vmatpush1.msra.mxu0 0.0
    %2768 = vmatprep.subr.mxu0 0.0
    %2769 = vmatpush1.msra.mxu0 0.0
    %2770 = vmatprep.subr.mxu0 0.0
    %2771 = vmatpush1.msra.mxu0 0.0
    %2772 = vmatprep.subr.mxu0 0.0
    %2773 = vmatpush1.msra.mxu0 0.0
    %2774 = vmatprep.subr.mxu0 0.0
    %2775 = vmatpush1.msra.mxu0 0.0
    %2776 = vmatprep.mubr.f32.mxu0 0.0
    %2777 = vmatmul.mubr.f32.gmra.mrb[0].mxu0 %v2707
    %v2778 = vpop.f32.mrb[0].mxu0
    %v2779 = vadd.f32 %v2705, %v2778
    %v2780 = vpop.f32.mrb[0].mxu0
    %2781 = vmatprep.mubr.f32.mxu0 0.0
    %2782 = vmatmul.mubr.f32.gmra.mrb[0].mxu0 %v2710
    %v2783 = vpop.f32.mrb[0].mxu0
    %v2784 = vadd.f32 %v2705, %v2783
    %v2785 = vpop.f32.mrb[0].mxu0
    %2786 = vdwg.mxu0
    %v2787 = vmax.f32 %v2779, 0.0
    %v2788 = vmax.f32 %v2784, 0.0
    %v2789 = vlaneseq
    %v2790 = vshrl.u32 %v2789, 7
    %v2791 = vsub.s32 0, %v2790
    %v2792 = vrot.slane %v2695, %v2791
    %2797 = vrot.lane.b32.xlu0 %v2690, 96
    %v2798 = vpop.permute.xlu0 %2797
    %2799 = vrot.lane.b32.xlu0 %v2691, 96
    %v2800 = vpop.permute.xlu0 %2799
    %2801 = vrot.lane.b32.xlu0 %v2692, 96
    %v2802 = vpop.permute.xlu0 %2801
    %2803 = vrot.lane.b32.xlu0 %v2693, 96
    %v2804 = vpop.permute.xlu0 %2803
    %v2810 = vsel %vm131, %v2787, 0
    %v2813 = vsel %vm131, %v2788, 0
    %2815 = vmatprep.subr.mxu0 0.0
    %2816 = vmatpush1.msra.mxu0 %v2798
    %2817 = vmatprep.subr.mxu0 0.0
    %2818 = vmatpush1.msra.mxu0 %v2800
    %2819 = vmatprep.subr.mxu0 0.0
    %2820 = vmatpush1.msra.mxu0 %v2802
    %2821 = vmatprep.subr.mxu0 0.0
    %2822 = vmatpush1.msra.mxu0 %v2804
    %2823 = vmatprep.subr.mxu0 0.0
    %2824 = vmatpush1.msra.mxu0 0.0
    %2825 = vmatprep.subr.mxu0 0.0
    %2826 = vmatpush1.msra.mxu0 0.0
    %2827 = vmatprep.subr.mxu0 0.0
    %2828 = vmatpush1.msra.mxu0 0.0
    %2829 = vmatprep.subr.mxu0 0.0
    %2830 = vmatpush1.msra.mxu0 0.0
    %2831 = vmatprep.subr.mxu0 0.0
    %2832 = vmatpush1.msra.mxu0 0.0
    %2833 = vmatprep.subr.mxu0 0.0
    %2834 = vmatpush1.msra.mxu0 0.0
    %2835 = vmatprep.subr.mxu0 0.0
    %2836 = vmatpush1.msra.mxu0 0.0
    %2837 = vmatprep.subr.mxu0 0.0
    %2838 = vmatpush1.msra.mxu0 0.0
    %2839 = vmatprep.subr.mxu0 0.0
    %2840 = vmatpush1.msra.mxu0 0.0
    %2841 = vmatprep.subr.mxu0 0.0
    %2842 = vmatpush1.msra.mxu0 0.0
    %2843 = vmatprep.subr.mxu0 0.0
    %2844 = vmatpush1.msra.mxu0 0.0
    %2845 = vmatprep.subr.mxu0 0.0
    %2846 = vmatpush1.msra.mxu0 0.0
    %2847 = vmatprep.subr.mxu0 0.0
    %2848 = vmatpush1.msra.mxu0 0.0
    %2849 = vmatprep.subr.mxu0 0.0
    %2850 = vmatpush1.msra.mxu0 0.0
    %2851 = vmatprep.subr.mxu0 0.0
    %2852 = vmatpush1.msra.mxu0 0.0
    %2853 = vmatprep.subr.mxu0 0.0
    %2854 = vmatpush1.msra.mxu0 0.0
    %2855 = vmatprep.subr.mxu0 0.0
    %2856 = vmatpush1.msra.mxu0 0.0
    %2857 = vmatprep.subr.mxu0 0.0
    %2858 = vmatpush1.msra.mxu0 0.0
    %2859 = vmatprep.subr.mxu0 0.0
    %2860 = vmatpush1.msra.mxu0 0.0
    %2861 = vmatprep.subr.mxu0 0.0
    %2862 = vmatpush1.msra.mxu0 0.0
    %2863 = vmatprep.subr.mxu0 0.0
    %2864 = vmatpush1.msra.mxu0 0.0
    %2865 = vmatprep.subr.mxu0 0.0
    %2866 = vmatpush1.msra.mxu0 0.0
    %2867 = vmatprep.subr.mxu0 0.0
    %2868 = vmatpush1.msra.mxu0 0.0
    %2869 = vmatprep.subr.mxu0 0.0
    %2870 = vmatpush1.msra.mxu0 0.0
    %2871 = vmatprep.subr.mxu0 0.0
    %2872 = vmatpush1.msra.mxu0 0.0
    %2873 = vmatprep.subr.mxu0 0.0
    %2874 = vmatpush1.msra.mxu0 0.0
    %2875 = vmatprep.subr.mxu0 0.0
    %2876 = vmatpush1.msra.mxu0 0.0
    %2877 = vmatprep.subr.mxu0 0.0
    %2878 = vmatpush1.msra.mxu0 0.0
    %2879 = vmatprep.mubr.f32.mxu0 0.0
    %2880 = vmatmul.mubr.f32.gmra.mrb[0].mxu0 %v2810
    %v2881 = vpop.f32.mrb[0].mxu0
    %v2882 = vadd.f32 %v2792, %v2881
    %v2883 = vpop.f32.mrb[0].mxu0
    %2884 = vmatprep.mubr.f32.mxu0 0.0
    %2885 = vmatmul.mubr.f32.gmra.mrb[0].mxu0 %v2813
    %v2886 = vpop.f32.mrb[0].mxu0
    %v2887 = vadd.f32 %v2792, %v2886
    %v2888 = vpop.f32.mrb[0].mxu0
    %2889 = vdwg.mxu0
    %s2891 = vtos %v2701
    %v2892 = vstv %s2891
    %v2894 = vmul.f32 %v2882, %v2892
    %v2895 = vmul.f32 %v2887, %v2892
    %vm2896 = vcmask 57344
    %2897 = vst.msk [vmem:[#allocation9] sm:$0x1] %vm2896, %v2894
    %2898 = vst.msk [vmem:[#allocation9 + $0x1] sm:$0x1] %vm2896, %v2895
    // Predicated region
    $region26: #{classification_head_forward.1} parent=1 // pred_check
      _
    $region27: #{classification_head_forward.1} parent=1 // pred_check_branch
      %2900 = sbr.rel (0) target = $region29
    $region28: #{classification_head_forward.1} parent=1 // pred_region
      %s2902 = ssub.s32 32, 32
      %2903 = vsyncadd [#allocation6], %s2902
      %s2905 = sshll.u32 [#allocation9], 4
      %s2906 = int_to_ptr.vmem [resolvable:$true] %s2905
      %2908 = dma.vmem_to_hbm [thread:$0]  %s2906, 32, %s4, [#allocation6]
    $region29: #{classification_head_forward.1} parent=1 // pred_fallthru
      _
    // Predicated region
    $region30: #{classification_head_forward.1} parent=1 // pred_check
      _
    $region31: #{classification_head_forward.1} parent=1 // pred_check_branch
      %2910 = sbr.rel (0) target = $region33
    $region32: #{classification_head_forward.1} parent=1 // pred_region
      %2911 = dma.done [#allocation6], 32
    $region33: #{classification_head_forward.1} parent=1 // pred_fallthru
      _
    %2912 = vsyncpa [#allocation5], 1
    %2913 = vsyncpa [#allocation8], 1
    %2914 = vsyncpa [#allocation6], 1

</llo_original>
